<compile_context>
chip_gen: v6e
topology: v6e:2x2x1
jax: 0.10.0
libtpu: 0.0.40
codegen_flags: <defaults>
</compile_context>

<pallas_src>
import functools
import math

import jax
import jax.numpy as jnp
from jax.experimental import pallas as pl
from jax.experimental.pallas import tpu as pltpu


# ----------------------------- in-kernel helpers -----------------------------
def _layernorm(x, gamma, beta, eps=1e-12):
    mu = jnp.mean(x, axis=-1, keepdims=True)
    var = jnp.mean((x - mu) ** 2, axis=-1, keepdims=True)
    return (x - mu) * jax.lax.rsqrt(var + eps) * gamma + beta


def _gelu(x):
    # tanh-approximate GELU ("gelu_new"); f32 math, tanh goes to the EUP.
    return 0.5 * x * (1.0 + jnp.tanh(0.7978845608028654 * (x + 0.044715 * x * x * x)))


# --------------------------- encoder-stack kernel -----------------------------
def encoder_stack_kernel(x_ref, maskb_ref,
                         wqkv_ref, bqkv_ref, wo_ref, bo_ref,
                         g1_ref, b1_ref, wff1_ref, bff1_ref,
                         wff2_ref, bff2_ref, g2_ref, b2_ref,
                         wc_ref, bc_ref,
                         o_ref, act_ref,
                         *, num_heads, num_layers):
    """Grid = (batch_tile, layer). Activations live in act_ref (VMEM scratch)."""
    l = pl.program_id(1)

    # Load the embedding-layer activations into the resident scratch once per
    # batch tile; subsequent layers read/write the scratch only.
    @pl.when(l == 0)
    def _():
        act_ref[...] = x_ref[...]

    x_bf = act_ref[...]                              # (Bt, S, H) bf16
    Bt, S, H = x_bf.shape
    hd = H // num_heads
    scale = 1.0 / math.sqrt(hd)

    x2 = x_bf.reshape(Bt * S, H)                     # (Bt*S, H) bf16 MXU operand
    x2_f32 = x2.astype(jnp.float32)                  # residual path in f32
    mask = maskb_ref[...]                            # (Bt, 1, S) additive bias

    # --- fused full-width QKV projection (single bf16 MXU matmul) ------------
    qkv = jnp.dot(x2, wqkv_ref[0], preferred_element_type=jnp.float32) + bqkv_ref[0]
    q_all = (qkv[:, :H] * scale).astype(jnp.bfloat16).reshape(Bt, S, H)  # pre-scaled
    k_all = qkv[:, H:2 * H].astype(jnp.bfloat16).reshape(Bt, S, H)
    v_all = qkv[:, 2 * H:].astype(jnp.bfloat16).reshape(Bt, S, H)

    def attention(q_heads):
        # q_heads: (Bt, M, H) bf16 (already scaled). Returns (Bt*M, H) f32 ctx.
        M = q_heads.shape[1]
        ctx_parts = []
        for h in range(num_heads):                   # per-head only for SxS step
            sl = slice(h * hd, (h + 1) * hd)
            s = jnp.einsum("bqd,bkd->bqk", q_heads[:, :, sl], k_all[:, :, sl],
                           preferred_element_type=jnp.float32)
            s = s + mask                             # (Bt,1,S) broadcasts over q rows
            s = s - jnp.max(s, axis=-1, keepdims=True)
            p = jnp.exp(s)
            p = p * pl.reciprocal(jnp.sum(p, axis=-1, keepdims=True), approx=True)
            ctx_parts.append(
                jnp.einsum("bqk,bkd->bqd", p.astype(jnp.bfloat16), v_all[:, :, sl],
                           preferred_element_type=jnp.float32))
        ctx = jnp.concatenate(ctx_parts, axis=-1)    # head-concatenated (Bt, M, H)
        return ctx.reshape(Bt * M, H)

    def post_attention(res_f32, ctx_f32):
        # Single full-width output projection on the head-concatenated context.
        attn_out = (jnp.dot(ctx_f32.astype(jnp.bfloat16), wo_ref[0],
                            preferred_element_type=jnp.float32) + bo_ref[0])
        h1 = _layernorm(res_f32 + attn_out, g1_ref[0], b1_ref[0])
        ff = (jnp.dot(h1.astype(jnp.bfloat16), wff1_ref[0],
                      preferred_element_type=jnp.float32) + bff1_ref[0])
        ff = _gelu(ff)
        ff = (jnp.dot(ff.astype(jnp.bfloat16), wff2_ref[0],
                      preferred_element_type=jnp.float32) + bff2_ref[0])
        return _layernorm(h1 + ff, g2_ref[0], b2_ref[0])

    # --- non-final layers: full-sequence path, write scratch ------------------
    @pl.when(l < num_layers - 1)
    def _():
        ctx = attention(q_all)                       # (Bt*S, H)
        h2 = post_attention(x2_f32, ctx)             # (Bt*S, H) f32
        act_ref[...] = h2.reshape(Bt, S, H).astype(act_ref.dtype)

    # --- final layer: CLS-only output proj / FFN / classifier -----------------
    @pl.when(l == num_layers - 1)
    def _():
        q_cls = q_all[:, 0:1, :]                     # only the [CLS] queries
        ctx = attention(q_cls)                       # (Bt, H)
        res_cls = x_bf[:, 0:1, :].reshape(Bt, H).astype(jnp.float32)
        h2 = post_attention(res_cls, ctx)            # (Bt, H)
        logits = jnp.dot(h2, wc_ref[...], preferred_element_type=jnp.float32) + bc_ref[...]
        o_ref[...] = logits.reshape(Bt, 1, -1).astype(o_ref.dtype)


# ------------------------------ wrapper ---------------------------------------
def _vmem_limit_bytes():
    # Generation-dependent budget: ~54 MiB on v7x (64 MiB physical), 100 MiB on
    # v5e/v6e (128 MiB physical). Guarded: fall back to a safe 54 MiB.
    cap = 64 * 1024 * 1024
    try:
        info = pltpu.get_tpu_info()
        cap = int(getattr(info, "vmem_capacity_bytes", cap))
    except Exception:
        pass
    return int(min(100 * 1024 * 1024, cap * 0.85))


def _pick_bt(B, S):
    # Largest divisor of B with Bt*S <= 512 rows per grid step (fills MXU M dim
    # on v6e/v7x while keeping the activation scratch small).
    bt = 1
    for c in range(1, B + 1):
        if B % c == 0 and c * S <= 512:
            bt = c
    return bt


def encoder_stack(x, mask_bias, params, *, num_heads):
    """Runs all encoder layers + fused classifier in one pallas_call."""
    B, S, H = x.shape
    assert H % num_heads == 0
    Lnum = params["wqkv"].shape[0]
    I = params["wff1"].shape[-1]
    Lp = params["cls_w_pad"].shape[-1]
    Bt = _pick_bt(B, S)

    def aspec(shape):                                  # per-batch-tile blocks
        return pl.BlockSpec((Bt,) + shape, lambda b, l: (b, 0, 0))

    def lspec(shape):                                  # per-layer weight blocks
        return pl.BlockSpec((1,) + shape, lambda b, l: (l, 0, 0))

    def gspec(shape):                                  # grid-invariant blocks
        nd = len(shape)
        return pl.BlockSpec(shape, lambda b, l: (0,) * nd)

    # TODO(synk): for long sequences, tile S with a flash-style online softmax;
    # whole-sequence blocks are used here since S*H activations are tiny.
    in_specs = [
        aspec((S, H)),                                 # activations (read at l==0)
        aspec((1, S)),                                 # additive attention bias
        lspec((H, 3 * H)), lspec((1, 3 * H)),          # fused Wqkv, bqkv
        lspec((H, H)), lspec((1, H)),                  # Wo, bo
        lspec((1, H)), lspec((1, H)),                  # LN1 gamma/beta
        lspec((H, I)), lspec((1, I)),                  # FF1
        lspec((I, H)), lspec((1, H)),                  # FF2
        lspec((1, H)), lspec((1, H)),                  # LN2 gamma/beta
        gspec((H, Lp)), gspec((1, Lp)),                # classifier (lane-padded)
    ]
    args = [x, mask_bias,
            params["wqkv"], params["bqkv"], params["wo"], params["bo"],
            params["ln1_g"], params["ln1_b"], params["wff1"], params["bff1"],
            params["wff2"], params["bff2"], params["ln2_g"], params["ln2_b"],
            params["cls_w_pad"], params["cls_b_pad"]]

    weight_bytes = sum(int(a.size) * a.dtype.itemsize for a in args[2:])
    per_layer_flops = 2 * S * (4 * H * H + 2 * H * I) + 4 * S * S * H
    flops = B * (Lnum * per_layer_flops + 2 * H * Lp)
    transcendentals = B * Lnum * (S * I + num_heads * S * S)
    bytes_accessed = ((B // Bt) * weight_bytes
                      + x.size * x.dtype.itemsize
                      + mask_bias.size * 4 + B * Lp * 4)

    kernel = functools.partial(encoder_stack_kernel,
                               num_heads=num_heads, num_layers=Lnum)

    # TODO(synk): for B==1 on v7x (2 TCs) add a second parallel axis (e.g. split
    # FFN columns) so the second TensorCore is not idle.
    return pl.pallas_call(
        kernel,
        out_shape=jax.ShapeDtypeStruct((B, 1, Lp), jnp.float32),
        grid_spec=pltpu.PrefetchScalarGridSpec(
            num_scalar_prefetch=0,
            grid=(B // Bt, Lnum),
            in_specs=in_specs,
            out_specs=pl.BlockSpec((Bt, 1, Lp), lambda b, l: (b, 0, 0)),
            scratch_shapes=[pltpu.VMEM((Bt, S, H), jnp.bfloat16)]),
        cost_estimate=pl.CostEstimate(flops=int(flops),
                                      transcendentals=int(transcendentals),
                                      bytes_accessed=int(bytes_accessed)),
        compiler_params=pltpu.CompilerParams(
            dimension_semantics=("parallel", "arbitrary"),
            vmem_limit_bytes=_vmem_limit_bytes()),
    )(*args)


# ------------------------------- full forward ---------------------------------
def generic_classifier_forward(params, input_ids, attention_mask, token_type_ids,
                               *, num_heads):
    B, S = input_ids.shape
    assert S <= params["pos_emb"].shape[0], "sequence longer than max positions"
    # TODO(synk): embedding-table gather + embedding LayerNorm stay in plain JAX
    # (data-dependent gather glue, not the hot path).
    emb = (jnp.take(params["word_emb"], input_ids, axis=0)
           + params["pos_emb"][:S][None, :, :]
           + jnp.take(params["type_emb"], token_type_ids, axis=0))
    emb = _layernorm(emb, params["emb_ln_g"], params["emb_ln_b"])

    # Additive attention bias: (B, 1, S); 0 where attended, -1e9 where masked.
    mask_bias = ((1.0 - attention_mask.astype(jnp.float32)) * -1e9)[:, None, :]

    x = emb.astype(jnp.bfloat16)                       # bf16 MXU operand
    logits_pad = encoder_stack(x, mask_bias, params, num_heads=num_heads)
    L = params["cls_w"].shape[1]
    return logits_pad[:, 0, :L]                        # [CLS] is row 0 (BERT-style)


# ------------------------------- pure-JAX reference ----------------------------
def _reference_forward(params, input_ids, attention_mask, token_type_ids, *, num_heads):
    f32 = lambda a: a.astype(jnp.float32)
    B, S = input_ids.shape
    emb = (jnp.take(params["word_emb"], input_ids, axis=0)
           + params["pos_emb"][:S][None, :, :]
           + jnp.take(params["type_emb"], token_type_ids, axis=0))
    x = _layernorm(emb, params["emb_ln_g"], params["emb_ln_b"])
    mask_bias = ((1.0 - attention_mask.astype(jnp.float32)) * -1e9)[:, None, None, :]
    H = x.shape[-1]
    hd = H // num_heads
    for l in range(params["wqkv"].shape[0]):
        qkv = x @ f32(params["wqkv"][l]) + params["bqkv"][l]
        q, k, v = qkv[..., :H], qkv[..., H:2 * H], qkv[..., 2 * H:]
        def split(t):
            return t.reshape(B, S, num_heads, hd).transpose(0, 2, 1, 3)
        qh, kh, vh = split(q), split(k), split(v)
        s = jnp.einsum("bhqd,bhkd->bhqk", qh, kh) / math.sqrt(hd) + mask_bias
        a = jax.nn.softmax(s, axis=-1)
        ctx = jnp.einsum("bhqk,bhkd->bhqd", a, vh).transpose(0, 2, 1, 3).reshape(B, S, H)
        attn_out = ctx @ f32(params["wo"][l]) + params["bo"][l]
        h1 = _layernorm(x + attn_out, params["ln1_g"][l], params["ln1_b"][l])
        ff = (_gelu(h1 @ f32(params["wff1"][l]) + params["bff1"][l])
              @ f32(params["wff2"][l]) + params["bff2"][l])
        x = _layernorm(h1 + ff, params["ln2_g"][l], params["ln2_b"][l])
    return x[:, 0, :] @ params["cls_w"] + params["cls_b"]


# ------------------------------- parameter init --------------------------------
def init_params(key, *, vocab, hidden, intermediate, num_layers, num_labels,
                max_pos=64, num_types=2):
    H, I, L = hidden, intermediate, num_layers
    ks = iter(jax.random.split(key, 32))

    def n(shape, dtype=jnp.float32, scale=0.02):
        return (jax.random.normal(next(ks), shape, jnp.float32) * scale).astype(dtype)

    bf = jnp.bfloat16
    Lp = ((num_labels + 127) // 128) * 128
    cls_w = n((H, num_labels))
    cls_b = n((1, num_labels))
    params = {
        "word_emb": n((vocab, H)),
        "pos_emb": n((max_pos, H)),
        "type_emb": n((num_types, H)),
        "emb_ln_g": 1.0 + n((1, H)),
        "emb_ln_b": n((1, H)),
        # Classifier kept f32; lane-padded ONCE here (not per forward).
        "cls_w": cls_w, "cls_b": cls_b,
        "cls_w_pad": jnp.pad(cls_w, ((0, 0), (0, Lp - num_labels))),
        "cls_b_pad": jnp.pad(cls_b, ((0, 0), (0, Lp - num_labels))),
        # Per-layer weights stacked with a leading layer axis; QKV fused into
        # one (H, 3H) matrix so the kernel streams them layer-by-layer.
        "wqkv": n((L, H, 3 * H), bf),
        "bqkv": n((L, 1, 3 * H)),
        "wo": n((L, H, H), bf),
        "bo": n((L, 1, H)),
        "ln1_g": 1.0 + n((L, 1, H)),
        "ln1_b": n((L, 1, H)),
        "wff1": n((L, H, I), bf),
        "bff1": n((L, 1, I)),
        "wff2": n((L, I, H), bf),
        "bff2": n((L, 1, H)),
        "ln2_g": 1.0 + n((L, 1, H)),
        "ln2_b": n((L, 1, H)),
    }
    return params


# ------------------------------------ main --------------------------------------
if __name__ == "__main__":
    B, S, H, NH, I, NLAYERS = 2, 8, 32, 2, 64, 2
    VOCAB = 100
    LABELS = ["pizza", "pasta", "salad"]   # len(labels) == 3

    key = jax.random.PRNGKey(0)
    pkey, ikey = jax.random.split(key)
    params = init_params(pkey, vocab=VOCAB, hidden=H, intermediate=I,
                         num_layers=NLAYERS, num_labels=len(LABELS))

    input_ids = jax.random.randint(ikey, (B, S), 0, VOCAB, dtype=jnp.int32)
    attention_mask = jnp.array([[1, 1, 1, 1, 1, 1, 0, 0],
                                [1, 1, 1, 1, 1, 1, 1, 1]], dtype=jnp.int32)
    token_type_ids = jnp.zeros((B, S), dtype=jnp.int32)

    pred = generic_classifier_forward(params, input_ids, attention_mask,
                                      token_type_ids, num_heads=NH)
    pred = jax.block_until_ready(pred)

    ref = _reference_forward(params, input_ids, attention_mask,
                             token_type_ids, num_heads=NH)
    assert pred.shape == (B, len(LABELS))
    assert jnp.allclose(pred.astype(jnp.float32), ref, atol=1e-2, rtol=5e-2), (pred, ref)

    print("KERNEL_OK")
</pallas_src>

<mosaic_0001>
module attributes {stable_mosaic.version = 11 : i64} {
  func.func @encoder_stack_kernel(%arg0: i32, %arg1: i32, %arg2: memref<2x8x32xbf16, #tpu.memory_space<vmem>>, %arg3: memref<2x1x8xf32, #tpu.memory_space<vmem>>, %arg4: memref<1x32x96xbf16, #tpu.memory_space<vmem>>, %arg5: memref<1x1x96xf32, #tpu.memory_space<vmem>>, %arg6: memref<1x32x32xbf16, #tpu.memory_space<vmem>>, %arg7: memref<1x1x32xf32, #tpu.memory_space<vmem>>, %arg8: memref<1x1x32xf32, #tpu.memory_space<vmem>>, %arg9: memref<1x1x32xf32, #tpu.memory_space<vmem>>, %arg10: memref<1x32x64xbf16, #tpu.memory_space<vmem>>, %arg11: memref<1x1x64xf32, #tpu.memory_space<vmem>>, %arg12: memref<1x64x32xbf16, #tpu.memory_space<vmem>>, %arg13: memref<1x1x32xf32, #tpu.memory_space<vmem>>, %arg14: memref<1x1x32xf32, #tpu.memory_space<vmem>>, %arg15: memref<1x1x32xf32, #tpu.memory_space<vmem>>, %arg16: memref<32x128xf32, #tpu.memory_space<vmem>>, %arg17: memref<1x128xf32, #tpu.memory_space<vmem>>, %arg18: memref<2x1x128xf32, #tpu.memory_space<vmem>>, %arg19: memref<2x8x32xbf16, #tpu.memory_space<vmem>>) attributes {dimension_semantics = [#tpu.dimension_semantics<parallel>, #tpu.dimension_semantics<arbitrary>], iteration_bounds = array<i64: 1, 2>, scalar_prefetch = 0 : i64, scratch_operands = 1 : i64, tpu.core_type = #tpu.core_type<tc>, window_params = [{transform_indices = @transform_0, window_bounds = array<i64: 2, 8, 32>}, {transform_indices = @transform_1, window_bounds = array<i64: 2, 1, 8>}, {transform_indices = @transform_2, window_bounds = array<i64: 1, 32, 96>}, {transform_indices = @transform_3, window_bounds = array<i64: 1, 1, 96>}, {transform_indices = @transform_4, window_bounds = array<i64: 1, 32, 32>}, {transform_indices = @transform_5, window_bounds = array<i64: 1, 1, 32>}, {transform_indices = @transform_6, window_bounds = array<i64: 1, 1, 32>}, {transform_indices = @transform_7, window_bounds = array<i64: 1, 1, 32>}, {transform_indices = @transform_8, window_bounds = array<i64: 1, 32, 64>}, {transform_indices = @transform_9, window_bounds = array<i64: 1, 1, 64>}, {transform_indices = @transform_10, window_bounds = array<i64: 1, 64, 32>}, {transform_indices = @transform_11, window_bounds = array<i64: 1, 1, 32>}, {transform_indices = @transform_12, window_bounds = array<i64: 1, 1, 32>}, {transform_indices = @transform_13, window_bounds = array<i64: 1, 1, 32>}, {pipeline_mode = #tpu.pipeline_mode<synchronous>, transform_indices = @transform_14, window_bounds = array<i64: 32, 128>}, {pipeline_mode = #tpu.pipeline_mode<synchronous>, transform_indices = @transform_15, window_bounds = array<i64: 1, 128>}, {transform_indices = @transform_16, window_bounds = array<i64: 2, 1, 128>}]} {
    %c0_i32 = arith.constant 0 : i32
    %0 = arith.cmpi eq, %arg1, %c0_i32 : i32
    %1 = arith.extui %0 : i1 to i32
    %c0_i32_0 = arith.constant 0 : i32
    %2 = arith.cmpi ne, %1, %c0_i32_0 : i32
    scf.if %2 {
      %c0_16 = arith.constant 0 : index
      %c0_17 = arith.constant 0 : index
      %c0_18 = arith.constant 0 : index
      %31 = vector.load %arg2[%c0_16, %c0_17, %c0_18] : memref<2x8x32xbf16, #tpu.memory_space<vmem>>, vector<2x8x32xbf16>
      %c0_19 = arith.constant 0 : index
      %c0_20 = arith.constant 0 : index
      %c0_21 = arith.constant 0 : index
      %32 = vector.load %arg19[%c0_19, %c0_20, %c0_21] : memref<2x8x32xbf16, #tpu.memory_space<vmem>>, vector<2x8x32xbf16>
      tpu.vector_store %arg19[%c0_19, %c0_20, %c0_21], %31 {strides = array<i32>} : memref<2x8x32xbf16, #tpu.memory_space<vmem>>, vector<2x8x32xbf16>,
    } else {
    }
    %c0 = arith.constant 0 : index
    %c0_1 = arith.constant 0 : index
    %c0_2 = arith.constant 0 : index
    %3 = vector.load %arg19[%c0, %c0_1, %c0_2] : memref<2x8x32xbf16, #tpu.memory_space<vmem>>, vector<2x8x32xbf16>
    %4 = vector.shape_cast %3 : vector<2x8x32xbf16> to vector<16x32xbf16>
    %5 = arith.extf %4 : vector<16x32xbf16> to vector<16x32xf32>
    %c0_3 = arith.constant 0 : index
    %c0_4 = arith.constant 0 : index
    %c0_5 = arith.constant 0 : index
    %6 = vector.load %arg3[%c0_3, %c0_4, %c0_5] : memref<2x1x8xf32, #tpu.memory_space<vmem>>, vector<2x1x8xf32>
    %c0_6 = arith.constant 0 : index
    %c0_7 = arith.constant 0 : index
    %c0_8 = arith.constant 0 : index
    %7 = vector.load %arg4[%c0_6, %c0_7, %c0_8] : memref<1x32x96xbf16, #tpu.memory_space<vmem>>, vector<1x32x96xbf16>
    %8 = vector.shape_cast %7 : vector<1x32x96xbf16> to vector<32x96xbf16>
    %cst = arith.constant dense<0.000000e+00> : vector<16x96xf32>
    %9 = tpu.matmul %4, %8, %cst {dimension_numbers = #tpu.dot_dimension_numbers<[1], [0], [0], [1], [0, 0, 1, 1], [], []>} : vector<16x32xbf16>, vector<32x96xbf16>, vector<16x96xf32> -> vector<16x96xf32>
    %c0_9 = arith.constant 0 : index
    %c0_10 = arith.constant 0 : index
    %c0_11 = arith.constant 0 : index
    %10 = vector.load %arg5[%c0_9, %c0_10, %c0_11] : memref<1x1x96xf32, #tpu.memory_space<vmem>>, vector<1x1x96xf32>
    %11 = vector.shape_cast %10 : vector<1x1x96xf32> to vector<1x96xf32>
    %12 = vector.broadcast %11 : vector<1x96xf32> to vector<16x96xf32>
    %13 = arith.addf %9, %12 : vector<16x96xf32>
    %14 = vector.extract_strided_slice %13 {offsets = [0, 0], sizes = [16, 32], strides = [1, 1]} : vector<16x96xf32> to vector<16x32xf32>
    %cst_12 = arith.constant 2.500000e-01 : f32
    %15 = vector.broadcast %cst_12 : f32 to vector<16x32xf32>
    %16 = arith.mulf %14, %15 : vector<16x32xf32>
    %17 = arith.truncf %16 : vector<16x32xf32> to vector<16x32xbf16>
    %18 = vector.shape_cast %17 : vector<16x32xbf16> to vector<2x8x32xbf16>
    %19 = vector.extract_strided_slice %13 {offsets = [0, 32], sizes = [16, 32], strides = [1, 1]} : vector<16x96xf32> to vector<16x32xf32>
    %20 = arith.truncf %19 : vector<16x32xf32> to vector<16x32xbf16>
    %21 = vector.shape_cast %20 : vector<16x32xbf16> to vector<2x8x32xbf16>
    %22 = vector.extract_strided_slice %13 {offsets = [0, 64], sizes = [16, 32], strides = [1, 1]} : vector<16x96xf32> to vector<16x32xf32>
    %23 = arith.truncf %22 : vector<16x32xf32> to vector<16x32xbf16>
    %24 = vector.shape_cast %23 : vector<16x32xbf16> to vector<2x8x32xbf16>
    %c1_i32 = arith.constant 1 : i32
    %25 = arith.cmpi slt, %arg1, %c1_i32 : i32
    %26 = arith.extui %25 : i1 to i32
    %c0_i32_13 = arith.constant 0 : i32
    %27 = arith.cmpi ne, %26, %c0_i32_13 : i32
    scf.if %27 {
      %31 = vector.extract_strided_slice %18 {offsets = [0, 0, 0], sizes = [2, 8, 16], strides = [1, 1, 1]} : vector<2x8x32xbf16> to vector<2x8x16xbf16>
      %32 = vector.extract_strided_slice %21 {offsets = [0, 0, 0], sizes = [2, 8, 16], strides = [1, 1, 1]} : vector<2x8x32xbf16> to vector<2x8x16xbf16>
      "tpu.trace_start"() <{level = 10 : i32, message = "bqd,bkd->bqk"}> : () -> ()
      %cst_16 = arith.constant dense<0.000000e+00> : vector<2x8x8xf32>
      %33 = tpu.matmul %31, %32, %cst_16 {dimension_numbers = #tpu.dot_dimension_numbers<[2], [2], [1], [1], [0, 0, 0, 1, 1, 1], [0], [0]>} : vector<2x8x16xbf16>, vector<2x8x16xbf16>, vector<2x8x8xf32> -> vector<2x8x8xf32>
      "tpu.trace_stop"() : () -> ()
      %34 = vector.broadcast %6 : vector<2x1x8xf32> to vector<2x8x8xf32>
      %35 = arith.addf %33, %34 : vector<2x8x8xf32>
      %cst_17 = arith.constant dense<0xFF800000> : vector<2x8xf32>
      %36 = vector.multi_reduction <maximumf>, %35, %cst_17 [2] : vector<2x8x8xf32> to vector<2x8xf32>
      %37 = vector.shape_cast %36 : vector<2x8xf32> to vector<2x8x1xf32>
      %38 = vector.broadcast %37 : vector<2x8x1xf32> to vector<2x8x8xf32>
      %39 = arith.subf %35, %38 : vector<2x8x8xf32>
      %40 = math.exp %39 : vector<2x8x8xf32>
      %cst_18 = arith.constant dense<0.000000e+00> : vector<2x8xf32>
      %41 = vector.multi_reduction <add>, %40, %cst_18 [2] : vector<2x8x8xf32> to vector<2x8xf32>
      %42 = vector.shape_cast %41 : vector<2x8xf32> to vector<2x8x1xf32>
      %43 = tpu.reciprocal %42 {approx = true} : vector<2x8x1xf32> -> vector<2x8x1xf32>
      %44 = vector.broadcast %43 : vector<2x8x1xf32> to vector<2x8x8xf32>
      %45 = arith.mulf %40, %44 : vector<2x8x8xf32>
      %46 = arith.truncf %45 : vector<2x8x8xf32> to vector<2x8x8xbf16>
      %47 = vector.extract_strided_slice %24 {offsets = [0, 0, 0], sizes = [2, 8, 16], strides = [1, 1, 1]} : vector<2x8x32xbf16> to vector<2x8x16xbf16>
      "tpu.trace_start"() <{level = 10 : i32, message = "bqk,bkd->bqd"}> : () -> ()
      %cst_19 = arith.constant dense<0.000000e+00> : vector<2x8x16xf32>
      %48 = tpu.matmul %46, %47, %cst_19 {dimension_numbers = #tpu.dot_dimension_numbers<[2], [1], [1], [2], [0, 0, 0, 1, 1, 2], [0], [0]>} : vector<2x8x8xbf16>, vector<2x8x16xbf16>, vector<2x8x16xf32> -> vector<2x8x16xf32>
      "tpu.trace_stop"() : () -> ()
      %49 = vector.extract_strided_slice %18 {offsets = [0, 0, 16], sizes = [2, 8, 16], strides = [1, 1, 1]} : vector<2x8x32xbf16> to vector<2x8x16xbf16>
      %50 = vector.extract_strided_slice %21 {offsets = [0, 0, 16], sizes = [2, 8, 16], strides = [1, 1, 1]} : vector<2x8x32xbf16> to vector<2x8x16xbf16>
      "tpu.trace_start"() <{level = 10 : i32, message = "bqd,bkd->bqk"}> : () -> ()
      %cst_20 = arith.constant dense<0.000000e+00> : vector<2x8x8xf32>
      %51 = tpu.matmul %49, %50, %cst_20 {dimension_numbers = #tpu.dot_dimension_numbers<[2], [2], [1], [1], [0, 0, 0, 1, 1, 1], [0], [0]>} : vector<2x8x16xbf16>, vector<2x8x16xbf16>, vector<2x8x8xf32> -> vector<2x8x8xf32>
      "tpu.trace_stop"() : () -> ()
      %52 = vector.broadcast %6 : vector<2x1x8xf32> to vector<2x8x8xf32>
      %53 = arith.addf %51, %52 : vector<2x8x8xf32>
      %cst_21 = arith.constant dense<0xFF800000> : vector<2x8xf32>
      %54 = vector.multi_reduction <maximumf>, %53, %cst_21 [2] : vector<2x8x8xf32> to vector<2x8xf32>
      %55 = vector.shape_cast %54 : vector<2x8xf32> to vector<2x8x1xf32>
      %56 = vector.broadcast %55 : vector<2x8x1xf32> to vector<2x8x8xf32>
      %57 = arith.subf %53, %56 : vector<2x8x8xf32>
      %58 = math.exp %57 : vector<2x8x8xf32>
      %cst_22 = arith.constant dense<0.000000e+00> : vector<2x8xf32>
      %59 = vector.multi_reduction <add>, %58, %cst_22 [2] : vector<2x8x8xf32> to vector<2x8xf32>
      %60 = vector.shape_cast %59 : vector<2x8xf32> to vector<2x8x1xf32>
      %61 = tpu.reciprocal %60 {approx = true} : vector<2x8x1xf32> -> vector<2x8x1xf32>
      %62 = vector.broadcast %61 : vector<2x8x1xf32> to vector<2x8x8xf32>
      %63 = arith.mulf %58, %62 : vector<2x8x8xf32>
      %64 = arith.truncf %63 : vector<2x8x8xf32> to vector<2x8x8xbf16>
      %65 = vector.extract_strided_slice %24 {offsets = [0, 0, 16], sizes = [2, 8, 16], strides = [1, 1, 1]} : vector<2x8x32xbf16> to vector<2x8x16xbf16>
      "tpu.trace_start"() <{level = 10 : i32, message = "bqk,bkd->bqd"}> : () -> ()
      %cst_23 = arith.constant dense<0.000000e+00> : vector<2x8x16xf32>
      %66 = tpu.matmul %64, %65, %cst_23 {dimension_numbers = #tpu.dot_dimension_numbers<[2], [1], [1], [2], [0, 0, 0, 1, 1, 2], [0], [0]>} : vector<2x8x8xbf16>, vector<2x8x16xbf16>, vector<2x8x16xf32> -> vector<2x8x16xf32>
      "tpu.trace_stop"() : () -> ()
      %67 = tpu.concatenate %48, %66 in 2 : vector<2x8x16xf32>, vector<2x8x16xf32> -> vector<2x8x32xf32>
      %68 = vector.shape_cast %67 : vector<2x8x32xf32> to vector<16x32xf32>
      %69 = arith.truncf %68 : vector<16x32xf32> to vector<16x32xbf16>
      %c0_24 = arith.constant 0 : index
      %c0_25 = arith.constant 0 : index
      %c0_26 = arith.constant 0 : index
      %70 = vector.load %arg6[%c0_24, %c0_25, %c0_26] : memref<1x32x32xbf16, #tpu.memory_space<vmem>>, vector<1x32x32xbf16>
      %71 = vector.shape_cast %70 : vector<1x32x32xbf16> to vector<32x32xbf16>
      %cst_27 = arith.constant dense<0.000000e+00> : vector<16x32xf32>
      %72 = tpu.matmul %69, %71, %cst_27 {dimension_numbers = #tpu.dot_dimension_numbers<[1], [0], [0], [1], [0, 0, 1, 1], [], []>} : vector<16x32xbf16>, vector<32x32xbf16>, vector<16x32xf32> -> vector<16x32xf32>
      %c0_28 = arith.constant 0 : index
      %c0_29 = arith.constant 0 : index
      %c0_30 = arith.constant 0 : index
      %73 = vector.load %arg7[%c0_28, %c0_29, %c0_30] : memref<1x1x32xf32, #tpu.memory_space<vmem>>, vector<1x1x32xf32>
      %74 = vector.shape_cast %73 : vector<1x1x32xf32> to vector<1x32xf32>
      %75 = vector.broadcast %74 : vector<1x32xf32> to vector<16x32xf32>
      %76 = arith.addf %72, %75 : vector<16x32xf32>
      %77 = arith.addf %5, %76 : vector<16x32xf32>
      %c0_31 = arith.constant 0 : index
      %c0_32 = arith.constant 0 : index
      %c0_33 = arith.constant 0 : index
      %78 = vector.load %arg8[%c0_31, %c0_32, %c0_33] : memref<1x1x32xf32, #tpu.memory_space<vmem>>, vector<1x1x32xf32>
      %79 = vector.shape_cast %78 : vector<1x1x32xf32> to vector<1x32xf32>
      %c0_34 = arith.constant 0 : index
      %c0_35 = arith.constant 0 : index
      %c0_36 = arith.constant 0 : index
      %80 = vector.load %arg9[%c0_34, %c0_35, %c0_36] : memref<1x1x32xf32, #tpu.memory_space<vmem>>, vector<1x1x32xf32>
      %81 = vector.shape_cast %80 : vector<1x1x32xf32> to vector<1x32xf32>
      %cst_37 = arith.constant dense<0.000000e+00> : vector<16xf32>
      %82 = vector.multi_reduction <add>, %77, %cst_37 [1] : vector<16x32xf32> to vector<16xf32>
      %83 = vector.shape_cast %82 : vector<16xf32> to vector<16x1xf32>
      %cst_38 = arith.constant 3.200000e+01 : f32
      %84 = vector.broadcast %cst_38 : f32 to vector<16x1xf32>
      %85 = arith.divf %83, %84 : vector<16x1xf32>
      %86 = vector.broadcast %85 : vector<16x1xf32> to vector<16x32xf32>
      %87 = arith.subf %77, %86 : vector<16x32xf32>
      %88 = arith.mulf %87, %87 : vector<16x32xf32>
      %cst_39 = arith.constant dense<0.000000e+00> : vector<16xf32>
      %89 = vector.multi_reduction <add>, %88, %cst_39 [1] : vector<16x32xf32> to vector<16xf32>
      %90 = vector.shape_cast %89 : vector<16xf32> to vector<16x1xf32>
      %cst_40 = arith.constant 3.200000e+01 : f32
      %91 = vector.broadcast %cst_40 : f32 to vector<16x1xf32>
      %92 = arith.divf %90, %91 : vector<16x1xf32>
      %93 = vector.broadcast %85 : vector<16x1xf32> to vector<16x32xf32>
      %94 = arith.subf %77, %93 : vector<16x32xf32>
      %cst_41 = arith.constant 9.99999996E-13 : f32
      %95 = vector.broadcast %cst_41 : f32 to vector<16x1xf32>
      %96 = arith.addf %92, %95 : vector<16x1xf32>
      %97 = math.rsqrt %96 : vector<16x1xf32>
      %98 = vector.broadcast %97 : vector<16x1xf32> to vector<16x32xf32>
      %99 = arith.mulf %94, %98 : vector<16x32xf32>
      %100 = vector.broadcast %79 : vector<1x32xf32> to vector<16x32xf32>
      %101 = arith.mulf %99, %100 : vector<16x32xf32>
      %102 = vector.broadcast %81 : vector<1x32xf32> to vector<16x32xf32>
      %103 = arith.addf %101, %102 : vector<16x32xf32>
      %104 = arith.truncf %103 : vector<16x32xf32> to vector<16x32xbf16>
      %c0_42 = arith.constant 0 : index
      %c0_43 = arith.constant 0 : index
      %c0_44 = arith.constant 0 : index
      %105 = vector.load %arg10[%c0_42, %c0_43, %c0_44] : memref<1x32x64xbf16, #tpu.memory_space<vmem>>, vector<1x32x64xbf16>
      %106 = vector.shape_cast %105 : vector<1x32x64xbf16> to vector<32x64xbf16>
      %cst_45 = arith.constant dense<0.000000e+00> : vector<16x64xf32>
      %107 = tpu.matmul %104, %106, %cst_45 {dimension_numbers = #tpu.dot_dimension_numbers<[1], [0], [0], [1], [0, 0, 1, 1], [], []>} : vector<16x32xbf16>, vector<32x64xbf16>, vector<16x64xf32> -> vector<16x64xf32>
      %c0_46 = arith.constant 0 : index
      %c0_47 = arith.constant 0 : index
      %c0_48 = arith.constant 0 : index
      %108 = vector.load %arg11[%c0_46, %c0_47, %c0_48] : memref<1x1x64xf32, #tpu.memory_space<vmem>>, vector<1x1x64xf32>
      %109 = vector.shape_cast %108 : vector<1x1x64xf32> to vector<1x64xf32>
      %110 = vector.broadcast %109 : vector<1x64xf32> to vector<16x64xf32>
      %111 = arith.addf %107, %110 : vector<16x64xf32>
      %cst_49 = arith.constant 5.000000e-01 : f32
      %112 = vector.broadcast %cst_49 : f32 to vector<16x64xf32>
      %113 = arith.mulf %112, %111 : vector<16x64xf32>
      %cst_50 = arith.constant 4.471500e-02 : f32
      %114 = vector.broadcast %cst_50 : f32 to vector<16x64xf32>
      %115 = arith.mulf %114, %111 : vector<16x64xf32>
      %116 = arith.mulf %115, %111 : vector<16x64xf32>
      %117 = arith.mulf %116, %111 : vector<16x64xf32>
      %118 = arith.addf %111, %117 : vector<16x64xf32>
      %cst_51 = arith.constant 0.797884583 : f32
      %119 = vector.broadcast %cst_51 : f32 to vector<16x64xf32>
      %120 = arith.mulf %119, %118 : vector<16x64xf32>
      %121 = math.tanh %120 : vector<16x64xf32>
      %cst_52 = arith.constant 1.000000e+00 : f32
      %122 = vector.broadcast %cst_52 : f32 to vector<16x64xf32>
      %123 = arith.addf %122, %121 : vector<16x64xf32>
      %124 = arith.mulf %113, %123 : vector<16x64xf32>
      %125 = arith.truncf %124 : vector<16x64xf32> to vector<16x64xbf16>
      %c0_53 = arith.constant 0 : index
      %c0_54 = arith.constant 0 : index
      %c0_55 = arith.constant 0 : index
      %126 = vector.load %arg12[%c0_53, %c0_54, %c0_55] : memref<1x64x32xbf16, #tpu.memory_space<vmem>>, vector<1x64x32xbf16>
      %127 = vector.shape_cast %126 : vector<1x64x32xbf16> to vector<64x32xbf16>
      %cst_56 = arith.constant dense<0.000000e+00> : vector<16x32xf32>
      %128 = tpu.matmul %125, %127, %cst_56 {dimension_numbers = #tpu.dot_dimension_numbers<[1], [0], [0], [1], [0, 0, 1, 1], [], []>} : vector<16x64xbf16>, vector<64x32xbf16>, vector<16x32xf32> -> vector<16x32xf32>
      %c0_57 = arith.constant 0 : index
      %c0_58 = arith.constant 0 : index
      %c0_59 = arith.constant 0 : index
      %129 = vector.load %arg13[%c0_57, %c0_58, %c0_59] : memref<1x1x32xf32, #tpu.memory_space<vmem>>, vector<1x1x32xf32>
      %130 = vector.shape_cast %129 : vector<1x1x32xf32> to vector<1x32xf32>
      %131 = vector.broadcast %130 : vector<1x32xf32> to vector<16x32xf32>
      %132 = arith.addf %128, %131 : vector<16x32xf32>
      %133 = arith.addf %103, %132 : vector<16x32xf32>
      %c0_60 = arith.constant 0 : index
      %c0_61 = arith.constant 0 : index
      %c0_62 = arith.constant 0 : index
      %134 = vector.load %arg14[%c0_60, %c0_61, %c0_62] : memref<1x1x32xf32, #tpu.memory_space<vmem>>, vector<1x1x32xf32>
      %135 = vector.shape_cast %134 : vector<1x1x32xf32> to vector<1x32xf32>
      %c0_63 = arith.constant 0 : index
      %c0_64 = arith.constant 0 : index
      %c0_65 = arith.constant 0 : index
      %136 = vector.load %arg15[%c0_63, %c0_64, %c0_65] : memref<1x1x32xf32, #tpu.memory_space<vmem>>, vector<1x1x32xf32>
      %137 = vector.shape_cast %136 : vector<1x1x32xf32> to vector<1x32xf32>
      %cst_66 = arith.constant dense<0.000000e+00> : vector<16xf32>
      %138 = vector.multi_reduction <add>, %133, %cst_66 [1] : vector<16x32xf32> to vector<16xf32>
      %139 = vector.shape_cast %138 : vector<16xf32> to vector<16x1xf32>
      %cst_67 = arith.constant 3.200000e+01 : f32
      %140 = vector.broadcast %cst_67 : f32 to vector<16x1xf32>
      %141 = arith.divf %139, %140 : vector<16x1xf32>
      %142 = vector.broadcast %141 : vector<16x1xf32> to vector<16x32xf32>
      %143 = arith.subf %133, %142 : vector<16x32xf32>
      %144 = arith.mulf %143, %143 : vector<16x32xf32>
      %cst_68 = arith.constant dense<0.000000e+00> : vector<16xf32>
      %145 = vector.multi_reduction <add>, %144, %cst_68 [1] : vector<16x32xf32> to vector<16xf32>
      %146 = vector.shape_cast %145 : vector<16xf32> to vector<16x1xf32>
      %cst_69 = arith.constant 3.200000e+01 : f32
      %147 = vector.broadcast %cst_69 : f32 to vector<16x1xf32>
      %148 = arith.divf %146, %147 : vector<16x1xf32>
      %149 = vector.broadcast %141 : vector<16x1xf32> to vector<16x32xf32>
      %150 = arith.subf %133, %149 : vector<16x32xf32>
      %cst_70 = arith.constant 9.99999996E-13 : f32
      %151 = vector.broadcast %cst_70 : f32 to vector<16x1xf32>
      %152 = arith.addf %148, %151 : vector<16x1xf32>
      %153 = math.rsqrt %152 : vector<16x1xf32>
      %154 = vector.broadcast %153 : vector<16x1xf32> to vector<16x32xf32>
      %155 = arith.mulf %150, %154 : vector<16x32xf32>
      %156 = vector.broadcast %135 : vector<1x32xf32> to vector<16x32xf32>
      %157 = arith.mulf %155, %156 : vector<16x32xf32>
      %158 = vector.broadcast %137 : vector<1x32xf32> to vector<16x32xf32>
      %159 = arith.addf %157, %158 : vector<16x32xf32>
      %160 = vector.shape_cast %159 : vector<16x32xf32> to vector<2x8x32xf32>
      %161 = arith.truncf %160 : vector<2x8x32xf32> to vector<2x8x32xbf16>
      %c0_71 = arith.constant 0 : index
      %c0_72 = arith.constant 0 : index
      %c0_73 = arith.constant 0 : index
      %162 = vector.load %arg19[%c0_71, %c0_72, %c0_73] : memref<2x8x32xbf16, #tpu.memory_space<vmem>>, vector<2x8x32xbf16>
      tpu.vector_store %arg19[%c0_71, %c0_72, %c0_73], %161 {strides = array<i32>} : memref<2x8x32xbf16, #tpu.memory_space<vmem>>, vector<2x8x32xbf16>,
    } else {
    }
    %c1_i32_14 = arith.constant 1 : i32
    %28 = arith.cmpi eq, %arg1, %c1_i32_14 : i32
    %29 = arith.extui %28 : i1 to i32
    %c0_i32_15 = arith.constant 0 : i32
    %30 = arith.cmpi ne, %29, %c0_i32_15 : i32
    scf.if %30 {
      %31 = vector.extract_strided_slice %18 {offsets = [0, 0, 0], sizes = [2, 1, 32], strides = [1, 1, 1]} : vector<2x8x32xbf16> to vector<2x1x32xbf16>
      %32 = vector.extract_strided_slice %31 {offsets = [0, 0, 0], sizes = [2, 1, 16], strides = [1, 1, 1]} : vector<2x1x32xbf16> to vector<2x1x16xbf16>
      %33 = vector.extract_strided_slice %21 {offsets = [0, 0, 0], sizes = [2, 8, 16], strides = [1, 1, 1]} : vector<2x8x32xbf16> to vector<2x8x16xbf16>
      "tpu.trace_start"() <{level = 10 : i32, message = "bqd,bkd->bqk"}> : () -> ()
      %cst_16 = arith.constant dense<0.000000e+00> : vector<2x1x8xf32>
      %34 = tpu.matmul %32, %33, %cst_16 {dimension_numbers = #tpu.dot_dimension_numbers<[2], [2], [1], [1], [0, 0, 0, 1, 1, 1], [0], [0]>} : vector<2x1x16xbf16>, vector<2x8x16xbf16>, vector<2x1x8xf32> -> vector<2x1x8xf32>
      "tpu.trace_stop"() : () -> ()
      %35 = arith.addf %34, %6 : vector<2x1x8xf32>
      %cst_17 = arith.constant dense<0xFF800000> : vector<2x1xf32>
      %36 = vector.multi_reduction <maximumf>, %35, %cst_17 [2] : vector<2x1x8xf32> to vector<2x1xf32>
      %37 = vector.shape_cast %36 : vector<2x1xf32> to vector<2x1x1xf32>
      %38 = vector.broadcast %37 : vector<2x1x1xf32> to vector<2x1x8xf32>
      %39 = arith.subf %35, %38 : vector<2x1x8xf32>
      %40 = math.exp %39 : vector<2x1x8xf32>
      %cst_18 = arith.constant dense<0.000000e+00> : vector<2x1xf32>
      %41 = vector.multi_reduction <add>, %40, %cst_18 [2] : vector<2x1x8xf32> to vector<2x1xf32>
      %42 = vector.shape_cast %41 : vector<2x1xf32> to vector<2x1x1xf32>
      %43 = tpu.reciprocal %42 {approx = true} : vector<2x1x1xf32> -> vector<2x1x1xf32>
      %44 = vector.broadcast %43 : vector<2x1x1xf32> to vector<2x1x8xf32>
      %45 = arith.mulf %40, %44 : vector<2x1x8xf32>
      %46 = arith.truncf %45 : vector<2x1x8xf32> to vector<2x1x8xbf16>
      %47 = vector.extract_strided_slice %24 {offsets = [0, 0, 0], sizes = [2, 8, 16], strides = [1, 1, 1]} : vector<2x8x32xbf16> to vector<2x8x16xbf16>
      "tpu.trace_start"() <{level = 10 : i32, message = "bqk,bkd->bqd"}> : () -> ()
      %cst_19 = arith.constant dense<0.000000e+00> : vector<2x1x16xf32>
      %48 = tpu.matmul %46, %47, %cst_19 {dimension_numbers = #tpu.dot_dimension_numbers<[2], [1], [1], [2], [0, 0, 0, 1, 1, 2], [0], [0]>} : vector<2x1x8xbf16>, vector<2x8x16xbf16>, vector<2x1x16xf32> -> vector<2x1x16xf32>
      "tpu.trace_stop"() : () -> ()
      %49 = vector.extract_strided_slice %31 {offsets = [0, 0, 16], sizes = [2, 1, 16], strides = [1, 1, 1]} : vector<2x1x32xbf16> to vector<2x1x16xbf16>
      %50 = vector.extract_strided_slice %21 {offsets = [0, 0, 16], sizes = [2, 8, 16], strides = [1, 1, 1]} : vector<2x8x32xbf16> to vector<2x8x16xbf16>
      "tpu.trace_start"() <{level = 10 : i32, message = "bqd,bkd->bqk"}> : () -> ()
      %cst_20 = arith.constant dense<0.000000e+00> : vector<2x1x8xf32>
      %51 = tpu.matmul %49, %50, %cst_20 {dimension_numbers = #tpu.dot_dimension_numbers<[2], [2], [1], [1], [0, 0, 0, 1, 1, 1], [0], [0]>} : vector<2x1x16xbf16>, vector<2x8x16xbf16>, vector<2x1x8xf32> -> vector<2x1x8xf32>
      "tpu.trace_stop"() : () -> ()
      %52 = arith.addf %51, %6 : vector<2x1x8xf32>
      %cst_21 = arith.constant dense<0xFF800000> : vector<2x1xf32>
      %53 = vector.multi_reduction <maximumf>, %52, %cst_21 [2] : vector<2x1x8xf32> to vector<2x1xf32>
      %54 = vector.shape_cast %53 : vector<2x1xf32> to vector<2x1x1xf32>
      %55 = vector.broadcast %54 : vector<2x1x1xf32> to vector<2x1x8xf32>
      %56 = arith.subf %52, %55 : vector<2x1x8xf32>
      %57 = math.exp %56 : vector<2x1x8xf32>
      %cst_22 = arith.constant dense<0.000000e+00> : vector<2x1xf32>
      %58 = vector.multi_reduction <add>, %57, %cst_22 [2] : vector<2x1x8xf32> to vector<2x1xf32>
      %59 = vector.shape_cast %58 : vector<2x1xf32> to vector<2x1x1xf32>
      %60 = tpu.reciprocal %59 {approx = true} : vector<2x1x1xf32> -> vector<2x1x1xf32>
      %61 = vector.broadcast %60 : vector<2x1x1xf32> to vector<2x1x8xf32>
      %62 = arith.mulf %57, %61 : vector<2x1x8xf32>
      %63 = arith.truncf %62 : vector<2x1x8xf32> to vector<2x1x8xbf16>
      %64 = vector.extract_strided_slice %24 {offsets = [0, 0, 16], sizes = [2, 8, 16], strides = [1, 1, 1]} : vector<2x8x32xbf16> to vector<2x8x16xbf16>
      "tpu.trace_start"() <{level = 10 : i32, message = "bqk,bkd->bqd"}> : () -> ()
      %cst_23 = arith.constant dense<0.000000e+00> : vector<2x1x16xf32>
      %65 = tpu.matmul %63, %64, %cst_23 {dimension_numbers = #tpu.dot_dimension_numbers<[2], [1], [1], [2], [0, 0, 0, 1, 1, 2], [0], [0]>} : vector<2x1x8xbf16>, vector<2x8x16xbf16>, vector<2x1x16xf32> -> vector<2x1x16xf32>
      "tpu.trace_stop"() : () -> ()
      %66 = tpu.concatenate %48, %65 in 2 : vector<2x1x16xf32>, vector<2x1x16xf32> -> vector<2x1x32xf32>
      %67 = vector.shape_cast %66 : vector<2x1x32xf32> to vector<2x32xf32>
      %68 = vector.extract_strided_slice %3 {offsets = [0, 0, 0], sizes = [2, 1, 32], strides = [1, 1, 1]} : vector<2x8x32xbf16> to vector<2x1x32xbf16>
      %69 = vector.shape_cast %68 : vector<2x1x32xbf16> to vector<2x32xbf16>
      %70 = arith.extf %69 : vector<2x32xbf16> to vector<2x32xf32>
      %71 = arith.truncf %67 : vector<2x32xf32> to vector<2x32xbf16>
      %c0_24 = arith.constant 0 : index
      %c0_25 = arith.constant 0 : index
      %c0_26 = arith.constant 0 : index
      %72 = vector.load %arg6[%c0_24, %c0_25, %c0_26] : memref<1x32x32xbf16, #tpu.memory_space<vmem>>, vector<1x32x32xbf16>
      %73 = vector.shape_cast %72 : vector<1x32x32xbf16> to vector<32x32xbf16>
      %cst_27 = arith.constant dense<0.000000e+00> : vector<2x32xf32>
      %74 = tpu.matmul %71, %73, %cst_27 {dimension_numbers = #tpu.dot_dimension_numbers<[1], [0], [0], [1], [0, 0, 1, 1], [], []>} : vector<2x32xbf16>, vector<32x32xbf16>, vector<2x32xf32> -> vector<2x32xf32>
      %c0_28 = arith.constant 0 : index
      %c0_29 = arith.constant 0 : index
      %c0_30 = arith.constant 0 : index
      %75 = vector.load %arg7[%c0_28, %c0_29, %c0_30] : memref<1x1x32xf32, #tpu.memory_space<vmem>>, vector<1x1x32xf32>
      %76 = vector.shape_cast %75 : vector<1x1x32xf32> to vector<1x32xf32>
      %77 = vector.broadcast %76 : vector<1x32xf32> to vector<2x32xf32>
      %78 = arith.addf %74, %77 : vector<2x32xf32>
      %79 = arith.addf %70, %78 : vector<2x32xf32>
      %c0_31 = arith.constant 0 : index
      %c0_32 = arith.constant 0 : index
      %c0_33 = arith.constant 0 : index
      %80 = vector.load %arg8[%c0_31, %c0_32, %c0_33] : memref<1x1x32xf32, #tpu.memory_space<vmem>>, vector<1x1x32xf32>
      %81 = vector.shape_cast %80 : vector<1x1x32xf32> to vector<1x32xf32>
      %c0_34 = arith.constant 0 : index
      %c0_35 = arith.constant 0 : index
      %c0_36 = arith.constant 0 : index
      %82 = vector.load %arg9[%c0_34, %c0_35, %c0_36] : memref<1x1x32xf32, #tpu.memory_space<vmem>>, vector<1x1x32xf32>
      %83 = vector.shape_cast %82 : vector<1x1x32xf32> to vector<1x32xf32>
      %cst_37 = arith.constant dense<0.000000e+00> : vector<2xf32>
      %84 = vector.multi_reduction <add>, %79, %cst_37 [1] : vector<2x32xf32> to vector<2xf32>
      %85 = vector.shape_cast %84 : vector<2xf32> to vector<2x1xf32>
      %cst_38 = arith.constant 3.200000e+01 : f32
      %86 = vector.broadcast %cst_38 : f32 to vector<2x1xf32>
      %87 = arith.divf %85, %86 : vector<2x1xf32>
      %88 = vector.broadcast %87 : vector<2x1xf32> to vector<2x32xf32>
      %89 = arith.subf %79, %88 : vector<2x32xf32>
      %90 = arith.mulf %89, %89 : vector<2x32xf32>
      %cst_39 = arith.constant dense<0.000000e+00> : vector<2xf32>
      %91 = vector.multi_reduction <add>, %90, %cst_39 [1] : vector<2x32xf32> to vector<2xf32>
      %92 = vector.shape_cast %91 : vector<2xf32> to vector<2x1xf32>
      %cst_40 = arith.constant 3.200000e+01 : f32
      %93 = vector.broadcast %cst_40 : f32 to vector<2x1xf32>
      %94 = arith.divf %92, %93 : vector<2x1xf32>
      %95 = vector.broadcast %87 : vector<2x1xf32> to vector<2x32xf32>
      %96 = arith.subf %79, %95 : vector<2x32xf32>
      %cst_41 = arith.constant 9.99999996E-13 : f32
      %97 = vector.broadcast %cst_41 : f32 to vector<2x1xf32>
      %98 = arith.addf %94, %97 : vector<2x1xf32>
      %99 = math.rsqrt %98 : vector<2x1xf32>
      %100 = vector.broadcast %99 : vector<2x1xf32> to vector<2x32xf32>
      %101 = arith.mulf %96, %100 : vector<2x32xf32>
      %102 = vector.broadcast %81 : vector<1x32xf32> to vector<2x32xf32>
      %103 = arith.mulf %101, %102 : vector<2x32xf32>
      %104 = vector.broadcast %83 : vector<1x32xf32> to vector<2x32xf32>
      %105 = arith.addf %103, %104 : vector<2x32xf32>
      %106 = arith.truncf %105 : vector<2x32xf32> to vector<2x32xbf16>
      %c0_42 = arith.constant 0 : index
      %c0_43 = arith.constant 0 : index
      %c0_44 = arith.constant 0 : index
      %107 = vector.load %arg10[%c0_42, %c0_43, %c0_44] : memref<1x32x64xbf16, #tpu.memory_space<vmem>>, vector<1x32x64xbf16>
      %108 = vector.shape_cast %107 : vector<1x32x64xbf16> to vector<32x64xbf16>
      %cst_45 = arith.constant dense<0.000000e+00> : vector<2x64xf32>
      %109 = tpu.matmul %106, %108, %cst_45 {dimension_numbers = #tpu.dot_dimension_numbers<[1], [0], [0], [1], [0, 0, 1, 1], [], []>} : vector<2x32xbf16>, vector<32x64xbf16>, vector<2x64xf32> -> vector<2x64xf32>
      %c0_46 = arith.constant 0 : index
      %c0_47 = arith.constant 0 : index
      %c0_48 = arith.constant 0 : index
      %110 = vector.load %arg11[%c0_46, %c0_47, %c0_48] : memref<1x1x64xf32, #tpu.memory_space<vmem>>, vector<1x1x64xf32>
      %111 = vector.shape_cast %110 : vector<1x1x64xf32> to vector<1x64xf32>
      %112 = vector.broadcast %111 : vector<1x64xf32> to vector<2x64xf32>
      %113 = arith.addf %109, %112 : vector<2x64xf32>
      %cst_49 = arith.constant 5.000000e-01 : f32
      %114 = vector.broadcast %cst_49 : f32 to vector<2x64xf32>
      %115 = arith.mulf %114, %113 : vector<2x64xf32>
      %cst_50 = arith.constant 4.471500e-02 : f32
      %116 = vector.broadcast %cst_50 : f32 to vector<2x64xf32>
      %117 = arith.mulf %116, %113 : vector<2x64xf32>
      %118 = arith.mulf %117, %113 : vector<2x64xf32>
      %119 = arith.mulf %118, %113 : vector<2x64xf32>
      %120 = arith.addf %113, %119 : vector<2x64xf32>
      %cst_51 = arith.constant 0.797884583 : f32
      %121 = vector.broadcast %cst_51 : f32 to vector<2x64xf32>
      %122 = arith.mulf %121, %120 : vector<2x64xf32>
      %123 = math.tanh %122 : vector<2x64xf32>
      %cst_52 = arith.constant 1.000000e+00 : f32
      %124 = vector.broadcast %cst_52 : f32 to vector<2x64xf32>
      %125 = arith.addf %124, %123 : vector<2x64xf32>
      %126 = arith.mulf %115, %125 : vector<2x64xf32>
      %127 = arith.truncf %126 : vector<2x64xf32> to vector<2x64xbf16>
      %c0_53 = arith.constant 0 : index
      %c0_54 = arith.constant 0 : index
      %c0_55 = arith.constant 0 : index
      %128 = vector.load %arg12[%c0_53, %c0_54, %c0_55] : memref<1x64x32xbf16, #tpu.memory_space<vmem>>, vector<1x64x32xbf16>
      %129 = vector.shape_cast %128 : vector<1x64x32xbf16> to vector<64x32xbf16>
      %cst_56 = arith.constant dense<0.000000e+00> : vector<2x32xf32>
      %130 = tpu.matmul %127, %129, %cst_56 {dimension_numbers = #tpu.dot_dimension_numbers<[1], [0], [0], [1], [0, 0, 1, 1], [], []>} : vector<2x64xbf16>, vector<64x32xbf16>, vector<2x32xf32> -> vector<2x32xf32>
      %c0_57 = arith.constant 0 : index
      %c0_58 = arith.constant 0 : index
      %c0_59 = arith.constant 0 : index
      %131 = vector.load %arg13[%c0_57, %c0_58, %c0_59] : memref<1x1x32xf32, #tpu.memory_space<vmem>>, vector<1x1x32xf32>
      %132 = vector.shape_cast %131 : vector<1x1x32xf32> to vector<1x32xf32>
      %133 = vector.broadcast %132 : vector<1x32xf32> to vector<2x32xf32>
      %134 = arith.addf %130, %133 : vector<2x32xf32>
      %135 = arith.addf %105, %134 : vector<2x32xf32>
      %c0_60 = arith.constant 0 : index
      %c0_61 = arith.constant 0 : index
      %c0_62 = arith.constant 0 : index
      %136 = vector.load %arg14[%c0_60, %c0_61, %c0_62] : memref<1x1x32xf32, #tpu.memory_space<vmem>>, vector<1x1x32xf32>
      %137 = vector.shape_cast %136 : vector<1x1x32xf32> to vector<1x32xf32>
      %c0_63 = arith.constant 0 : index
      %c0_64 = arith.constant 0 : index
      %c0_65 = arith.constant 0 : index
      %138 = vector.load %arg15[%c0_63, %c0_64, %c0_65] : memref<1x1x32xf32, #tpu.memory_space<vmem>>, vector<1x1x32xf32>
      %139 = vector.shape_cast %138 : vector<1x1x32xf32> to vector<1x32xf32>
      %cst_66 = arith.constant dense<0.000000e+00> : vector<2xf32>
      %140 = vector.multi_reduction <add>, %135, %cst_66 [1] : vector<2x32xf32> to vector<2xf32>
      %141 = vector.shape_cast %140 : vector<2xf32> to vector<2x1xf32>
      %cst_67 = arith.constant 3.200000e+01 : f32
      %142 = vector.broadcast %cst_67 : f32 to vector<2x1xf32>
      %143 = arith.divf %141, %142 : vector<2x1xf32>
      %144 = vector.broadcast %143 : vector<2x1xf32> to vector<2x32xf32>
      %145 = arith.subf %135, %144 : vector<2x32xf32>
      %146 = arith.mulf %145, %145 : vector<2x32xf32>
      %cst_68 = arith.constant dense<0.000000e+00> : vector<2xf32>
      %147 = vector.multi_reduction <add>, %146, %cst_68 [1] : vector<2x32xf32> to vector<2xf32>
      %148 = vector.shape_cast %147 : vector<2xf32> to vector<2x1xf32>
      %cst_69 = arith.constant 3.200000e+01 : f32
      %149 = vector.broadcast %cst_69 : f32 to vector<2x1xf32>
      %150 = arith.divf %148, %149 : vector<2x1xf32>
      %151 = vector.broadcast %143 : vector<2x1xf32> to vector<2x32xf32>
      %152 = arith.subf %135, %151 : vector<2x32xf32>
      %cst_70 = arith.constant 9.99999996E-13 : f32
      %153 = vector.broadcast %cst_70 : f32 to vector<2x1xf32>
      %154 = arith.addf %150, %153 : vector<2x1xf32>
      %155 = math.rsqrt %154 : vector<2x1xf32>
      %156 = vector.broadcast %155 : vector<2x1xf32> to vector<2x32xf32>
      %157 = arith.mulf %152, %156 : vector<2x32xf32>
      %158 = vector.broadcast %137 : vector<1x32xf32> to vector<2x32xf32>
      %159 = arith.mulf %157, %158 : vector<2x32xf32>
      %160 = vector.broadcast %139 : vector<1x32xf32> to vector<2x32xf32>
      %161 = arith.addf %159, %160 : vector<2x32xf32>
      %c0_71 = arith.constant 0 : index
      %c0_72 = arith.constant 0 : index
      %162 = vector.load %arg16[%c0_71, %c0_72] : memref<32x128xf32, #tpu.memory_space<vmem>>, vector<32x128xf32>
      %cst_73 = arith.constant dense<0.000000e+00> : vector<2x128xf32>
      %163 = tpu.matmul %161, %162, %cst_73 {dimension_numbers = #tpu.dot_dimension_numbers<[1], [0], [0], [1], [0, 0, 1, 1], [], []>} : vector<2x32xf32>, vector<32x128xf32>, vector<2x128xf32> -> vector<2x128xf32>
      %c0_74 = arith.constant 0 : index
      %c0_75 = arith.constant 0 : index
      %164 = vector.load %arg17[%c0_74, %c0_75] : memref<1x128xf32, #tpu.memory_space<vmem>>, vector<1x128xf32>
      %165 = vector.broadcast %164 : vector<1x128xf32> to vector<2x128xf32>
      %166 = arith.addf %163, %165 : vector<2x128xf32>
      %167 = vector.shape_cast %166 : vector<2x128xf32> to vector<2x1x128xf32>
      %c0_76 = arith.constant 0 : index
      %c0_77 = arith.constant 0 : index
      %c0_78 = arith.constant 0 : index
      %168 = vector.load %arg18[%c0_76, %c0_77, %c0_78] : memref<2x1x128xf32, #tpu.memory_space<vmem>>, vector<2x1x128xf32>
      tpu.vector_store %arg18[%c0_76, %c0_77, %c0_78], %167 {strides = array<i32>} : memref<2x1x128xf32, #tpu.memory_space<vmem>>, vector<2x1x128xf32>,
    } else {
    }
    return
  }
  func.func @transform_0(%arg0: i32, %arg1: i32) -> (i32, i32, i32) {
    %c0_i32 = arith.constant 0 : i32
    %c0_i32_0 = arith.constant 0 : i32
    %c0_i32_1 = arith.constant 0 : i32
    return %arg0, %c0_i32, %c0_i32_0 : i32, i32, i32
  }
  func.func @transform_1(%arg0: i32, %arg1: i32) -> (i32, i32, i32) {
    %c0_i32 = arith.constant 0 : i32
    %c0_i32_0 = arith.constant 0 : i32
    %c0_i32_1 = arith.constant 0 : i32
    return %arg0, %c0_i32, %c0_i32_0 : i32, i32, i32
  }
  func.func @transform_2(%arg0: i32, %arg1: i32) -> (i32, i32, i32) {
    %c0_i32 = arith.constant 0 : i32
    %c0_i32_0 = arith.constant 0 : i32
    %c0_i32_1 = arith.constant 0 : i32
    return %arg1, %c0_i32, %c0_i32_0 : i32, i32, i32
  }
  func.func @transform_3(%arg0: i32, %arg1: i32) -> (i32, i32, i32) {
    %c0_i32 = arith.constant 0 : i32
    %c0_i32_0 = arith.constant 0 : i32
    %c0_i32_1 = arith.constant 0 : i32
    return %arg1, %c0_i32, %c0_i32_0 : i32, i32, i32
  }
  func.func @transform_4(%arg0: i32, %arg1: i32) -> (i32, i32, i32) {
    %c0_i32 = arith.constant 0 : i32
    %c0_i32_0 = arith.constant 0 : i32
    %c0_i32_1 = arith.constant 0 : i32
    return %arg1, %c0_i32, %c0_i32_0 : i32, i32, i32
  }
  func.func @transform_5(%arg0: i32, %arg1: i32) -> (i32, i32, i32) {
    %c0_i32 = arith.constant 0 : i32
    %c0_i32_0 = arith.constant 0 : i32
    %c0_i32_1 = arith.constant 0 : i32
    return %arg1, %c0_i32, %c0_i32_0 : i32, i32, i32
  }
  func.func @transform_6(%arg0: i32, %arg1: i32) -> (i32, i32, i32) {
    %c0_i32 = arith.constant 0 : i32
    %c0_i32_0 = arith.constant 0 : i32
    %c0_i32_1 = arith.constant 0 : i32
    return %arg1, %c0_i32, %c0_i32_0 : i32, i32, i32
  }
  func.func @transform_7(%arg0: i32, %arg1: i32) -> (i32, i32, i32) {
    %c0_i32 = arith.constant 0 : i32
    %c0_i32_0 = arith.constant 0 : i32
    %c0_i32_1 = arith.constant 0 : i32
    return %arg1, %c0_i32, %c0_i32_0 : i32, i32, i32
  }
  func.func @transform_8(%arg0: i32, %arg1: i32) -> (i32, i32, i32) {
    %c0_i32 = arith.constant 0 : i32
    %c0_i32_0 = arith.constant 0 : i32
    %c0_i32_1 = arith.constant 0 : i32
    return %arg1, %c0_i32, %c0_i32_0 : i32, i32, i32
  }
  func.func @transform_9(%arg0: i32, %arg1: i32) -> (i32, i32, i32) {
    %c0_i32 = arith.constant 0 : i32
    %c0_i32_0 = arith.constant 0 : i32
    %c0_i32_1 = arith.constant 0 : i32
    return %arg1, %c0_i32, %c0_i32_0 : i32, i32, i32
  }
  func.func @transform_10(%arg0: i32, %arg1: i32) -> (i32, i32, i32) {
    %c0_i32 = arith.constant 0 : i32
    %c0_i32_0 = arith.constant 0 : i32
    %c0_i32_1 = arith.constant 0 : i32
    return %arg1, %c0_i32, %c0_i32_0 : i32, i32, i32
  }
  func.func @transform_11(%arg0: i32, %arg1: i32) -> (i32, i32, i32) {
    %c0_i32 = arith.constant 0 : i32
    %c0_i32_0 = arith.constant 0 : i32
    %c0_i32_1 = arith.constant 0 : i32
    return %arg1, %c0_i32, %c0_i32_0 : i32, i32, i32
  }
  func.func @transform_12(%arg0: i32, %arg1: i32) -> (i32, i32, i32) {
    %c0_i32 = arith.constant 0 : i32
    %c0_i32_0 = arith.constant 0 : i32
    %c0_i32_1 = arith.constant 0 : i32
    return %arg1, %c0_i32, %c0_i32_0 : i32, i32, i32
  }
  func.func @transform_13(%arg0: i32, %arg1: i32) -> (i32, i32, i32) {
    %c0_i32 = arith.constant 0 : i32
    %c0_i32_0 = arith.constant 0 : i32
    %c0_i32_1 = arith.constant 0 : i32
    return %arg1, %c0_i32, %c0_i32_0 : i32, i32, i32
  }
  func.func @transform_14(%arg0: i32, %arg1: i32) -> (i32, i32) {
    %c0_i32 = arith.constant 0 : i32
    %c0_i32_0 = arith.constant 0 : i32
    %c0_i32_1 = arith.constant 0 : i32
    return %c0_i32, %c0_i32_0 : i32, i32
  }
  func.func @transform_15(%arg0: i32, %arg1: i32) -> (i32, i32) {
    %c0_i32 = arith.constant 0 : i32
    %c0_i32_0 = arith.constant 0 : i32
    %c0_i32_1 = arith.constant 0 : i32
    return %c0_i32, %c0_i32_0 : i32, i32
  }
  func.func @transform_16(%arg0: i32, %arg1: i32) -> (i32, i32, i32) {
    %c0_i32 = arith.constant 0 : i32
    %c0_i32_0 = arith.constant 0 : i32
    %c0_i32_1 = arith.constant 0 : i32
    return %arg0, %c0_i32, %c0_i32_0 : i32, i32, i32
  }
}

</mosaic_0001>

<llo_original>
// kernel: tpu_custom_call.1
$region0: #{tpu_custom_call.1}
  #allocation0 [shape = 'u32[]', space=smem, size = 0x4, offset = 0x4, fixed_abs, tag = 'smem constant byte address 0x4 - core index']
  #allocation1 [shape = 'u32[144,128]{1,0:T(1,128)}', space=vmem, size = 0x12000, scoped, tag = 'internal scratch']
  #allocation2 [shape = 'bf16[2,8,32]{2,1,0:T(8,128)(2,1)}', space=vmem, size = 0x1000, scoped, tag = 'scratch operand']
  %s0 = inlined_call_operand.hbm [shape: bf16[2,8,32], index: 0, kind: input, shape index: {}]
  %s1 = inlined_call_operand.hbm [shape: f32[2,1,8], index: 1, kind: input, shape index: {}]
  %s2 = inlined_call_operand.vmem [shape: bf16[2,32,96], index: 2, kind: input, shape index: {}]
  %s3 = inlined_call_operand.vmem [shape: f32[2,1,96], index: 3, kind: input, shape index: {}]
  %s4 = inlined_call_operand.vmem [shape: bf16[2,32,32], index: 4, kind: input, shape index: {}]
  %s5 = inlined_call_operand.vmem [shape: f32[2,1,32], index: 5, kind: input, shape index: {}]
  %s6 = inlined_call_operand.vmem [shape: f32[2,1,32], index: 6, kind: input, shape index: {}]
  %s7 = inlined_call_operand.vmem [shape: f32[2,1,32], index: 7, kind: input, shape index: {}]
  %s8 = inlined_call_operand.vmem [shape: bf16[2,32,64], index: 8, kind: input, shape index: {}]
  %s9 = inlined_call_operand.vmem [shape: f32[2,1,64], index: 9, kind: input, shape index: {}]
  %s10 = inlined_call_operand.vmem [shape: bf16[2,64,32], index: 10, kind: input, shape index: {}]
  %s11 = inlined_call_operand.vmem [shape: f32[2,1,32], index: 11, kind: input, shape index: {}]
  %s12 = inlined_call_operand.vmem [shape: f32[2,1,32], index: 12, kind: input, shape index: {}]
  %s13 = inlined_call_operand.vmem [shape: f32[2,1,32], index: 13, kind: input, shape index: {}]
  %s14 = inlined_call_operand.hbm [shape: f32[32,128], index: 14, kind: input, shape index: {}]
  %s15 = inlined_call_operand.vmem [shape: f32[1,128], index: 15, kind: input, shape index: {}]
  %s16 = inlined_call_operand.hbm [shape: f32[2,1,128], index: 16, kind: output, shape index: {}]
  %s17 = sld [smem:[#allocation0]]
  $region121: #{tpu_custom_call.1} parent=0
    _
  %s19 = ssub.s32 1, %s17
  %s20 = scalar_select 0, %s19, %s17
  $region1: #{tpu_custom_call.1} parent=0
    #allocation3 [shape = 'u8[4096]{0}', space=vmem, size = 0x1000, scoped, tag = 'input window, operand 0, single buffered']
    #allocation4 [shape = 's32[2]{0}', space=sflag, size = 0x8, scoped, tag = 'scoped memory for tpu_custom_call.1']
    #allocation5 [shape = 's32[2]{0}', space=sflag, size = 0x8, scoped, tag = 'scoped memory for tpu_custom_call.1']
    #allocation6 [shape = 'u8[1024]{0}', space=vmem, size = 0x400, scoped, tag = 'input window, operand 1, single buffered']
    #allocation7 [shape = 's32[1]{0}', space=sflag, size = 0x4, scoped, tag = 'scoped memory for tpu_custom_call.1']
    #allocation8 [shape = 'u8[16384]{0}', space=vmem, size = 0x4000, scoped, tag = 'input window, operand 14, single buffered']
    #allocation9 [shape = 'u8[1024]{0}', space=vmem, size = 0x400, scoped, tag = 'output window, operand 0, single buffered']
    %21 = vsyncpa [#allocation4], 0
    %22 = vsyncpa [#allocation7], 0
    %23 = vsyncpa [#allocation5], 0
    loop: start=0, step=1, limit=4
    $region2: #{tpu_custom_call.1} parent=1 // loop_pre_header
      _
    $region3: #{tpu_custom_call.1} parent=1 // loop_header
      %s25 = sphi 0, %s29
      %p26 = scmp.ge.s32.totalorder %s25, 4
      %s32 = sphi 0, %s44
      %s33 = sphi 0, %s40
      %s34 = sphi 0, %s32
      %s35 = sphi 0, %s33
      %s36 = sphi 0, %s34
      %s37 = sphi 0, %s35
      %s47 = sphi 0, %s49
      %s50 = sphi 0, %s47
      %s51 = sphi 0, %s50
      %s67 = sphi 0, %s51
      %s73 = sphi 0, %s75
      %s76 = sphi 0, %s73
      %s77 = sphi 0, %s76
      %s93 = sphi 0, %s77
      %s99 = sphi 0, %s101
      %s102 = sphi 0, %s99
      %s103 = sphi 0, %s102
      %s119 = sphi 0, %s103
      %s125 = sphi 0, %s127
      %s128 = sphi 0, %s125
      %s129 = sphi 0, %s128
      %s145 = sphi 0, %s129
      %s151 = sphi 0, %s153
      %s154 = sphi 0, %s151
      %s155 = sphi 0, %s154
      %s171 = sphi 0, %s155
      %s177 = sphi 0, %s179
      %s180 = sphi 0, %s177
      %s181 = sphi 0, %s180
      %s197 = sphi 0, %s181
      %s203 = sphi 0, %s205
      %s206 = sphi 0, %s203
      %s207 = sphi 0, %s206
      %s223 = sphi 0, %s207
      %s229 = sphi 0, %s231
      %s232 = sphi 0, %s229
      %s233 = sphi 0, %s232
      %s249 = sphi 0, %s233
      %s255 = sphi 0, %s257
      %s258 = sphi 0, %s255
      %s259 = sphi 0, %s258
      %s275 = sphi 0, %s259
      %s281 = sphi 0, %s283
      %s284 = sphi 0, %s281
      %s285 = sphi 0, %s284
      %s301 = sphi 0, %s285
      %s307 = sphi 0, %s309
      %s310 = sphi 0, %s307
      %s311 = sphi 0, %s310
      %s327 = sphi 0, %s311
      %s333 = sphi 0, %s335
      %s336 = sphi 0, %s333
      %s337 = sphi 0, %s336
      %s353 = sphi 0, %s337
      %s359 = sphi 0, %s361
      %s362 = sphi 0, %s359
      %s363 = sphi 0, %s362
      %s379 = sphi 0, %s363
      %s385 = sphi 0, %s387
      %s388 = sphi 0, %s385
      %s389 = sphi 0, %s388
      %s405 = sphi 0, %s389
      %s409 = sphi 0, %s409
      %s411 = sphi 0, %s409
      %s412 = sphi 0, %s411
      %s426 = sphi 0, %s412
      %s430 = sphi 0, %s430
      %s432 = sphi 0, %s430
      %s433 = sphi 0, %s432
      %s447 = sphi 0, %s433
      %s453 = sphi 0, %s455
      %s456 = sphi 0, %s453
      %s457 = sphi 0, %s456
      %s473 = sphi 0, %s457
    $region4: #{tpu_custom_call.1} parent=1 // loop_header_branch
      %28 = sbr.rel (%p26) target = $region8
    $region5: #{tpu_custom_call.1} parent=1 // loop_body
      %s30 = ssub.s32 %s25, 1
      %s31 = ssub.s32 %s25, 2
      %s38 = sadd.s32 1, %s33
      %p39 = scmp.ge.s32.totalorder %s38, 2
      %s40 = scalar_select %p39, 0, %s38
      %s41 = sadd.s32 1, %s32
      %s42 = scalar_select %p39, %s41, %s32
      %p43 = scmp.ge.s32.totalorder %s42, 1
      %s44 = scalar_select %p43, 0, %s42
      %s45 = ssub.s32 %s32, %s44
      %p46 = scmp.eq.s32.totalorder %s45, 0
      %s48 = sadd.s32 %s47, 1
      %s49 = scalar_select %p46, %s47, %s48
      %p52 = pneg %p46
      %p53 = scmp.eq.s32.totalorder %s25, 1
      %p54 = por %p52, %p53
      %p55 = scmp.ne.s32.totalorder %s47, %s50
      %p56 = scmp.eq.s32.totalorder %s25, 0
      %p57 = por %p55, %p56
      %p58 = scmp.ne.s32.totalorder %s47, %s50
      %p59 = scmp.eq.s32.totalorder %s30, 1
      %p60 = por %p58, %p59
      %p61 = scmp.ne.s32.totalorder %s50, %s51
      %p62 = scmp.eq.s32.totalorder %s30, 0
      %p63 = por %p61, %p62
      %p64 = scmp.ne.s32.totalorder %s50, %s51
      %p65 = scmp.eq.s32.totalorder %s31, 1
      %p66 = por %p64, %p65
      %p68 = scmp.ne.s32.totalorder %s51, %s67
      %p69 = scmp.eq.s32.totalorder %s31, 0
      %p70 = por %p68, %p69
      %s71 = ssub.s32 %s32, %s44
      %p72 = scmp.eq.s32.totalorder %s71, 0
      %s74 = sadd.s32 %s73, 1
      %s75 = scalar_select %p72, %s73, %s74
      %p78 = pneg %p72
      %p79 = scmp.eq.s32.totalorder %s25, 1
      %p80 = por %p78, %p79
      %p81 = scmp.ne.s32.totalorder %s73, %s76
      %p82 = scmp.eq.s32.totalorder %s25, 0
      %p83 = por %p81, %p82
      %p84 = scmp.ne.s32.totalorder %s73, %s76
      %p85 = scmp.eq.s32.totalorder %s30, 1
      %p86 = por %p84, %p85
      %p87 = scmp.ne.s32.totalorder %s76, %s77
      %p88 = scmp.eq.s32.totalorder %s30, 0
      %p89 = por %p87, %p88
      %p90 = scmp.ne.s32.totalorder %s76, %s77
      %p91 = scmp.eq.s32.totalorder %s31, 1
      %p92 = por %p90, %p91
      %p94 = scmp.ne.s32.totalorder %s77, %s93
      %p95 = scmp.eq.s32.totalorder %s31, 0
      %p96 = por %p94, %p95
      %s97 = ssub.s32 %s33, %s40
      %p98 = scmp.eq.s32.totalorder %s97, 0
      %s100 = sadd.s32 %s99, 1
      %s101 = scalar_select %p98, %s99, %s100
      %p104 = pneg %p98
      %p105 = scmp.eq.s32.totalorder %s25, 1
      %p106 = por %p104, %p105
      %p107 = scmp.ne.s32.totalorder %s99, %s102
      %p108 = scmp.eq.s32.totalorder %s25, 0
      %p109 = por %p107, %p108
      %p110 = scmp.ne.s32.totalorder %s99, %s102
      %p111 = scmp.eq.s32.totalorder %s30, 1
      %p112 = por %p110, %p111
      %p113 = scmp.ne.s32.totalorder %s102, %s103
      %p114 = scmp.eq.s32.totalorder %s30, 0
      %p115 = por %p113, %p114
      %p116 = scmp.ne.s32.totalorder %s102, %s103
      %p117 = scmp.eq.s32.totalorder %s31, 1
      %p118 = por %p116, %p117
      %p120 = scmp.ne.s32.totalorder %s103, %s119
      %p121 = scmp.eq.s32.totalorder %s31, 0
      %p122 = por %p120, %p121
      %s123 = ssub.s32 %s33, %s40
      %p124 = scmp.eq.s32.totalorder %s123, 0
      %s126 = sadd.s32 %s125, 1
      %s127 = scalar_select %p124, %s125, %s126
      %p130 = pneg %p124
      %p131 = scmp.eq.s32.totalorder %s25, 1
      %p132 = por %p130, %p131
      %p133 = scmp.ne.s32.totalorder %s125, %s128
      %p134 = scmp.eq.s32.totalorder %s25, 0
      %p135 = por %p133, %p134
      %p136 = scmp.ne.s32.totalorder %s125, %s128
      %p137 = scmp.eq.s32.totalorder %s30, 1
      %p138 = por %p136, %p137
      %p139 = scmp.ne.s32.totalorder %s128, %s129
      %p140 = scmp.eq.s32.totalorder %s30, 0
      %p141 = por %p139, %p140
      %p142 = scmp.ne.s32.totalorder %s128, %s129
      %p143 = scmp.eq.s32.totalorder %s31, 1
      %p144 = por %p142, %p143
      %p146 = scmp.ne.s32.totalorder %s129, %s145
      %p147 = scmp.eq.s32.totalorder %s31, 0
      %p148 = por %p146, %p147
      %s149 = ssub.s32 %s33, %s40
      %p150 = scmp.eq.s32.totalorder %s149, 0
      %s152 = sadd.s32 %s151, 1
      %s153 = scalar_select %p150, %s151, %s152
      %p156 = pneg %p150
      %p157 = scmp.eq.s32.totalorder %s25, 1
      %p158 = por %p156, %p157
      %p159 = scmp.ne.s32.totalorder %s151, %s154
      %p160 = scmp.eq.s32.totalorder %s25, 0
      %p161 = por %p159, %p160
      %p162 = scmp.ne.s32.totalorder %s151, %s154
      %p163 = scmp.eq.s32.totalorder %s30, 1
      %p164 = por %p162, %p163
      %p165 = scmp.ne.s32.totalorder %s154, %s155
      %p166 = scmp.eq.s32.totalorder %s30, 0
      %p167 = por %p165, %p166
      %p168 = scmp.ne.s32.totalorder %s154, %s155
      %p169 = scmp.eq.s32.totalorder %s31, 1
      %p170 = por %p168, %p169
      %p172 = scmp.ne.s32.totalorder %s155, %s171
      %p173 = scmp.eq.s32.totalorder %s31, 0
      %p174 = por %p172, %p173
      %s175 = ssub.s32 %s33, %s40
      %p176 = scmp.eq.s32.totalorder %s175, 0
      %s178 = sadd.s32 %s177, 1
      %s179 = scalar_select %p176, %s177, %s178
      %p182 = pneg %p176
      %p183 = scmp.eq.s32.totalorder %s25, 1
      %p184 = por %p182, %p183
      %p185 = scmp.ne.s32.totalorder %s177, %s180
      %p186 = scmp.eq.s32.totalorder %s25, 0
      %p187 = por %p185, %p186
      %p188 = scmp.ne.s32.totalorder %s177, %s180
      %p189 = scmp.eq.s32.totalorder %s30, 1
      %p190 = por %p188, %p189
      %p191 = scmp.ne.s32.totalorder %s180, %s181
      %p192 = scmp.eq.s32.totalorder %s30, 0
      %p193 = por %p191, %p192
      %p194 = scmp.ne.s32.totalorder %s180, %s181
      %p195 = scmp.eq.s32.totalorder %s31, 1
      %p196 = por %p194, %p195
      %p198 = scmp.ne.s32.totalorder %s181, %s197
      %p199 = scmp.eq.s32.totalorder %s31, 0
      %p200 = por %p198, %p199
      %s201 = ssub.s32 %s33, %s40
      %p202 = scmp.eq.s32.totalorder %s201, 0
      %s204 = sadd.s32 %s203, 1
      %s205 = scalar_select %p202, %s203, %s204
      %p208 = pneg %p202
      %p209 = scmp.eq.s32.totalorder %s25, 1
      %p210 = por %p208, %p209
      %p211 = scmp.ne.s32.totalorder %s203, %s206
      %p212 = scmp.eq.s32.totalorder %s25, 0
      %p213 = por %p211, %p212
      %p214 = scmp.ne.s32.totalorder %s203, %s206
      %p215 = scmp.eq.s32.totalorder %s30, 1
      %p216 = por %p214, %p215
      %p217 = scmp.ne.s32.totalorder %s206, %s207
      %p218 = scmp.eq.s32.totalorder %s30, 0
      %p219 = por %p217, %p218
      %p220 = scmp.ne.s32.totalorder %s206, %s207
      %p221 = scmp.eq.s32.totalorder %s31, 1
      %p222 = por %p220, %p221
      %p224 = scmp.ne.s32.totalorder %s207, %s223
      %p225 = scmp.eq.s32.totalorder %s31, 0
      %p226 = por %p224, %p225
      %s227 = ssub.s32 %s33, %s40
      %p228 = scmp.eq.s32.totalorder %s227, 0
      %s230 = sadd.s32 %s229, 1
      %s231 = scalar_select %p228, %s229, %s230
      %p234 = pneg %p228
      %p235 = scmp.eq.s32.totalorder %s25, 1
      %p236 = por %p234, %p235
      %p237 = scmp.ne.s32.totalorder %s229, %s232
      %p238 = scmp.eq.s32.totalorder %s25, 0
      %p239 = por %p237, %p238
      %p240 = scmp.ne.s32.totalorder %s229, %s232
      %p241 = scmp.eq.s32.totalorder %s30, 1
      %p242 = por %p240, %p241
      %p243 = scmp.ne.s32.totalorder %s232, %s233
      %p244 = scmp.eq.s32.totalorder %s30, 0
      %p245 = por %p243, %p244
      %p246 = scmp.ne.s32.totalorder %s232, %s233
      %p247 = scmp.eq.s32.totalorder %s31, 1
      %p248 = por %p246, %p247
      %p250 = scmp.ne.s32.totalorder %s233, %s249
      %p251 = scmp.eq.s32.totalorder %s31, 0
      %p252 = por %p250, %p251
      %s253 = ssub.s32 %s33, %s40
      %p254 = scmp.eq.s32.totalorder %s253, 0
      %s256 = sadd.s32 %s255, 1
      %s257 = scalar_select %p254, %s255, %s256
      %p260 = pneg %p254
      %p261 = scmp.eq.s32.totalorder %s25, 1
      %p262 = por %p260, %p261
      %p263 = scmp.ne.s32.totalorder %s255, %s258
      %p264 = scmp.eq.s32.totalorder %s25, 0
      %p265 = por %p263, %p264
      %p266 = scmp.ne.s32.totalorder %s255, %s258
      %p267 = scmp.eq.s32.totalorder %s30, 1
      %p268 = por %p266, %p267
      %p269 = scmp.ne.s32.totalorder %s258, %s259
      %p270 = scmp.eq.s32.totalorder %s30, 0
      %p271 = por %p269, %p270
      %p272 = scmp.ne.s32.totalorder %s258, %s259
      %p273 = scmp.eq.s32.totalorder %s31, 1
      %p274 = por %p272, %p273
      %p276 = scmp.ne.s32.totalorder %s259, %s275
      %p277 = scmp.eq.s32.totalorder %s31, 0
      %p278 = por %p276, %p277
      %s279 = ssub.s32 %s33, %s40
      %p280 = scmp.eq.s32.totalorder %s279, 0
      %s282 = sadd.s32 %s281, 1
      %s283 = scalar_select %p280, %s281, %s282
      %p286 = pneg %p280
      %p287 = scmp.eq.s32.totalorder %s25, 1
      %p288 = por %p286, %p287
      %p289 = scmp.ne.s32.totalorder %s281, %s284
      %p290 = scmp.eq.s32.totalorder %s25, 0
      %p291 = por %p289, %p290
      %p292 = scmp.ne.s32.totalorder %s281, %s284
      %p293 = scmp.eq.s32.totalorder %s30, 1
      %p294 = por %p292, %p293
      %p295 = scmp.ne.s32.totalorder %s284, %s285
      %p296 = scmp.eq.s32.totalorder %s30, 0
      %p297 = por %p295, %p296
      %p298 = scmp.ne.s32.totalorder %s284, %s285
      %p299 = scmp.eq.s32.totalorder %s31, 1
      %p300 = por %p298, %p299
      %p302 = scmp.ne.s32.totalorder %s285, %s301
      %p303 = scmp.eq.s32.totalorder %s31, 0
      %p304 = por %p302, %p303
      %s305 = ssub.s32 %s33, %s40
      %p306 = scmp.eq.s32.totalorder %s305, 0
      %s308 = sadd.s32 %s307, 1
      %s309 = scalar_select %p306, %s307, %s308
      %p312 = pneg %p306
      %p313 = scmp.eq.s32.totalorder %s25, 1
      %p314 = por %p312, %p313
      %p315 = scmp.ne.s32.totalorder %s307, %s310
      %p316 = scmp.eq.s32.totalorder %s25, 0
      %p317 = por %p315, %p316
      %p318 = scmp.ne.s32.totalorder %s307, %s310
      %p319 = scmp.eq.s32.totalorder %s30, 1
      %p320 = por %p318, %p319
      %p321 = scmp.ne.s32.totalorder %s310, %s311
      %p322 = scmp.eq.s32.totalorder %s30, 0
      %p323 = por %p321, %p322
      %p324 = scmp.ne.s32.totalorder %s310, %s311
      %p325 = scmp.eq.s32.totalorder %s31, 1
      %p326 = por %p324, %p325
      %p328 = scmp.ne.s32.totalorder %s311, %s327
      %p329 = scmp.eq.s32.totalorder %s31, 0
      %p330 = por %p328, %p329
      %s331 = ssub.s32 %s33, %s40
      %p332 = scmp.eq.s32.totalorder %s331, 0
      %s334 = sadd.s32 %s333, 1
      %s335 = scalar_select %p332, %s333, %s334
      %p338 = pneg %p332
      %p339 = scmp.eq.s32.totalorder %s25, 1
      %p340 = por %p338, %p339
      %p341 = scmp.ne.s32.totalorder %s333, %s336
      %p342 = scmp.eq.s32.totalorder %s25, 0
      %p343 = por %p341, %p342
      %p344 = scmp.ne.s32.totalorder %s333, %s336
      %p345 = scmp.eq.s32.totalorder %s30, 1
      %p346 = por %p344, %p345
      %p347 = scmp.ne.s32.totalorder %s336, %s337
      %p348 = scmp.eq.s32.totalorder %s30, 0
      %p349 = por %p347, %p348
      %p350 = scmp.ne.s32.totalorder %s336, %s337
      %p351 = scmp.eq.s32.totalorder %s31, 1
      %p352 = por %p350, %p351
      %p354 = scmp.ne.s32.totalorder %s337, %s353
      %p355 = scmp.eq.s32.totalorder %s31, 0
      %p356 = por %p354, %p355
      %s357 = ssub.s32 %s33, %s40
      %p358 = scmp.eq.s32.totalorder %s357, 0
      %s360 = sadd.s32 %s359, 1
      %s361 = scalar_select %p358, %s359, %s360
      %p364 = pneg %p358
      %p365 = scmp.eq.s32.totalorder %s25, 1
      %p366 = por %p364, %p365
      %p367 = scmp.ne.s32.totalorder %s359, %s362
      %p368 = scmp.eq.s32.totalorder %s25, 0
      %p369 = por %p367, %p368
      %p370 = scmp.ne.s32.totalorder %s359, %s362
      %p371 = scmp.eq.s32.totalorder %s30, 1
      %p372 = por %p370, %p371
      %p373 = scmp.ne.s32.totalorder %s362, %s363
      %p374 = scmp.eq.s32.totalorder %s30, 0
      %p375 = por %p373, %p374
      %p376 = scmp.ne.s32.totalorder %s362, %s363
      %p377 = scmp.eq.s32.totalorder %s31, 1
      %p378 = por %p376, %p377
      %p380 = scmp.ne.s32.totalorder %s363, %s379
      %p381 = scmp.eq.s32.totalorder %s31, 0
      %p382 = por %p380, %p381
      %s383 = ssub.s32 %s33, %s40
      %p384 = scmp.eq.s32.totalorder %s383, 0
      %s386 = sadd.s32 %s385, 1
      %s387 = scalar_select %p384, %s385, %s386
      %p390 = pneg %p384
      %p391 = scmp.eq.s32.totalorder %s25, 1
      %p392 = por %p390, %p391
      %p393 = scmp.ne.s32.totalorder %s385, %s388
      %p394 = scmp.eq.s32.totalorder %s25, 0
      %p395 = por %p393, %p394
      %p396 = scmp.ne.s32.totalorder %s385, %s388
      %p397 = scmp.eq.s32.totalorder %s30, 1
      %p398 = por %p396, %p397
      %p399 = scmp.ne.s32.totalorder %s388, %s389
      %p400 = scmp.eq.s32.totalorder %s30, 0
      %p401 = por %p399, %p400
      %p402 = scmp.ne.s32.totalorder %s388, %s389
      %p403 = scmp.eq.s32.totalorder %s31, 1
      %p404 = por %p402, %p403
      %p406 = scmp.ne.s32.totalorder %s389, %s405
      %p407 = scmp.eq.s32.totalorder %s31, 0
      %p408 = por %p406, %p407
      %s410 = sadd.s32 %s409, 1
      %p413 = scmp.eq.s32.totalorder %s25, 1
      %p414 = scmp.ne.s32.totalorder %s409, %s411
      %p415 = scmp.eq.s32.totalorder %s25, 0
      %p416 = por %p414, %p415
      %p417 = scmp.ne.s32.totalorder %s409, %s411
      %p418 = scmp.eq.s32.totalorder %s30, 1
      %p419 = por %p417, %p418
      %p420 = scmp.ne.s32.totalorder %s411, %s412
      %p421 = scmp.eq.s32.totalorder %s30, 0
      %p422 = por %p420, %p421
      %p423 = scmp.ne.s32.totalorder %s411, %s412
      %p424 = scmp.eq.s32.totalorder %s31, 1
      %p425 = por %p423, %p424
      %p427 = scmp.ne.s32.totalorder %s412, %s426
      %p428 = scmp.eq.s32.totalorder %s31, 0
      %p429 = por %p427, %p428
      %s431 = sadd.s32 %s430, 1
      %p434 = scmp.eq.s32.totalorder %s25, 1
      %p435 = scmp.ne.s32.totalorder %s430, %s432
      %p436 = scmp.eq.s32.totalorder %s25, 0
      %p437 = por %p435, %p436
      %p438 = scmp.ne.s32.totalorder %s430, %s432
      %p439 = scmp.eq.s32.totalorder %s30, 1
      %p440 = por %p438, %p439
      %p441 = scmp.ne.s32.totalorder %s432, %s433
      %p442 = scmp.eq.s32.totalorder %s30, 0
      %p443 = por %p441, %p442
      %p444 = scmp.ne.s32.totalorder %s432, %s433
      %p445 = scmp.eq.s32.totalorder %s31, 1
      %p446 = por %p444, %p445
      %p448 = scmp.ne.s32.totalorder %s433, %s447
      %p449 = scmp.eq.s32.totalorder %s31, 0
      %p450 = por %p448, %p449
      %s451 = ssub.s32 %s32, %s44
      %p452 = scmp.eq.s32.totalorder %s451, 0
      %s454 = sadd.s32 %s453, 1
      %s455 = scalar_select %p452, %s453, %s454
      %p458 = pneg %p452
      %p459 = scmp.eq.s32.totalorder %s25, 1
      %p460 = por %p458, %p459
      %p461 = scmp.ne.s32.totalorder %s453, %s456
      %p462 = scmp.eq.s32.totalorder %s25, 0
      %p463 = por %p461, %p462
      %p464 = scmp.ne.s32.totalorder %s453, %s456
      %p465 = scmp.eq.s32.totalorder %s30, 1
      %p466 = por %p464, %p465
      %p467 = scmp.ne.s32.totalorder %s456, %s457
      %p468 = scmp.eq.s32.totalorder %s30, 0
      %p469 = por %p467, %p468
      %p470 = scmp.ne.s32.totalorder %s456, %s457
      %p471 = scmp.eq.s32.totalorder %s31, 1
      %p472 = por %p470, %p471
      %p474 = scmp.ne.s32.totalorder %s457, %s473
      %p475 = scmp.eq.s32.totalorder %s31, 0
      %p476 = por %p474, %p475
      %p477 = scmp.le.s32.totalorder 1, %s25
      %p478 = scmp.lt.s32.totalorder %s25, 3
      %p479 = pnand %p477, %p478
      %p480 = pneg %p479
      // Predicated region
      $region9: #{tpu_custom_call.1} parent=5 // pred_check
        _
      $region10: #{tpu_custom_call.1} parent=5 // pred_check_branch
        %482 = sbr.rel (%p479) target = $region12
      $region11: #{tpu_custom_call.1} parent=5 // pred_region
        %s483 = ssub.s32 %s25, 1
        // Predicated region
        $region13: #{tpu_custom_call.1} parent=11 // pred_check
          %p484 = pneg %p63
        $region14: #{tpu_custom_call.1} parent=11 // pred_check_branch
          %486 = sbr.rel (%p484) target = $region16
        $region15: #{tpu_custom_call.1} parent=11 // pred_region
          %s487 = smul.u32 2, %s34
          %s489 = ssub.s32 128, 128
          %490 = vsyncadd [#allocation4], %s489
          %s491 = smul.addr %s487, 64
          %s492 = scalar_lea.hbm %s0, %s491
          %s493 = sshll.u32 [#allocation3], 4
          %s494 = int_to_ptr.vmem [resolvable:$true] %s493
          %499 = dma.hbm_to_vmem [thread:$0]  %s492, 128, %s494, [#allocation4], 64, 64, 4
        $region16: #{tpu_custom_call.1} parent=11 // pred_fallthru
          _
        // Predicated region
        $region17: #{tpu_custom_call.1} parent=11 // pred_check
          %p500 = pneg %p89
        $region18: #{tpu_custom_call.1} parent=11 // pred_check_branch
          %502 = sbr.rel (%p500) target = $region20
        $region19: #{tpu_custom_call.1} parent=11 // pred_region
          %s503 = smul.u32 2, %s34
          %s505 = ssub.s32 32, 32
          %506 = vsyncadd [#allocation7], %s505
          %s507 = smul.addr %s503, 16
          %s508 = scalar_lea.hbm %s1, %s507
          %s509 = sshll.u32 [#allocation6], 4
          %s510 = int_to_ptr.vmem [resolvable:$true] %s509
          %515 = dma.hbm_to_vmem [thread:$0]  %s508, 32, %s510, [#allocation7], 16, 16, 1
        $region20: #{tpu_custom_call.1} parent=11 // pred_fallthru
          _
        // Predicated region
        $region21: #{tpu_custom_call.1} parent=11 // pred_check
          %p516 = pneg %p422
        $region22: #{tpu_custom_call.1} parent=11 // pred_check_branch
          %518 = sbr.rel (%p516) target = $region24
        $region23: #{tpu_custom_call.1} parent=11 // pred_region
          %s520 = ssub.s32 512, 512
          %521 = vsyncadd [#allocation7], %s520
          %s522 = sshll.u32 [#allocation8], 4
          %s523 = int_to_ptr.vmem [resolvable:$true] %s522
          %528 = dma.hbm_to_vmem [thread:$0]  %s14, 512, %s523, [#allocation7], 128, 128, 8
        $region24: #{tpu_custom_call.1} parent=11 // pred_fallthru
          _
        // Predicated region
        $region25: #{tpu_custom_call.1} parent=11 // pred_check
          %p529 = pneg %p443
        $region26: #{tpu_custom_call.1} parent=11 // pred_check_branch
          %531 = sbr.rel (%p529) target = $region28
        $region27: #{tpu_custom_call.1} parent=11 // pred_region
          _
        $region28: #{tpu_custom_call.1} parent=11 // pred_fallthru
          _
      $region12: #{tpu_custom_call.1} parent=5 // pred_fallthru
        _
      %p532 = scmp.lt.s32.totalorder %s25, 2
      // Predicated region
      $region29: #{tpu_custom_call.1} parent=5 // pred_check
        %p533 = pneg %p532
      $region30: #{tpu_custom_call.1} parent=5 // pred_check_branch
        %535 = sbr.rel (%p533) target = $region32
      $region31: #{tpu_custom_call.1} parent=5 // pred_region
        // Predicated region
        $region33: #{tpu_custom_call.1} parent=31 // pred_check
          %p536 = pneg %p109
        $region34: #{tpu_custom_call.1} parent=31 // pred_check_branch
          %538 = sbr.rel (%p536) target = $region36
        $region35: #{tpu_custom_call.1} parent=31 // pred_region
          %p539 = scmp.lt.s32.totalorder %s33, 1
          %s540 = scalar_select %p539, %s33, 1
          %s541 = smul.addr %s540, 4
          %s542 = smul.addr %s541, 4
          %s543 = scalar_lea.vmem %s2, %s542
        $region36: #{tpu_custom_call.1} parent=31 // pred_fallthru
          _
        // Predicated region
        $region37: #{tpu_custom_call.1} parent=31 // pred_check
          %p544 = pneg %p135
        $region38: #{tpu_custom_call.1} parent=31 // pred_check_branch
          %546 = sbr.rel (%p544) target = $region40
        $region39: #{tpu_custom_call.1} parent=31 // pred_region
          %p547 = scmp.lt.s32.totalorder %s33, 1
          %s548 = scalar_select %p547, %s33, 1
          %s549 = scalar_lea.vmem %s3, %s548
        $region40: #{tpu_custom_call.1} parent=31 // pred_fallthru
          _
        // Predicated region
        $region41: #{tpu_custom_call.1} parent=31 // pred_check
          %p550 = pneg %p161
        $region42: #{tpu_custom_call.1} parent=31 // pred_check_branch
          %552 = sbr.rel (%p550) target = $region44
        $region43: #{tpu_custom_call.1} parent=31 // pred_region
          %p553 = scmp.lt.s32.totalorder %s33, 1
          %s554 = scalar_select %p553, %s33, 1
          %s555 = smul.addr %s554, 4
          %s556 = smul.addr %s555, 4
          %s557 = scalar_lea.vmem %s4, %s556
        $region44: #{tpu_custom_call.1} parent=31 // pred_fallthru
          _
        // Predicated region
        $region45: #{tpu_custom_call.1} parent=31 // pred_check
          %p558 = pneg %p187
        $region46: #{tpu_custom_call.1} parent=31 // pred_check_branch
          %560 = sbr.rel (%p558) target = $region48
        $region47: #{tpu_custom_call.1} parent=31 // pred_region
          %p561 = scmp.lt.s32.totalorder %s33, 1
          %s562 = scalar_select %p561, %s33, 1
          %s563 = scalar_lea.vmem %s5, %s562
        $region48: #{tpu_custom_call.1} parent=31 // pred_fallthru
          _
        // Predicated region
        $region49: #{tpu_custom_call.1} parent=31 // pred_check
          %p564 = pneg %p213
        $region50: #{tpu_custom_call.1} parent=31 // pred_check_branch
          %566 = sbr.rel (%p564) target = $region52
        $region51: #{tpu_custom_call.1} parent=31 // pred_region
          %p567 = scmp.lt.s32.totalorder %s33, 1
          %s568 = scalar_select %p567, %s33, 1
          %s569 = scalar_lea.vmem %s6, %s568
        $region52: #{tpu_custom_call.1} parent=31 // pred_fallthru
          _
        // Predicated region
        $region53: #{tpu_custom_call.1} parent=31 // pred_check
          %p570 = pneg %p239
        $region54: #{tpu_custom_call.1} parent=31 // pred_check_branch
          %572 = sbr.rel (%p570) target = $region56
        $region55: #{tpu_custom_call.1} parent=31 // pred_region
          %p573 = scmp.lt.s32.totalorder %s33, 1
          %s574 = scalar_select %p573, %s33, 1
          %s575 = scalar_lea.vmem %s7, %s574
        $region56: #{tpu_custom_call.1} parent=31 // pred_fallthru
          _
        // Predicated region
        $region57: #{tpu_custom_call.1} parent=31 // pred_check
          %p576 = pneg %p265
        $region58: #{tpu_custom_call.1} parent=31 // pred_check_branch
          %578 = sbr.rel (%p576) target = $region60
        $region59: #{tpu_custom_call.1} parent=31 // pred_region
          %p579 = scmp.lt.s32.totalorder %s33, 1
          %s580 = scalar_select %p579, %s33, 1
          %s581 = smul.addr %s580, 4
          %s582 = smul.addr %s581, 4
          %s583 = scalar_lea.vmem %s8, %s582
        $region60: #{tpu_custom_call.1} parent=31 // pred_fallthru
          _
        // Predicated region
        $region61: #{tpu_custom_call.1} parent=31 // pred_check
          %p584 = pneg %p291
        $region62: #{tpu_custom_call.1} parent=31 // pred_check_branch
          %586 = sbr.rel (%p584) target = $region64
        $region63: #{tpu_custom_call.1} parent=31 // pred_region
          %p587 = scmp.lt.s32.totalorder %s33, 1
          %s588 = scalar_select %p587, %s33, 1
          %s589 = scalar_lea.vmem %s9, %s588
        $region64: #{tpu_custom_call.1} parent=31 // pred_fallthru
          _
        // Predicated region
        $region65: #{tpu_custom_call.1} parent=31 // pred_check
          %p590 = pneg %p317
        $region66: #{tpu_custom_call.1} parent=31 // pred_check_branch
          %592 = sbr.rel (%p590) target = $region68
        $region67: #{tpu_custom_call.1} parent=31 // pred_region
          %p593 = scmp.lt.s32.totalorder %s33, 1
          %s594 = scalar_select %p593, %s33, 1
          %s595 = smul.addr %s594, 8
          %s596 = smul.addr %s595, 4
          %s597 = scalar_lea.vmem %s10, %s596
        $region68: #{tpu_custom_call.1} parent=31 // pred_fallthru
          _
        // Predicated region
        $region69: #{tpu_custom_call.1} parent=31 // pred_check
          %p598 = pneg %p343
        $region70: #{tpu_custom_call.1} parent=31 // pred_check_branch
          %600 = sbr.rel (%p598) target = $region72
        $region71: #{tpu_custom_call.1} parent=31 // pred_region
          %p601 = scmp.lt.s32.totalorder %s33, 1
          %s602 = scalar_select %p601, %s33, 1
          %s603 = scalar_lea.vmem %s11, %s602
        $region72: #{tpu_custom_call.1} parent=31 // pred_fallthru
          _
        // Predicated region
        $region73: #{tpu_custom_call.1} parent=31 // pred_check
          %p604 = pneg %p369
        $region74: #{tpu_custom_call.1} parent=31 // pred_check_branch
          %606 = sbr.rel (%p604) target = $region76
        $region75: #{tpu_custom_call.1} parent=31 // pred_region
          %p607 = scmp.lt.s32.totalorder %s33, 1
          %s608 = scalar_select %p607, %s33, 1
          %s609 = scalar_lea.vmem %s12, %s608
        $region76: #{tpu_custom_call.1} parent=31 // pred_fallthru
          _
        // Predicated region
        $region77: #{tpu_custom_call.1} parent=31 // pred_check
          %p610 = pneg %p395
        $region78: #{tpu_custom_call.1} parent=31 // pred_check_branch
          %612 = sbr.rel (%p610) target = $region80
        $region79: #{tpu_custom_call.1} parent=31 // pred_region
          %p613 = scmp.lt.s32.totalorder %s33, 1
          %s614 = scalar_select %p613, %s33, 1
          %s615 = scalar_lea.vmem %s13, %s614
        $region80: #{tpu_custom_call.1} parent=31 // pred_fallthru
          _
      $region32: #{tpu_custom_call.1} parent=5 // pred_fallthru
        _
      %p616 = scmp.le.s32.totalorder 1, %s25
      %p617 = scmp.lt.s32.totalorder %s25, 3
      %p618 = pnand %p616, %p617
      %p619 = pneg %p618
      // Predicated region
      $region81: #{tpu_custom_call.1} parent=5 // pred_check
        _
      $region82: #{tpu_custom_call.1} parent=5 // pred_check_branch
        %621 = sbr.rel (%p618) target = $region84
      $region83: #{tpu_custom_call.1} parent=5 // pred_region
        %s622 = ssub.s32 %s25, 1
        // Predicated region
        $region85: #{tpu_custom_call.1} parent=83 // pred_check
          %p623 = pneg %p63
        $region86: #{tpu_custom_call.1} parent=83 // pred_check_branch
          %625 = sbr.rel (%p623) target = $region88
        $region87: #{tpu_custom_call.1} parent=83 // pred_region
          %626 = dma.done [#allocation4], 128
        $region88: #{tpu_custom_call.1} parent=83 // pred_fallthru
          _
        // Predicated region
        $region89: #{tpu_custom_call.1} parent=83 // pred_check
          %p627 = pneg %p89
        $region90: #{tpu_custom_call.1} parent=83 // pred_check_branch
          %629 = sbr.rel (%p627) target = $region92
        $region91: #{tpu_custom_call.1} parent=83 // pred_region
          %630 = dma.done [#allocation7], 32
        $region92: #{tpu_custom_call.1} parent=83 // pred_fallthru
          _
        // Predicated region
        $region93: #{tpu_custom_call.1} parent=83 // pred_check
          %p631 = pneg %p422
        $region94: #{tpu_custom_call.1} parent=83 // pred_check_branch
          %633 = sbr.rel (%p631) target = $region96
        $region95: #{tpu_custom_call.1} parent=83 // pred_region
          %634 = dma.done [#allocation7], 512
        $region96: #{tpu_custom_call.1} parent=83 // pred_fallthru
          _
        %p635 = pneg %p63
        %p636 = pneg %p60
        %p637 = pneg %p89
        %p638 = pneg %p86
        %p639 = scmp.lt.s32.totalorder %s35, 1
        %s640 = scalar_select %p639, %s35, 1
        %s641 = smul.addr %s640, 4
        %s642 = smul.addr %s641, 4
        %s643 = scalar_lea.vmem %s2, %s642
        %p644 = pneg %p115
        %p645 = pneg %p112
        %p646 = scmp.lt.s32.totalorder %s35, 1
        %s647 = scalar_select %p646, %s35, 1
        %s648 = scalar_lea.vmem %s3, %s647
        %p649 = pneg %p141
        %p650 = pneg %p138
        %p651 = scmp.lt.s32.totalorder %s35, 1
        %s652 = scalar_select %p651, %s35, 1
        %s653 = smul.addr %s652, 4
        %s654 = smul.addr %s653, 4
        %s655 = scalar_lea.vmem %s4, %s654
        %p656 = pneg %p167
        %p657 = pneg %p164
        %p658 = scmp.lt.s32.totalorder %s35, 1
        %s659 = scalar_select %p658, %s35, 1
        %s660 = scalar_lea.vmem %s5, %s659
        %p661 = pneg %p193
        %p662 = pneg %p190
        %p663 = scmp.lt.s32.totalorder %s35, 1
        %s664 = scalar_select %p663, %s35, 1
        %s665 = scalar_lea.vmem %s6, %s664
        %p666 = pneg %p219
        %p667 = pneg %p216
        %p668 = scmp.lt.s32.totalorder %s35, 1
        %s669 = scalar_select %p668, %s35, 1
        %s670 = scalar_lea.vmem %s7, %s669
        %p671 = pneg %p245
        %p672 = pneg %p242
        %p673 = scmp.lt.s32.totalorder %s35, 1
        %s674 = scalar_select %p673, %s35, 1
        %s675 = smul.addr %s674, 4
        %s676 = smul.addr %s675, 4
        %s677 = scalar_lea.vmem %s8, %s676
        %p678 = pneg %p271
        %p679 = pneg %p268
        %p680 = scmp.lt.s32.totalorder %s35, 1
        %s681 = scalar_select %p680, %s35, 1
        %s682 = scalar_lea.vmem %s9, %s681
        %p683 = pneg %p297
        %p684 = pneg %p294
        %p685 = scmp.lt.s32.totalorder %s35, 1
        %s686 = scalar_select %p685, %s35, 1
        %s687 = smul.addr %s686, 8
        %s688 = smul.addr %s687, 4
        %s689 = scalar_lea.vmem %s10, %s688
        %p690 = pneg %p323
        %p691 = pneg %p320
        %p692 = scmp.lt.s32.totalorder %s35, 1
        %s693 = scalar_select %p692, %s35, 1
        %s694 = scalar_lea.vmem %s11, %s693
        %p695 = pneg %p349
        %p696 = pneg %p346
        %p697 = scmp.lt.s32.totalorder %s35, 1
        %s698 = scalar_select %p697, %s35, 1
        %s699 = scalar_lea.vmem %s12, %s698
        %p700 = pneg %p375
        %p701 = pneg %p372
        %p702 = scmp.lt.s32.totalorder %s35, 1
        %s703 = scalar_select %p702, %s35, 1
        %s704 = scalar_lea.vmem %s13, %s703
        %p705 = pneg %p401
        %p706 = pneg %p398
        %p707 = pneg %p422
        %p708 = pneg %p419
        %p709 = pneg %p443
        %p710 = pneg %p440
        %p711 = pneg %p469
        %p712 = pneg %p466
        %s713 = smul.u32 2, %s34
        %s714 = smul.u32 2, %s34
        %p715 = scmp.lt.s32.totalorder %s35, 1
        %s716 = scalar_select %p715, %s35, 1
        %s717 = smul.addr %s716, 4
        %s718 = smul.addr %s717, 4
        %s719 = scalar_lea.vmem %s2, %s718
        %p720 = scmp.lt.s32.totalorder %s35, 1
        %s721 = scalar_select %p720, %s35, 1
        %s722 = scalar_lea.vmem %s3, %s721
        %p723 = scmp.lt.s32.totalorder %s35, 1
        %s724 = scalar_select %p723, %s35, 1
        %s725 = smul.addr %s724, 4
        %s726 = smul.addr %s725, 4
        %s727 = scalar_lea.vmem %s4, %s726
        %p728 = scmp.lt.s32.totalorder %s35, 1
        %s729 = scalar_select %p728, %s35, 1
        %s730 = scalar_lea.vmem %s5, %s729
        %p731 = scmp.lt.s32.totalorder %s35, 1
        %s732 = scalar_select %p731, %s35, 1
        %s733 = scalar_lea.vmem %s6, %s732
        %p734 = scmp.lt.s32.totalorder %s35, 1
        %s735 = scalar_select %p734, %s35, 1
        %s736 = scalar_lea.vmem %s7, %s735
        %p737 = scmp.lt.s32.totalorder %s35, 1
        %s738 = scalar_select %p737, %s35, 1
        %s739 = smul.addr %s738, 4
        %s740 = smul.addr %s739, 4
        %s741 = scalar_lea.vmem %s8, %s740
        %p742 = scmp.lt.s32.totalorder %s35, 1
        %s743 = scalar_select %p742, %s35, 1
        %s744 = scalar_lea.vmem %s9, %s743
        %p745 = scmp.lt.s32.totalorder %s35, 1
        %s746 = scalar_select %p745, %s35, 1
        %s747 = smul.addr %s746, 8
        %s748 = smul.addr %s747, 4
        %s749 = scalar_lea.vmem %s10, %s748
        %p750 = scmp.lt.s32.totalorder %s35, 1
        %s751 = scalar_select %p750, %s35, 1
        %s752 = scalar_lea.vmem %s11, %s751
        %p753 = scmp.lt.s32.totalorder %s35, 1
        %s754 = scalar_select %p753, %s35, 1
        %s755 = scalar_lea.vmem %s12, %s754
        %p756 = scmp.lt.s32.totalorder %s35, 1
        %s757 = scalar_select %p756, %s35, 1
        %s758 = scalar_lea.vmem %s13, %s757
        %s759 = smul.u32 2, %s34
        %p761 = scmp.eq.s32.totalorder %s35, 0
        // Predicated region
        $region97: #{tpu_custom_call.1} parent=83 // pred_check
          %p762 = pneg %p761
        $region98: #{tpu_custom_call.1} parent=83 // pred_check_branch
          %764 = sbr.rel (%p762) target = $region100
        $region99: #{tpu_custom_call.1} parent=83 // pred_region
          %v765 = vld [vmem:[#allocation3] sm:$0xf]
          %v766 = vld [vmem:[#allocation3 + $0x4] sm:$0xf]
          %vm767 = vcmask 257024
          %768 = vst.msk [vmem:[#allocation2] sm:$0xf] %vm767, %v765
          %769 = vst.msk [vmem:[#allocation2 + $0x4] sm:$0xf] %vm767, %v766
        $region100: #{tpu_custom_call.1} parent=83 // pred_fallthru
          _
        %v770 = vld [vmem:[#allocation2] sm:$0xf]
        %v771 = vld [vmem:[#allocation2 + $0x4] sm:$0xf]
        %v772 = vunpack.c.l.bf16 %v770
        %v773 = vunpack.c.l.bf16 %v771
        %v774 = vld [vmem:[#allocation6] sm:$0x1]
        %v775 = vld [vmem:[#allocation6 + $0x1] sm:$0x1]
        %v776 = vld [vmem:[%s719] sm:$0xf]
        %v777 = vld [vmem:[%s719 + $0x4] sm:$0xf]
        %v778 = vld [vmem:[%s719 + $0x8] sm:$0xf]
        %v779 = vld [vmem:[%s719 + $0xc] sm:$0xf]
        %v780 = vld [vmem:[%s722] sm:$0x1]
        %v782 = vlaneseq
        %v783 = vshrl.u32 %v782, 7
        %v784 = vsub.s32 0, %v783
        %v785 = vrot.slane %v780, %v784
        %v789 = vunpack.c.l.b16 %v770
        %v790 = vunpack.c.l.b16 %v771
        %v791 = vpack.c.b16 %v790, %v789
        %v796 = vunpack.c.l.b16 %v776
        %v797 = vunpack.c.l.b16 %v777
        %v798 = vunpack.c.l.b16 %v778
        %v799 = vunpack.c.l.b16 %v779
        %v800 = vpack.c.b16 %v797, %v796
        %v801 = vpack.c.b16 %v799, %v798
        %vm804 = vcmask 261120
        %v806 = vsel %vm804, %v791, 0
        %808 = vmatprep.subr.bf16.mxu0 0
        %809 = vmatpush1.bf16.msra.mxu0 0
        %810 = vmatprep.subr.bf16.mxu0 0
        %811 = vmatpush1.bf16.msra.mxu0 0
        %812 = vmatprep.subr.bf16.mxu0 0
        %813 = vmatpush1.bf16.msra.mxu0 0
        %814 = vmatprep.subr.bf16.mxu0 0
        %815 = vmatpush1.bf16.msra.mxu0 0
        %816 = vmatprep.subr.bf16.mxu0 0
        %817 = vmatpush1.bf16.msra.mxu0 0
        %818 = vmatprep.subr.bf16.mxu0 0
        %819 = vmatpush1.bf16.msra.mxu0 0
        %820 = vmatprep.subr.bf16.mxu0 0
        %821 = vmatpush1.bf16.msra.mxu0 %v801
        %822 = vmatprep.subr.bf16.mxu0 0
        %823 = vmatpush1.bf16.msra.mxu0 %v800
        %824 = vmatprep.subr.bf16.mxu0 0
        %825 = vmatpush2.bf16.msra.mxu0 0
        %826 = vmatprep.subr.bf16.mxu0 0
        %827 = vmatpush2.bf16.msra.mxu0 0
        %828 = vmatprep.subr.bf16.mxu0 0
        %829 = vmatpush2.bf16.msra.mxu0 0
        %830 = vmatprep.subr.bf16.mxu0 0
        %831 = vmatpush2.bf16.msra.mxu0 0
        %832 = vmatprep.subr.bf16.mxu0 0
        %833 = vmatpush2.bf16.msra.mxu0 0
        %834 = vmatprep.subr.bf16.mxu0 0
        %835 = vmatpush2.bf16.msra.mxu0 0
        %836 = vmatprep.subr.bf16.mxu0 0
        %837 = vmatpush2.bf16.msra.mxu0 0
        %838 = vmatprep.subr.bf16.mxu0 0
        %839 = vmatpush2.bf16.msra.mxu0 0
        %840 = vmatprep.mubr.bf16.mxu0 0
        %841 = vmatmul.mubr.bf16.gmra.mxu0 %v806
        %v842 = vpop.f32.mrf.mxu0
        %v843 = vadd.f32 %v785, %v842
        %v844 = vpop.f32.mrf.mxu0
        %v845 = vpop.f32.mrf.mxu0
        %v846 = vadd.f32 %v785, %v845
        %v847 = vpop.f32.mrf.mxu0
        %848 = vdwg.mxu0
        %v849 = vmul.f32 %v843, 0.25
        %v850 = vmul.f32 %v846, 0.25
        %v851 = vpack.c.bf16 %v850, %v849
        %v853 = vunpack.c.l.b16 %v851
        %v854 = vunpack.c.h.b16 %v851
        %v855 = vpack.c.b16 %v853, %v853
        %v856 = vpack.c.b16 %v854, %v854
        %v857 = vpack.c.bf16 %v846, %v843
        %v859 = vunpack.c.l.b16 %v857
        %v860 = vunpack.c.h.b16 %v857
        %p861 = scmp.lt.s32.totalorder %s35, 1
        // Predicated region
        $region101: #{tpu_custom_call.1} parent=83 // pred_check
          %p862 = pneg %p861
        $region102: #{tpu_custom_call.1} parent=83 // pred_check_branch
          %864 = sbr.rel (%p862) target = $region104
        $region103: #{tpu_custom_call.1} parent=83 // pred_region
          %v867 = vlaneseq
          %v868 = vshrl.u32 %v867, 7
          %v869 = vsub.s32 0, %v868
          %v870 = vrot.slane %v774, %v869
          %v871 = vlaneseq
          %v872 = vshrl.u32 %v871, 7
          %v873 = vsub.s32 0, %v872
          %v874 = vrot.slane %v775, %v873
          %v877 = vpack.c.b16 %v859, %v859
          %878 = vrot.lane.b32.xlu0 %v877, 96
          %v879 = vpop.permute.xlu0 %878
          %vm880 = vcmask 130048
          %v882 = vsel %vm880, %v855, 0
          %v885 = vsel %vm880, %v879, 0
          %887 = vmatprep.subr.bf16.mxu0 0
          %888 = vmatpush1.bf16.xpose.msra.mxu0 0
          %889 = vmatprep.subr.bf16.mxu0 0
          %890 = vmatpush1.bf16.xpose.msra.mxu0 0
          %891 = vmatprep.subr.bf16.mxu0 0
          %892 = vmatpush1.bf16.xpose.msra.mxu0 0
          %893 = vmatprep.subr.bf16.mxu0 0
          %894 = vmatpush1.bf16.xpose.msra.mxu0 0
          %895 = vmatprep.subr.bf16.mxu0 0
          %896 = vmatpush1.bf16.xpose.msra.mxu0 0
          %897 = vmatprep.subr.bf16.mxu0 0
          %898 = vmatpush1.bf16.xpose.msra.mxu0 0
          %899 = vmatprep.subr.bf16.mxu0 0
          %900 = vmatpush1.bf16.xpose.msra.mxu0 0
          %901 = vmatprep.subr.bf16.mxu0 0
          %902 = vmatpush1.bf16.xpose.msra.mxu0 %v885
          %903 = vmatprep.subr.bf16.mxu0 0
          %904 = vmatpush2.bf16.xpose.msra.mxu0 0
          %905 = vmatprep.subr.bf16.mxu0 0
          %906 = vmatpush2.bf16.xpose.msra.mxu0 0
          %907 = vmatprep.subr.bf16.mxu0 0
          %908 = vmatpush2.bf16.xpose.msra.mxu0 0
          %909 = vmatprep.subr.bf16.mxu0 0
          %910 = vmatpush2.bf16.xpose.msra.mxu0 0
          %911 = vmatprep.subr.bf16.mxu0 0
          %912 = vmatpush2.bf16.xpose.msra.mxu0 0
          %913 = vmatprep.subr.bf16.mxu0 0
          %914 = vmatpush2.bf16.xpose.msra.mxu0 0
          %915 = vmatprep.subr.bf16.mxu0 0
          %916 = vmatpush2.bf16.xpose.msra.mxu0 0
          %917 = vmatprep.subr.bf16.mxu0 0
          %918 = vmatpush2.bf16.xpose.msra.mxu0 0
          %919 = vmatprep.mubr.bf16.mxu0 0
          %920 = vmatmul.mubr.bf16.gmra.mxu0 %v882
          %v921 = vpop.f32.mrf.mxu0
          %v922 = vadd.f32 %v870, %v921
          %v923 = vpop.f32.mrf.mxu0
          %v924 = vpop.f32.mrf.mxu0
          %v925 = vpop.f32.mrf.mxu0
          %926 = vdwg.mxu0
          %v927 = vpack.c.b16 %v860, %v860
          %928 = vrot.lane.b32.xlu0 %v927, 96
          %v929 = vpop.permute.xlu0 %928
          %v931 = vsel %vm880, %v856, 0
          %v934 = vsel %vm880, %v929, 0
          %936 = vmatprep.subr.bf16.mxu0 0
          %937 = vmatpush1.bf16.xpose.msra.mxu0 0
          %938 = vmatprep.subr.bf16.mxu0 0
          %939 = vmatpush1.bf16.xpose.msra.mxu0 0
          %940 = vmatprep.subr.bf16.mxu0 0
          %941 = vmatpush1.bf16.xpose.msra.mxu0 0
          %942 = vmatprep.subr.bf16.mxu0 0
          %943 = vmatpush1.bf16.xpose.msra.mxu0 0
          %944 = vmatprep.subr.bf16.mxu0 0
          %945 = vmatpush1.bf16.xpose.msra.mxu0 0
          %946 = vmatprep.subr.bf16.mxu0 0
          %947 = vmatpush1.bf16.xpose.msra.mxu0 0
          %948 = vmatprep.subr.bf16.mxu0 0
          %949 = vmatpush1.bf16.xpose.msra.mxu0 0
          %950 = vmatprep.subr.bf16.mxu0 0
          %951 = vmatpush1.bf16.xpose.msra.mxu0 %v934
          %952 = vmatprep.subr.bf16.mxu0 0
          %953 = vmatpush2.bf16.xpose.msra.mxu0 0
          %954 = vmatprep.subr.bf16.mxu0 0
          %955 = vmatpush2.bf16.xpose.msra.mxu0 0
          %956 = vmatprep.subr.bf16.mxu0 0
          %957 = vmatpush2.bf16.xpose.msra.mxu0 0
          %958 = vmatprep.subr.bf16.mxu0 0
          %959 = vmatpush2.bf16.xpose.msra.mxu0 0
          %960 = vmatprep.subr.bf16.mxu0 0
          %961 = vmatpush2.bf16.xpose.msra.mxu0 0
          %962 = vmatprep.subr.bf16.mxu0 0
          %963 = vmatpush2.bf16.xpose.msra.mxu0 0
          %964 = vmatprep.subr.bf16.mxu0 0
          %965 = vmatpush2.bf16.xpose.msra.mxu0 0
          %966 = vmatprep.subr.bf16.mxu0 0
          %967 = vmatpush2.bf16.xpose.msra.mxu0 0
          %968 = vmatprep.mubr.bf16.mxu0 0
          %969 = vmatmul.mubr.bf16.gmra.mxu0 %v931
          %v970 = vpop.f32.mrf.mxu0
          %v971 = vadd.f32 %v874, %v970
          %v972 = vpop.f32.mrf.mxu0
          %v973 = vpop.f32.mrf.mxu0
          %v974 = vpop.f32.mrf.mxu0
          %975 = vdwg.mxu0
          %vm976 = vcmask 64512
          %v977 = vsel %vm976, %v922, -inf
          %978 = vmax.xlane.f32.xlu0 %v977
          %v979 = vpop.xlane.xlu0 %978
          %v980 = vsel %vm976, %v971, -inf
          %981 = vmax.xlane.f32.xlu0 %v980
          %v982 = vpop.xlane.xlu0 %981
          %v983 = vsub.f32 %v922, %v979
          %v984 = vsub.f32 %v971, %v982
          %v985 = vmul.f32 %v983, 1.442695
          %v986 = vpow.pop %v985
          %v987 = vmul.f32 %v984, 1.442695
          %v988 = vpow.pop %v987
          %v989 = vsel %vm976, %v986, 0.0
          %990 = vadd.xlane.f32.xlu0 %v989
          %v991 = vpop.xlane.xlu0 %990
          %v992 = vsel %vm976, %v988, 0.0
          %993 = vadd.xlane.f32.xlu0 %v992
          %v994 = vpop.xlane.xlu0 %993
          %v995 = vrcp.pop %v991
          %v996 = vrcp.pop %v994
          %v997 = vmul.f32 %v986, %v995
          %v998 = vmul.f32 %v988, %v996
          %v999 = vpack.c.bf16 %v997, %v997
          %v1000 = vpack.c.bf16 %v998, %v998
          %1001 = vrot.lane.b32.xlu0 %v877, 64
          %v1002 = vpop.permute.xlu0 %1001
          %v1004 = vsel %vm976, %v999, 0
          %vm1006 = vcmask 1043456
          %v1008 = vsel %vm1006, %v1002, 0
          %1010 = vmatprep.subr.bf16.mxu0 0
          %1011 = vmatpush1.bf16.msra.mxu0 0
          %1012 = vmatprep.subr.bf16.mxu0 0
          %1013 = vmatpush1.bf16.msra.mxu0 0
          %1014 = vmatprep.subr.bf16.mxu0 0
          %1015 = vmatpush1.bf16.msra.mxu0 0
          %1016 = vmatprep.subr.bf16.mxu0 0
          %1017 = vmatpush1.bf16.msra.mxu0 0
          %1018 = vmatprep.subr.bf16.mxu0 0
          %1019 = vmatpush1.bf16.msra.mxu0 0
          %1020 = vmatprep.subr.bf16.mxu0 0
          %1021 = vmatpush1.bf16.msra.mxu0 0
          %1022 = vmatprep.subr.bf16.mxu0 0
          %1023 = vmatpush1.bf16.msra.mxu0 0
          %1024 = vmatprep.subr.bf16.mxu0 0
          %1025 = vmatpush1.bf16.msra.mxu0 %v1008
          %1026 = vmatprep.subr.bf16.mxu0 0
          %1027 = vmatpush2.bf16.msra.mxu0 0
          %1028 = vmatprep.subr.bf16.mxu0 0
          %1029 = vmatpush2.bf16.msra.mxu0 0
          %1030 = vmatprep.subr.bf16.mxu0 0
          %1031 = vmatpush2.bf16.msra.mxu0 0
          %1032 = vmatprep.subr.bf16.mxu0 0
          %1033 = vmatpush2.bf16.msra.mxu0 0
          %1034 = vmatprep.subr.bf16.mxu0 0
          %1035 = vmatpush2.bf16.msra.mxu0 0
          %1036 = vmatprep.subr.bf16.mxu0 0
          %1037 = vmatpush2.bf16.msra.mxu0 0
          %1038 = vmatprep.subr.bf16.mxu0 0
          %1039 = vmatpush2.bf16.msra.mxu0 0
          %1040 = vmatprep.subr.bf16.mxu0 0
          %1041 = vmatpush2.bf16.msra.mxu0 0
          %1042 = vmatprep.mubr.bf16.mxu0 0
          %1043 = vmatmul.mubr.bf16.gmra.mxu0 %v1004
          %v1044 = vpop.f32.mrf.mxu0
          %v1045 = vadd.f32 0.0, %v1044
          %v1046 = vpop.f32.mrf.mxu0
          %v1047 = vpop.f32.mrf.mxu0
          %v1048 = vpop.f32.mrf.mxu0
          %1049 = vdwg.mxu0
          %1050 = vrot.lane.b32.xlu0 %v927, 64
          %v1051 = vpop.permute.xlu0 %1050
          %v1053 = vsel %vm976, %v1000, 0
          %v1056 = vsel %vm1006, %v1051, 0
          %1058 = vmatprep.subr.bf16.mxu0 0
          %1059 = vmatpush1.bf16.msra.mxu0 0
          %1060 = vmatprep.subr.bf16.mxu0 0
          %1061 = vmatpush1.bf16.msra.mxu0 0
          %1062 = vmatprep.subr.bf16.mxu0 0
          %1063 = vmatpush1.bf16.msra.mxu0 0
          %1064 = vmatprep.subr.bf16.mxu0 0
          %1065 = vmatpush1.bf16.msra.mxu0 0
          %1066 = vmatprep.subr.bf16.mxu0 0
          %1067 = vmatpush1.bf16.msra.mxu0 0
          %1068 = vmatprep.subr.bf16.mxu0 0
          %1069 = vmatpush1.bf16.msra.mxu0 0
          %1070 = vmatprep.subr.bf16.mxu0 0
          %1071 = vmatpush1.bf16.msra.mxu0 0
          %1072 = vmatprep.subr.bf16.mxu0 0
          %1073 = vmatpush1.bf16.msra.mxu0 %v1056
          %1074 = vmatprep.subr.bf16.mxu0 0
          %1075 = vmatpush2.bf16.msra.mxu0 0
          %1076 = vmatprep.subr.bf16.mxu0 0
          %1077 = vmatpush2.bf16.msra.mxu0 0
          %1078 = vmatprep.subr.bf16.mxu0 0
          %1079 = vmatpush2.bf16.msra.mxu0 0
          %1080 = vmatprep.subr.bf16.mxu0 0
          %1081 = vmatpush2.bf16.msra.mxu0 0
          %1082 = vmatprep.subr.bf16.mxu0 0
          %1083 = vmatpush2.bf16.msra.mxu0 0
          %1084 = vmatprep.subr.bf16.mxu0 0
          %1085 = vmatpush2.bf16.msra.mxu0 0
          %1086 = vmatprep.subr.bf16.mxu0 0
          %1087 = vmatpush2.bf16.msra.mxu0 0
          %1088 = vmatprep.subr.bf16.mxu0 0
          %1089 = vmatpush2.bf16.msra.mxu0 0
          %1090 = vmatprep.mubr.bf16.mxu0 0
          %1091 = vmatmul.mubr.bf16.gmra.mxu0 %v1053
          %v1092 = vpop.f32.mrf.mxu0
          %v1093 = vadd.f32 0.0, %v1092
          %v1094 = vpop.f32.mrf.mxu0
          %v1095 = vpop.f32.mrf.mxu0
          %v1096 = vpop.f32.mrf.mxu0
          %1097 = vdwg.mxu0
          %1098 = vrot.lane.b32.xlu0 %v855, 112
          %v1099 = vpop.permute.xlu0 %1098
          %1100 = vrot.lane.b32.xlu0 %v877, 80
          %v1101 = vpop.permute.xlu0 %1100
          %v1103 = vsel %vm880, %v1099, 0
          %v1106 = vsel %vm880, %v1101, 0
          %1108 = vmatprep.subr.bf16.mxu0 0
          %1109 = vmatpush1.bf16.xpose.msra.mxu0 0
          %1110 = vmatprep.subr.bf16.mxu0 0
          %1111 = vmatpush1.bf16.xpose.msra.mxu0 0
          %1112 = vmatprep.subr.bf16.mxu0 0
          %1113 = vmatpush1.bf16.xpose.msra.mxu0 0
          %1114 = vmatprep.subr.bf16.mxu0 0
          %1115 = vmatpush1.bf16.xpose.msra.mxu0 0
          %1116 = vmatprep.subr.bf16.mxu0 0
          %1117 = vmatpush1.bf16.xpose.msra.mxu0 0
          %1118 = vmatprep.subr.bf16.mxu0 0
          %1119 = vmatpush1.bf16.xpose.msra.mxu0 0
          %1120 = vmatprep.subr.bf16.mxu0 0
          %1121 = vmatpush1.bf16.xpose.msra.mxu0 0
          %1122 = vmatprep.subr.bf16.mxu0 0
          %1123 = vmatpush1.bf16.xpose.msra.mxu0 %v1106
          %1124 = vmatprep.subr.bf16.mxu0 0
          %1125 = vmatpush2.bf16.xpose.msra.mxu0 0
          %1126 = vmatprep.subr.bf16.mxu0 0
          %1127 = vmatpush2.bf16.xpose.msra.mxu0 0
          %1128 = vmatprep.subr.bf16.mxu0 0
          %1129 = vmatpush2.bf16.xpose.msra.mxu0 0
          %1130 = vmatprep.subr.bf16.mxu0 0
          %1131 = vmatpush2.bf16.xpose.msra.mxu0 0
          %1132 = vmatprep.subr.bf16.mxu0 0
          %1133 = vmatpush2.bf16.xpose.msra.mxu0 0
          %1134 = vmatprep.subr.bf16.mxu0 0
          %1135 = vmatpush2.bf16.xpose.msra.mxu0 0
          %1136 = vmatprep.subr.bf16.mxu0 0
          %1137 = vmatpush2.bf16.xpose.msra.mxu0 0
          %1138 = vmatprep.subr.bf16.mxu0 0
          %1139 = vmatpush2.bf16.xpose.msra.mxu0 0
          %1140 = vmatprep.mubr.bf16.mxu0 0
          %1141 = vmatmul.mubr.bf16.gmra.mxu0 %v1103
          %v1142 = vpop.f32.mrf.mxu0
          %v1143 = vadd.f32 %v870, %v1142
          %v1144 = vpop.f32.mrf.mxu0
          %v1145 = vpop.f32.mrf.mxu0
          %v1146 = vpop.f32.mrf.mxu0
          %1147 = vdwg.mxu0
          %1148 = vrot.lane.b32.xlu0 %v856, 112
          %v1149 = vpop.permute.xlu0 %1148
          %1150 = vrot.lane.b32.xlu0 %v927, 80
          %v1151 = vpop.permute.xlu0 %1150
          %v1153 = vsel %vm880, %v1149, 0
          %v1156 = vsel %vm880, %v1151, 0
          %1158 = vmatprep.subr.bf16.mxu0 0
          %1159 = vmatpush1.bf16.xpose.msra.mxu0 0
          %1160 = vmatprep.subr.bf16.mxu0 0
          %1161 = vmatpush1.bf16.xpose.msra.mxu0 0
          %1162 = vmatprep.subr.bf16.mxu0 0
          %1163 = vmatpush1.bf16.xpose.msra.mxu0 0
          %1164 = vmatprep.subr.bf16.mxu0 0
          %1165 = vmatpush1.bf16.xpose.msra.mxu0 0
          %1166 = vmatprep.subr.bf16.mxu0 0
          %1167 = vmatpush1.bf16.xpose.msra.mxu0 0
          %1168 = vmatprep.subr.bf16.mxu0 0
          %1169 = vmatpush1.bf16.xpose.msra.mxu0 0
          %1170 = vmatprep.subr.bf16.mxu0 0
          %1171 = vmatpush1.bf16.xpose.msra.mxu0 0
          %1172 = vmatprep.subr.bf16.mxu0 0
          %1173 = vmatpush1.bf16.xpose.msra.mxu0 %v1156
          %1174 = vmatprep.subr.bf16.mxu0 0
          %1175 = vmatpush2.bf16.xpose.msra.mxu0 0
          %1176 = vmatprep.subr.bf16.mxu0 0
          %1177 = vmatpush2.bf16.xpose.msra.mxu0 0
          %1178 = vmatprep.subr.bf16.mxu0 0
          %1179 = vmatpush2.bf16.xpose.msra.mxu0 0
          %1180 = vmatprep.subr.bf16.mxu0 0
          %1181 = vmatpush2.bf16.xpose.msra.mxu0 0
          %1182 = vmatprep.subr.bf16.mxu0 0
          %1183 = vmatpush2.bf16.xpose.msra.mxu0 0
          %1184 = vmatprep.subr.bf16.mxu0 0
          %1185 = vmatpush2.bf16.xpose.msra.mxu0 0
          %1186 = vmatprep.subr.bf16.mxu0 0
          %1187 = vmatpush2.bf16.xpose.msra.mxu0 0
          %1188 = vmatprep.subr.bf16.mxu0 0
          %1189 = vmatpush2.bf16.xpose.msra.mxu0 0
          %1190 = vmatprep.mubr.bf16.mxu0 0
          %1191 = vmatmul.mubr.bf16.gmra.mxu0 %v1153
          %v1192 = vpop.f32.mrf.mxu0
          %v1193 = vadd.f32 %v874, %v1192
          %v1194 = vpop.f32.mrf.mxu0
          %v1195 = vpop.f32.mrf.mxu0
          %v1196 = vpop.f32.mrf.mxu0
          %1197 = vdwg.mxu0
          %v1198 = vsel %vm976, %v1143, -inf
          %1199 = vmax.xlane.f32.xlu0 %v1198
          %v1200 = vpop.xlane.xlu0 %1199
          %v1201 = vsel %vm976, %v1193, -inf
          %1202 = vmax.xlane.f32.xlu0 %v1201
          %v1203 = vpop.xlane.xlu0 %1202
          %v1204 = vsub.f32 %v1143, %v1200
          %v1205 = vsub.f32 %v1193, %v1203
          %v1206 = vmul.f32 %v1204, 1.442695
          %v1207 = vpow.pop %v1206
          %v1208 = vmul.f32 %v1205, 1.442695
          %v1209 = vpow.pop %v1208
          %v1210 = vsel %vm976, %v1207, 0.0
          %1211 = vadd.xlane.f32.xlu0 %v1210
          %v1212 = vpop.xlane.xlu0 %1211
          %v1213 = vsel %vm976, %v1209, 0.0
          %1214 = vadd.xlane.f32.xlu0 %v1213
          %v1215 = vpop.xlane.xlu0 %1214
          %v1216 = vrcp.pop %v1212
          %v1217 = vrcp.pop %v1215
          %v1218 = vmul.f32 %v1207, %v1216
          %v1219 = vmul.f32 %v1209, %v1217
          %v1220 = vpack.c.bf16 %v1218, %v1218
          %v1221 = vpack.c.bf16 %v1219, %v1219
          %1222 = vrot.lane.b32.xlu0 %v877, 48
          %v1223 = vpop.permute.xlu0 %1222
          %v1225 = vsel %vm976, %v1220, 0
          %v1228 = vsel %vm1006, %v1223, 0
          %1230 = vmatprep.subr.bf16.mxu0 0
          %1231 = vmatpush1.bf16.msra.mxu0 0
          %1232 = vmatprep.subr.bf16.mxu0 0
          %1233 = vmatpush1.bf16.msra.mxu0 0
          %1234 = vmatprep.subr.bf16.mxu0 0
          %1235 = vmatpush1.bf16.msra.mxu0 0
          %1236 = vmatprep.subr.bf16.mxu0 0
          %1237 = vmatpush1.bf16.msra.mxu0 0
          %1238 = vmatprep.subr.bf16.mxu0 0
          %1239 = vmatpush1.bf16.msra.mxu0 0
          %1240 = vmatprep.subr.bf16.mxu0 0
          %1241 = vmatpush1.bf16.msra.mxu0 0
          %1242 = vmatprep.subr.bf16.mxu0 0
          %1243 = vmatpush1.bf16.msra.mxu0 0
          %1244 = vmatprep.subr.bf16.mxu0 0
          %1245 = vmatpush1.bf16.msra.mxu0 %v1228
          %1246 = vmatprep.subr.bf16.mxu0 0
          %1247 = vmatpush2.bf16.msra.mxu0 0
          %1248 = vmatprep.subr.bf16.mxu0 0
          %1249 = vmatpush2.bf16.msra.mxu0 0
          %1250 = vmatprep.subr.bf16.mxu0 0
          %1251 = vmatpush2.bf16.msra.mxu0 0
          %1252 = vmatprep.subr.bf16.mxu0 0
          %1253 = vmatpush2.bf16.msra.mxu0 0
          %1254 = vmatprep.subr.bf16.mxu0 0
          %1255 = vmatpush2.bf16.msra.mxu0 0
          %1256 = vmatprep.subr.bf16.mxu0 0
          %1257 = vmatpush2.bf16.msra.mxu0 0
          %1258 = vmatprep.subr.bf16.mxu0 0
          %1259 = vmatpush2.bf16.msra.mxu0 0
          %1260 = vmatprep.subr.bf16.mxu0 0
          %1261 = vmatpush2.bf16.msra.mxu0 0
          %1262 = vmatprep.mubr.bf16.mxu0 0
          %1263 = vmatmul.mubr.bf16.gmra.mxu0 %v1225
          %v1264 = vpop.f32.mrf.mxu0
          %v1265 = vadd.f32 0.0, %v1264
          %v1266 = vpop.f32.mrf.mxu0
          %v1267 = vpop.f32.mrf.mxu0
          %v1268 = vpop.f32.mrf.mxu0
          %1269 = vdwg.mxu0
          %1270 = vrot.lane.b32.xlu0 %v927, 48
          %v1271 = vpop.permute.xlu0 %1270
          %v1273 = vsel %vm976, %v1221, 0
          %v1276 = vsel %vm1006, %v1271, 0
          %1278 = vmatprep.subr.bf16.mxu0 0
          %1279 = vmatpush1.bf16.msra.mxu0 0
          %1280 = vmatprep.subr.bf16.mxu0 0
          %1281 = vmatpush1.bf16.msra.mxu0 0
          %1282 = vmatprep.subr.bf16.mxu0 0
          %1283 = vmatpush1.bf16.msra.mxu0 0
          %1284 = vmatprep.subr.bf16.mxu0 0
          %1285 = vmatpush1.bf16.msra.mxu0 0
          %1286 = vmatprep.subr.bf16.mxu0 0
          %1287 = vmatpush1.bf16.msra.mxu0 0
          %1288 = vmatprep.subr.bf16.mxu0 0
          %1289 = vmatpush1.bf16.msra.mxu0 0
          %1290 = vmatprep.subr.bf16.mxu0 0
          %1291 = vmatpush1.bf16.msra.mxu0 0
          %1292 = vmatprep.subr.bf16.mxu0 0
          %1293 = vmatpush1.bf16.msra.mxu0 %v1276
          %1294 = vmatprep.subr.bf16.mxu0 0
          %1295 = vmatpush2.bf16.msra.mxu0 0
          %1296 = vmatprep.subr.bf16.mxu0 0
          %1297 = vmatpush2.bf16.msra.mxu0 0
          %1298 = vmatprep.subr.bf16.mxu0 0
          %1299 = vmatpush2.bf16.msra.mxu0 0
          %1300 = vmatprep.subr.bf16.mxu0 0
          %1301 = vmatpush2.bf16.msra.mxu0 0
          %1302 = vmatprep.subr.bf16.mxu0 0
          %1303 = vmatpush2.bf16.msra.mxu0 0
          %1304 = vmatprep.subr.bf16.mxu0 0
          %1305 = vmatpush2.bf16.msra.mxu0 0
          %1306 = vmatprep.subr.bf16.mxu0 0
          %1307 = vmatpush2.bf16.msra.mxu0 0
          %1308 = vmatprep.subr.bf16.mxu0 0
          %1309 = vmatpush2.bf16.msra.mxu0 0
          %1310 = vmatprep.mubr.bf16.mxu0 0
          %1311 = vmatmul.mubr.bf16.gmra.mxu0 %v1273
          %v1312 = vpop.f32.mrf.mxu0
          %v1313 = vadd.f32 0.0, %v1312
          %v1314 = vpop.f32.mrf.mxu0
          %v1315 = vpop.f32.mrf.mxu0
          %v1316 = vpop.f32.mrf.mxu0
          %1317 = vdwg.mxu0
          %1320 = vrot.lane.b32.xlu0 %v1265, 16
          %v1321 = vpop.permute.xlu0 %1320
          %1322 = vrot.lane.b32.xlu0 %v1313, 16
          %v1323 = vpop.permute.xlu0 %1322
          %v1326 = vsel %vm880, %v1045, %v1321
          %v1327 = vsel %vm880, %v1093, %v1323
          %v1328 = vpack.c.bf16 %v1327, %v1326
          %v1329 = vld [vmem:[%s727] sm:$0xf]
          %v1330 = vld [vmem:[%s727 + $0x4] sm:$0xf]
          %v1331 = vld [vmem:[%s727 + $0x8] sm:$0xf]
          %v1332 = vld [vmem:[%s727 + $0xc] sm:$0xf]
          %v1333 = vld [vmem:[%s730] sm:$0x1]
          %v1335 = vlaneseq
          %v1336 = vshrl.u32 %v1335, 7
          %v1337 = vsub.s32 0, %v1336
          %v1338 = vrot.slane %v1333, %v1337
          %v1344 = vunpack.c.l.b16 %v1329
          %v1345 = vunpack.c.l.b16 %v1330
          %v1346 = vunpack.c.l.b16 %v1331
          %v1347 = vunpack.c.l.b16 %v1332
          %v1348 = vpack.c.b16 %v1345, %v1344
          %v1349 = vpack.c.b16 %v1347, %v1346
          %v1353 = vsel %vm804, %v1328, 0
          %1355 = vmatprep.subr.bf16.mxu0 0
          %1356 = vmatpush1.bf16.msra.mxu0 0
          %1357 = vmatprep.subr.bf16.mxu0 0
          %1358 = vmatpush1.bf16.msra.mxu0 0
          %1359 = vmatprep.subr.bf16.mxu0 0
          %1360 = vmatpush1.bf16.msra.mxu0 0
          %1361 = vmatprep.subr.bf16.mxu0 0
          %1362 = vmatpush1.bf16.msra.mxu0 0
          %1363 = vmatprep.subr.bf16.mxu0 0
          %1364 = vmatpush1.bf16.msra.mxu0 0
          %1365 = vmatprep.subr.bf16.mxu0 0
          %1366 = vmatpush1.bf16.msra.mxu0 0
          %1367 = vmatprep.subr.bf16.mxu0 0
          %1368 = vmatpush1.bf16.msra.mxu0 %v1349
          %1369 = vmatprep.subr.bf16.mxu0 0
          %1370 = vmatpush1.bf16.msra.mxu0 %v1348
          %1371 = vmatprep.subr.bf16.mxu0 0
          %1372 = vmatpush2.bf16.msra.mxu0 0
          %1373 = vmatprep.subr.bf16.mxu0 0
          %1374 = vmatpush2.bf16.msra.mxu0 0
          %1375 = vmatprep.subr.bf16.mxu0 0
          %1376 = vmatpush2.bf16.msra.mxu0 0
          %1377 = vmatprep.subr.bf16.mxu0 0
          %1378 = vmatpush2.bf16.msra.mxu0 0
          %1379 = vmatprep.subr.bf16.mxu0 0
          %1380 = vmatpush2.bf16.msra.mxu0 0
          %1381 = vmatprep.subr.bf16.mxu0 0
          %1382 = vmatpush2.bf16.msra.mxu0 0
          %1383 = vmatprep.subr.bf16.mxu0 0
          %1384 = vmatpush2.bf16.msra.mxu0 0
          %1385 = vmatprep.subr.bf16.mxu0 0
          %1386 = vmatpush2.bf16.msra.mxu0 0
          %1387 = vmatprep.mubr.bf16.mxu0 0
          %1388 = vmatmul.mubr.bf16.gmra.mxu0 %v1353
          %v1389 = vpop.f32.mrf.mxu0
          %v1390 = vadd.f32 %v1338, %v1389
          %v1391 = vpop.f32.mrf.mxu0
          %v1392 = vpop.f32.mrf.mxu0
          %v1393 = vadd.f32 %v1338, %v1392
          %v1394 = vpop.f32.mrf.mxu0
          %1395 = vdwg.mxu0
          %v1396 = vadd.f32 %v772, %v1390
          %v1397 = vadd.f32 %v773, %v1393
          %v1398 = vld [vmem:[%s733] sm:$0x1]
          %v1399 = vld [vmem:[%s736] sm:$0x1]
          %v1400 = vsel %vm804, %v1396, 0.0
          %1401 = vadd.xlane.f32.xlu0 %v1400
          %v1402 = vpop.xlane.xlu0 %1401
          %v1403 = vsel %vm804, %v1397, 0.0
          %1404 = vadd.xlane.f32.xlu0 %v1403
          %v1405 = vpop.xlane.xlu0 %1404
          %v1406 = vrcp.pop 32.0
          %v1407 = vmul.f32 %v1402, %v1406
          %v1408 = vmul.f32 %v1405, %v1406
          %v1409 = vsub.f32 %v1396, %v1407
          %v1410 = vsub.f32 %v1397, %v1408
          %v1411 = vmul.f32 %v1409, %v1409
          %v1412 = vmul.f32 %v1410, %v1410
          %v1413 = vsel %vm804, %v1411, 0.0
          %1414 = vadd.xlane.f32.xlu0 %v1413
          %v1415 = vpop.xlane.xlu0 %1414
          %v1416 = vsel %vm804, %v1412, 0.0
          %1417 = vadd.xlane.f32.xlu0 %v1416
          %v1418 = vpop.xlane.xlu0 %1417
          %v1419 = vmul.f32 %v1415, %v1406
          %v1420 = vmul.f32 %v1418, %v1406
          %v1421 = vadd.f32 %v1419, 1e-12
          %v1422 = vadd.f32 %v1420, 1e-12
          %v1423 = vrsqrt.pop %v1421
          %v1424 = vrsqrt.pop %v1422
          %v1425 = vmul.f32 %v1409, %v1423
          %v1426 = vmul.f32 %v1410, %v1424
          %v1428 = vlaneseq
          %v1429 = vshrl.u32 %v1428, 7
          %v1430 = vsub.s32 0, %v1429
          %v1431 = vrot.slane %v1398, %v1430
          %v1433 = vmul.f32 %v1425, %v1431
          %v1434 = vmul.f32 %v1426, %v1431
          %v1436 = vlaneseq
          %v1437 = vshrl.u32 %v1436, 7
          %v1438 = vsub.s32 0, %v1437
          %v1439 = vrot.slane %v1399, %v1438
          %v1441 = vadd.f32 %v1433, %v1439
          %v1442 = vadd.f32 %v1434, %v1439
          %v1443 = vpack.c.bf16 %v1442, %v1441
          %v1444 = vld [vmem:[%s741] sm:$0xf]
          %v1445 = vld [vmem:[%s741 + $0x4] sm:$0xf]
          %v1446 = vld [vmem:[%s741 + $0x8] sm:$0xf]
          %v1447 = vld [vmem:[%s741 + $0xc] sm:$0xf]
          %v1448 = vld [vmem:[%s744] sm:$0x1]
          %v1450 = vlaneseq
          %v1451 = vshrl.u32 %v1450, 7
          %v1452 = vsub.s32 0, %v1451
          %v1453 = vrot.slane %v1448, %v1452
          %v1459 = vunpack.c.l.b16 %v1444
          %v1460 = vunpack.c.l.b16 %v1445
          %v1461 = vunpack.c.l.b16 %v1446
          %v1462 = vunpack.c.l.b16 %v1447
          %v1463 = vpack.c.b16 %v1460, %v1459
          %v1464 = vpack.c.b16 %v1462, %v1461
          %v1468 = vsel %vm804, %v1443, 0
          %1470 = vmatprep.subr.bf16.mxu0 0
          %1471 = vmatpush1.bf16.msra.mxu0 0
          %1472 = vmatprep.subr.bf16.mxu0 0
          %1473 = vmatpush1.bf16.msra.mxu0 0
          %1474 = vmatprep.subr.bf16.mxu0 0
          %1475 = vmatpush1.bf16.msra.mxu0 0
          %1476 = vmatprep.subr.bf16.mxu0 0
          %1477 = vmatpush1.bf16.msra.mxu0 0
          %1478 = vmatprep.subr.bf16.mxu0 0
          %1479 = vmatpush1.bf16.msra.mxu0 0
          %1480 = vmatprep.subr.bf16.mxu0 0
          %1481 = vmatpush1.bf16.msra.mxu0 0
          %1482 = vmatprep.subr.bf16.mxu0 0
          %1483 = vmatpush1.bf16.msra.mxu0 %v1464
          %1484 = vmatprep.subr.bf16.mxu0 0
          %1485 = vmatpush1.bf16.msra.mxu0 %v1463
          %1486 = vmatprep.subr.bf16.mxu0 0
          %1487 = vmatpush2.bf16.msra.mxu0 0
          %1488 = vmatprep.subr.bf16.mxu0 0
          %1489 = vmatpush2.bf16.msra.mxu0 0
          %1490 = vmatprep.subr.bf16.mxu0 0
          %1491 = vmatpush2.bf16.msra.mxu0 0
          %1492 = vmatprep.subr.bf16.mxu0 0
          %1493 = vmatpush2.bf16.msra.mxu0 0
          %1494 = vmatprep.subr.bf16.mxu0 0
          %1495 = vmatpush2.bf16.msra.mxu0 0
          %1496 = vmatprep.subr.bf16.mxu0 0
          %1497 = vmatpush2.bf16.msra.mxu0 0
          %1498 = vmatprep.subr.bf16.mxu0 0
          %1499 = vmatpush2.bf16.msra.mxu0 0
          %1500 = vmatprep.subr.bf16.mxu0 0
          %1501 = vmatpush2.bf16.msra.mxu0 0
          %1502 = vmatprep.mubr.bf16.mxu0 0
          %1503 = vmatmul.mubr.bf16.gmra.mxu0 %v1468
          %v1504 = vpop.f32.mrf.mxu0
          %v1505 = vadd.f32 %v1453, %v1504
          %v1506 = vpop.f32.mrf.mxu0
          %v1507 = vpop.f32.mrf.mxu0
          %v1508 = vadd.f32 %v1453, %v1507
          %v1509 = vpop.f32.mrf.mxu0
          %1510 = vdwg.mxu0
          %v1511 = vmul.f32 %v1505, 0.5
          %v1512 = vmul.f32 %v1508, 0.5
          %v1513 = vmul.f32 %v1505, 0.044715
          %v1514 = vmul.f32 %v1508, 0.044715
          %v1515 = vmul.f32 %v1513, %v1505
          %v1516 = vmul.f32 %v1514, %v1508
          %v1517 = vmul.f32 %v1515, %v1505
          %v1518 = vmul.f32 %v1516, %v1508
          %v1519 = vadd.f32 %v1505, %v1517
          %v1520 = vadd.f32 %v1508, %v1518
          %v1521 = vmul.f32 %v1519, 0.7978846
          %v1522 = vmul.f32 %v1520, 0.7978846
          %v1523 = vtanh.pop %v1521
          %v1524 = vtanh.pop %v1522
          %v1525 = vadd.f32 %v1523, 1.0
          %v1526 = vadd.f32 %v1524, 1.0
          %v1527 = vmul.f32 %v1511, %v1525
          %v1528 = vmul.f32 %v1512, %v1526
          %v1529 = vpack.c.bf16 %v1528, %v1527
          %v1530 = vld [vmem:[%s749] sm:$0xf]
          %v1531 = vld [vmem:[%s749 + $0x4] sm:$0xf]
          %v1532 = vld [vmem:[%s749 + $0x8] sm:$0xf]
          %v1533 = vld [vmem:[%s749 + $0xc] sm:$0xf]
          %v1534 = vld [vmem:[%s749 + $0x10] sm:$0xf]
          %v1535 = vld [vmem:[%s749 + $0x14] sm:$0xf]
          %v1536 = vld [vmem:[%s749 + $0x18] sm:$0xf]
          %v1537 = vld [vmem:[%s749 + $0x1c] sm:$0xf]
          %v1538 = vld [vmem:[%s752] sm:$0x1]
          %v1540 = vlaneseq
          %v1541 = vshrl.u32 %v1540, 7
          %v1542 = vsub.s32 0, %v1541
          %v1543 = vrot.slane %v1538, %v1542
          %v1553 = vunpack.c.l.b16 %v1530
          %v1554 = vunpack.c.l.b16 %v1531
          %v1555 = vunpack.c.l.b16 %v1532
          %v1556 = vunpack.c.l.b16 %v1533
          %v1557 = vunpack.c.l.b16 %v1534
          %v1558 = vunpack.c.l.b16 %v1535
          %v1559 = vunpack.c.l.b16 %v1536
          %v1560 = vunpack.c.l.b16 %v1537
          %v1561 = vpack.c.b16 %v1554, %v1553
          %v1562 = vpack.c.b16 %v1556, %v1555
          %v1563 = vpack.c.b16 %v1558, %v1557
          %v1564 = vpack.c.b16 %v1560, %v1559
          %vm1569 = vcmask 523264
          %v1571 = vsel %vm1569, %v1529, 0
          %1573 = vmatprep.subr.bf16.mxu0 0
          %1574 = vmatpush1.bf16.msra.mxu0 0
          %1575 = vmatprep.subr.bf16.mxu0 0
          %1576 = vmatpush1.bf16.msra.mxu0 0
          %1577 = vmatprep.subr.bf16.mxu0 0
          %1578 = vmatpush1.bf16.msra.mxu0 0
          %1579 = vmatprep.subr.bf16.mxu0 0
          %1580 = vmatpush1.bf16.msra.mxu0 0
          %1581 = vmatprep.subr.bf16.mxu0 0
          %1582 = vmatpush1.bf16.msra.mxu0 %v1564
          %1583 = vmatprep.subr.bf16.mxu0 0
          %1584 = vmatpush1.bf16.msra.mxu0 %v1563
          %1585 = vmatprep.subr.bf16.mxu0 0
          %1586 = vmatpush1.bf16.msra.mxu0 %v1562
          %1587 = vmatprep.subr.bf16.mxu0 0
          %1588 = vmatpush1.bf16.msra.mxu0 %v1561
          %1589 = vmatprep.subr.bf16.mxu0 0
          %1590 = vmatpush2.bf16.msra.mxu0 0
          %1591 = vmatprep.subr.bf16.mxu0 0
          %1592 = vmatpush2.bf16.msra.mxu0 0
          %1593 = vmatprep.subr.bf16.mxu0 0
          %1594 = vmatpush2.bf16.msra.mxu0 0
          %1595 = vmatprep.subr.bf16.mxu0 0
          %1596 = vmatpush2.bf16.msra.mxu0 0
          %1597 = vmatprep.subr.bf16.mxu0 0
          %1598 = vmatpush2.bf16.msra.mxu0 0
          %1599 = vmatprep.subr.bf16.mxu0 0
          %1600 = vmatpush2.bf16.msra.mxu0 0
          %1601 = vmatprep.subr.bf16.mxu0 0
          %1602 = vmatpush2.bf16.msra.mxu0 0
          %1603 = vmatprep.subr.bf16.mxu0 0
          %1604 = vmatpush2.bf16.msra.mxu0 0
          %1605 = vmatprep.mubr.bf16.mxu0 0
          %1606 = vmatmul.mubr.bf16.gmra.mxu0 %v1571
          %v1607 = vpop.f32.mrf.mxu0
          %v1608 = vadd.f32 %v1543, %v1607
          %v1609 = vpop.f32.mrf.mxu0
          %v1610 = vpop.f32.mrf.mxu0
          %v1611 = vadd.f32 %v1543, %v1610
          %v1612 = vpop.f32.mrf.mxu0
          %1613 = vdwg.mxu0
          %v1614 = vadd.f32 %v1441, %v1608
          %v1615 = vadd.f32 %v1442, %v1611
          %v1616 = vld [vmem:[%s755] sm:$0x1]
          %v1617 = vld [vmem:[%s758] sm:$0x1]
          %v1618 = vsel %vm804, %v1614, 0.0
          %1619 = vadd.xlane.f32.xlu0 %v1618
          %v1620 = vpop.xlane.xlu0 %1619
          %v1621 = vsel %vm804, %v1615, 0.0
          %1622 = vadd.xlane.f32.xlu0 %v1621
          %v1623 = vpop.xlane.xlu0 %1622
          %v1624 = vmul.f32 %v1620, %v1406
          %v1625 = vmul.f32 %v1623, %v1406
          %v1626 = vsub.f32 %v1614, %v1624
          %v1627 = vsub.f32 %v1615, %v1625
          %v1628 = vmul.f32 %v1626, %v1626
          %v1629 = vmul.f32 %v1627, %v1627
          %v1630 = vsel %vm804, %v1628, 0.0
          %1631 = vadd.xlane.f32.xlu0 %v1630
          %v1632 = vpop.xlane.xlu0 %1631
          %v1633 = vsel %vm804, %v1629, 0.0
          %1634 = vadd.xlane.f32.xlu0 %v1633
          %v1635 = vpop.xlane.xlu0 %1634
          %v1636 = vmul.f32 %v1632, %v1406
          %v1637 = vmul.f32 %v1635, %v1406
          %v1638 = vadd.f32 %v1636, 1e-12
          %v1639 = vadd.f32 %v1637, 1e-12
          %v1640 = vrsqrt.pop %v1638
          %v1641 = vrsqrt.pop %v1639
          %v1642 = vmul.f32 %v1626, %v1640
          %v1643 = vmul.f32 %v1627, %v1641
          %v1645 = vlaneseq
          %v1646 = vshrl.u32 %v1645, 7
          %v1647 = vsub.s32 0, %v1646
          %v1648 = vrot.slane %v1616, %v1647
          %v1650 = vmul.f32 %v1642, %v1648
          %v1651 = vmul.f32 %v1643, %v1648
          %v1653 = vlaneseq
          %v1654 = vshrl.u32 %v1653, 7
          %v1655 = vsub.s32 0, %v1654
          %v1656 = vrot.slane %v1617, %v1655
          %v1658 = vadd.f32 %v1650, %v1656
          %v1659 = vadd.f32 %v1651, %v1656
          %v1660 = vpack.c.bf16 %v1658, %v1658
          %v1661 = vpack.c.bf16 %v1659, %v1659
          %vm1662 = vcmask 257024
          %1663 = vst.msk [vmem:[#allocation2] sm:$0xf] %vm1662, %v1660
          %1664 = vst.msk [vmem:[#allocation2 + $0x4] sm:$0xf] %vm1662, %v1661
        $region104: #{tpu_custom_call.1} parent=83 // pred_fallthru
          _
        %p1665 = scmp.eq.s32.totalorder %s35, 1
        // Predicated region
        $region105: #{tpu_custom_call.1} parent=83 // pred_check
          %p1666 = pneg %p1665
        $region106: #{tpu_custom_call.1} parent=83 // pred_check_branch
          %1668 = sbr.rel (%p1666) target = $region108
        $region107: #{tpu_custom_call.1} parent=83 // pred_region
          %v1669 = vpack.c.b16 %v859, %v859
          %1670 = vrot.lane.b32.xlu0 %v1669, 96
          %v1671 = vpop.permute.xlu0 %1670
          %vm1672 = vcmask 130048
          %v1674 = vsel %vm1672, %v855, 0
          %v1677 = vsel %vm1672, %v1671, 0
          %1679 = vmatprep.subr.bf16.mxu0 0
          %1680 = vmatpush1.bf16.xpose.msra.mxu0 0
          %1681 = vmatprep.subr.bf16.mxu0 0
          %1682 = vmatpush1.bf16.xpose.msra.mxu0 0
          %1683 = vmatprep.subr.bf16.mxu0 0
          %1684 = vmatpush1.bf16.xpose.msra.mxu0 0
          %1685 = vmatprep.subr.bf16.mxu0 0
          %1686 = vmatpush1.bf16.xpose.msra.mxu0 0
          %1687 = vmatprep.subr.bf16.mxu0 0
          %1688 = vmatpush1.bf16.xpose.msra.mxu0 0
          %1689 = vmatprep.subr.bf16.mxu0 0
          %1690 = vmatpush1.bf16.xpose.msra.mxu0 0
          %1691 = vmatprep.subr.bf16.mxu0 0
          %1692 = vmatpush1.bf16.xpose.msra.mxu0 0
          %1693 = vmatprep.subr.bf16.mxu0 0
          %1694 = vmatpush1.bf16.xpose.msra.mxu0 %v1677
          %1695 = vmatprep.subr.bf16.mxu0 0
          %1696 = vmatpush2.bf16.xpose.msra.mxu0 0
          %1697 = vmatprep.subr.bf16.mxu0 0
          %1698 = vmatpush2.bf16.xpose.msra.mxu0 0
          %1699 = vmatprep.subr.bf16.mxu0 0
          %1700 = vmatpush2.bf16.xpose.msra.mxu0 0
          %1701 = vmatprep.subr.bf16.mxu0 0
          %1702 = vmatpush2.bf16.xpose.msra.mxu0 0
          %1703 = vmatprep.subr.bf16.mxu0 0
          %1704 = vmatpush2.bf16.xpose.msra.mxu0 0
          %1705 = vmatprep.subr.bf16.mxu0 0
          %1706 = vmatpush2.bf16.xpose.msra.mxu0 0
          %1707 = vmatprep.subr.bf16.mxu0 0
          %1708 = vmatpush2.bf16.xpose.msra.mxu0 0
          %1709 = vmatprep.subr.bf16.mxu0 0
          %1710 = vmatpush2.bf16.xpose.msra.mxu0 0
          %1711 = vmatprep.mubr.bf16.mxu0 0
          %1712 = vmatmul.mubr.bf16.gmra.mxu0 %v1674
          %v1713 = vpop.f32.mrf.mxu0
          %v1714 = vadd.f32 %v774, %v1713
          %v1715 = vpop.f32.mrf.mxu0
          %v1716 = vpop.f32.mrf.mxu0
          %v1717 = vpop.f32.mrf.mxu0
          %1718 = vdwg.mxu0
          %v1719 = vpack.c.b16 %v860, %v860
          %1720 = vrot.lane.b32.xlu0 %v1719, 96
          %v1721 = vpop.permute.xlu0 %1720
          %v1723 = vsel %vm1672, %v856, 0
          %v1726 = vsel %vm1672, %v1721, 0
          %1728 = vmatprep.subr.bf16.mxu0 0
          %1729 = vmatpush1.bf16.xpose.msra.mxu0 0
          %1730 = vmatprep.subr.bf16.mxu0 0
          %1731 = vmatpush1.bf16.xpose.msra.mxu0 0
          %1732 = vmatprep.subr.bf16.mxu0 0
          %1733 = vmatpush1.bf16.xpose.msra.mxu0 0
          %1734 = vmatprep.subr.bf16.mxu0 0
          %1735 = vmatpush1.bf16.xpose.msra.mxu0 0
          %1736 = vmatprep.subr.bf16.mxu0 0
          %1737 = vmatpush1.bf16.xpose.msra.mxu0 0
          %1738 = vmatprep.subr.bf16.mxu0 0
          %1739 = vmatpush1.bf16.xpose.msra.mxu0 0
          %1740 = vmatprep.subr.bf16.mxu0 0
          %1741 = vmatpush1.bf16.xpose.msra.mxu0 0
          %1742 = vmatprep.subr.bf16.mxu0 0
          %1743 = vmatpush1.bf16.xpose.msra.mxu0 %v1726
          %1744 = vmatprep.subr.bf16.mxu0 0
          %1745 = vmatpush2.bf16.xpose.msra.mxu0 0
          %1746 = vmatprep.subr.bf16.mxu0 0
          %1747 = vmatpush2.bf16.xpose.msra.mxu0 0
          %1748 = vmatprep.subr.bf16.mxu0 0
          %1749 = vmatpush2.bf16.xpose.msra.mxu0 0
          %1750 = vmatprep.subr.bf16.mxu0 0
          %1751 = vmatpush2.bf16.xpose.msra.mxu0 0
          %1752 = vmatprep.subr.bf16.mxu0 0
          %1753 = vmatpush2.bf16.xpose.msra.mxu0 0
          %1754 = vmatprep.subr.bf16.mxu0 0
          %1755 = vmatpush2.bf16.xpose.msra.mxu0 0
          %1756 = vmatprep.subr.bf16.mxu0 0
          %1757 = vmatpush2.bf16.xpose.msra.mxu0 0
          %1758 = vmatprep.subr.bf16.mxu0 0
          %1759 = vmatpush2.bf16.xpose.msra.mxu0 0
          %1760 = vmatprep.mubr.bf16.mxu0 0
          %1761 = vmatmul.mubr.bf16.gmra.mxu0 %v1723
          %v1762 = vpop.f32.mrf.mxu0
          %v1763 = vadd.f32 %v775, %v1762
          %v1764 = vpop.f32.mrf.mxu0
          %v1765 = vpop.f32.mrf.mxu0
          %v1766 = vpop.f32.mrf.mxu0
          %1767 = vdwg.mxu0
          %vm1768 = vcmask 57344
          %v1769 = vsel %vm1768, %v1714, -inf
          %1770 = vmax.xlane.f32.xlu0 %v1769
          %v1771 = vpop.xlane.xlu0 %1770
          %v1772 = vsel %vm1768, %v1763, -inf
          %1773 = vmax.xlane.f32.xlu0 %v1772
          %v1774 = vpop.xlane.xlu0 %1773
          %v1775 = vsub.f32 %v1714, %v1771
          %v1776 = vsub.f32 %v1763, %v1774
          %v1777 = vmul.f32 %v1775, 1.442695
          %v1778 = vpow.pop %v1777
          %v1779 = vmul.f32 %v1776, 1.442695
          %v1780 = vpow.pop %v1779
          %v1781 = vsel %vm1768, %v1778, 0.0
          %1782 = vadd.xlane.f32.xlu0 %v1781
          %v1783 = vpop.xlane.xlu0 %1782
          %v1784 = vsel %vm1768, %v1780, 0.0
          %1785 = vadd.xlane.f32.xlu0 %v1784
          %v1786 = vpop.xlane.xlu0 %1785
          %v1787 = vrcp.pop %v1783
          %v1788 = vrcp.pop %v1786
          %v1789 = vmul.f32 %v1778, %v1787
          %v1790 = vmul.f32 %v1780, %v1788
          %v1791 = vpack.c.bf16 %v1789, %v1789
          %v1792 = vpack.c.bf16 %v1790, %v1790
          %1793 = vrot.lane.b32.xlu0 %v1669, 64
          %v1794 = vpop.permute.xlu0 %1793
          %vm1795 = vcmask 64512
          %v1797 = vsel %vm1795, %v1791, 0
          %vm1799 = vcmask 1043456
          %v1801 = vsel %vm1799, %v1794, 0
          %1803 = vmatprep.subr.bf16.mxu0 0
          %1804 = vmatpush1.bf16.msra.mxu0 0
          %1805 = vmatprep.subr.bf16.mxu0 0
          %1806 = vmatpush1.bf16.msra.mxu0 0
          %1807 = vmatprep.subr.bf16.mxu0 0
          %1808 = vmatpush1.bf16.msra.mxu0 0
          %1809 = vmatprep.subr.bf16.mxu0 0
          %1810 = vmatpush1.bf16.msra.mxu0 0
          %1811 = vmatprep.subr.bf16.mxu0 0
          %1812 = vmatpush1.bf16.msra.mxu0 0
          %1813 = vmatprep.subr.bf16.mxu0 0
          %1814 = vmatpush1.bf16.msra.mxu0 0
          %1815 = vmatprep.subr.bf16.mxu0 0
          %1816 = vmatpush1.bf16.msra.mxu0 0
          %1817 = vmatprep.subr.bf16.mxu0 0
          %1818 = vmatpush1.bf16.msra.mxu0 %v1801
          %1819 = vmatprep.subr.bf16.mxu0 0
          %1820 = vmatpush2.bf16.msra.mxu0 0
          %1821 = vmatprep.subr.bf16.mxu0 0
          %1822 = vmatpush2.bf16.msra.mxu0 0
          %1823 = vmatprep.subr.bf16.mxu0 0
          %1824 = vmatpush2.bf16.msra.mxu0 0
          %1825 = vmatprep.subr.bf16.mxu0 0
          %1826 = vmatpush2.bf16.msra.mxu0 0
          %1827 = vmatprep.subr.bf16.mxu0 0
          %1828 = vmatpush2.bf16.msra.mxu0 0
          %1829 = vmatprep.subr.bf16.mxu0 0
          %1830 = vmatpush2.bf16.msra.mxu0 0
          %1831 = vmatprep.subr.bf16.mxu0 0
          %1832 = vmatpush2.bf16.msra.mxu0 0
          %1833 = vmatprep.subr.bf16.mxu0 0
          %1834 = vmatpush2.bf16.msra.mxu0 0
          %1835 = vmatprep.mubr.bf16.mxu0 0
          %1836 = vmatmul.mubr.bf16.gmra.mxu0 %v1797
          %v1837 = vpop.f32.mrf.mxu0
          %v1838 = vadd.f32 0.0, %v1837
          %v1839 = vpop.f32.mrf.mxu0
          %v1840 = vpop.f32.mrf.mxu0
          %v1841 = vpop.f32.mrf.mxu0
          %1842 = vdwg.mxu0
          %1843 = vrot.lane.b32.xlu0 %v1719, 64
          %v1844 = vpop.permute.xlu0 %1843
          %v1846 = vsel %vm1795, %v1792, 0
          %v1849 = vsel %vm1799, %v1844, 0
          %1851 = vmatprep.subr.bf16.mxu0 0
          %1852 = vmatpush1.bf16.msra.mxu0 0
          %1853 = vmatprep.subr.bf16.mxu0 0
          %1854 = vmatpush1.bf16.msra.mxu0 0
          %1855 = vmatprep.subr.bf16.mxu0 0
          %1856 = vmatpush1.bf16.msra.mxu0 0
          %1857 = vmatprep.subr.bf16.mxu0 0
          %1858 = vmatpush1.bf16.msra.mxu0 0
          %1859 = vmatprep.subr.bf16.mxu0 0
          %1860 = vmatpush1.bf16.msra.mxu0 0
          %1861 = vmatprep.subr.bf16.mxu0 0
          %1862 = vmatpush1.bf16.msra.mxu0 0
          %1863 = vmatprep.subr.bf16.mxu0 0
          %1864 = vmatpush1.bf16.msra.mxu0 0
          %1865 = vmatprep.subr.bf16.mxu0 0
          %1866 = vmatpush1.bf16.msra.mxu0 %v1849
          %1867 = vmatprep.subr.bf16.mxu0 0
          %1868 = vmatpush2.bf16.msra.mxu0 0
          %1869 = vmatprep.subr.bf16.mxu0 0
          %1870 = vmatpush2.bf16.msra.mxu0 0
          %1871 = vmatprep.subr.bf16.mxu0 0
          %1872 = vmatpush2.bf16.msra.mxu0 0
          %1873 = vmatprep.subr.bf16.mxu0 0
          %1874 = vmatpush2.bf16.msra.mxu0 0
          %1875 = vmatprep.subr.bf16.mxu0 0
          %1876 = vmatpush2.bf16.msra.mxu0 0
          %1877 = vmatprep.subr.bf16.mxu0 0
          %1878 = vmatpush2.bf16.msra.mxu0 0
          %1879 = vmatprep.subr.bf16.mxu0 0
          %1880 = vmatpush2.bf16.msra.mxu0 0
          %1881 = vmatprep.subr.bf16.mxu0 0
          %1882 = vmatpush2.bf16.msra.mxu0 0
          %1883 = vmatprep.mubr.bf16.mxu0 0
          %1884 = vmatmul.mubr.bf16.gmra.mxu0 %v1846
          %v1885 = vpop.f32.mrf.mxu0
          %v1886 = vadd.f32 0.0, %v1885
          %v1887 = vpop.f32.mrf.mxu0
          %v1888 = vpop.f32.mrf.mxu0
          %v1889 = vpop.f32.mrf.mxu0
          %1890 = vdwg.mxu0
          %1891 = vrot.lane.b32.xlu0 %v855, 112
          %v1892 = vpop.permute.xlu0 %1891
          %1893 = vrot.lane.b32.xlu0 %v1669, 80
          %v1894 = vpop.permute.xlu0 %1893
          %v1896 = vsel %vm1672, %v1892, 0
          %v1899 = vsel %vm1672, %v1894, 0
          %1901 = vmatprep.subr.bf16.mxu0 0
          %1902 = vmatpush1.bf16.xpose.msra.mxu0 0
          %1903 = vmatprep.subr.bf16.mxu0 0
          %1904 = vmatpush1.bf16.xpose.msra.mxu0 0
          %1905 = vmatprep.subr.bf16.mxu0 0
          %1906 = vmatpush1.bf16.xpose.msra.mxu0 0
          %1907 = vmatprep.subr.bf16.mxu0 0
          %1908 = vmatpush1.bf16.xpose.msra.mxu0 0
          %1909 = vmatprep.subr.bf16.mxu0 0
          %1910 = vmatpush1.bf16.xpose.msra.mxu0 0
          %1911 = vmatprep.subr.bf16.mxu0 0
          %1912 = vmatpush1.bf16.xpose.msra.mxu0 0
          %1913 = vmatprep.subr.bf16.mxu0 0
          %1914 = vmatpush1.bf16.xpose.msra.mxu0 0
          %1915 = vmatprep.subr.bf16.mxu0 0
          %1916 = vmatpush1.bf16.xpose.msra.mxu0 %v1899
          %1917 = vmatprep.subr.bf16.mxu0 0
          %1918 = vmatpush2.bf16.xpose.msra.mxu0 0
          %1919 = vmatprep.subr.bf16.mxu0 0
          %1920 = vmatpush2.bf16.xpose.msra.mxu0 0
          %1921 = vmatprep.subr.bf16.mxu0 0
          %1922 = vmatpush2.bf16.xpose.msra.mxu0 0
          %1923 = vmatprep.subr.bf16.mxu0 0
          %1924 = vmatpush2.bf16.xpose.msra.mxu0 0
          %1925 = vmatprep.subr.bf16.mxu0 0
          %1926 = vmatpush2.bf16.xpose.msra.mxu0 0
          %1927 = vmatprep.subr.bf16.mxu0 0
          %1928 = vmatpush2.bf16.xpose.msra.mxu0 0
          %1929 = vmatprep.subr.bf16.mxu0 0
          %1930 = vmatpush2.bf16.xpose.msra.mxu0 0
          %1931 = vmatprep.subr.bf16.mxu0 0
          %1932 = vmatpush2.bf16.xpose.msra.mxu0 0
          %1933 = vmatprep.mubr.bf16.mxu0 0
          %1934 = vmatmul.mubr.bf16.gmra.mxu0 %v1896
          %v1935 = vpop.f32.mrf.mxu0
          %v1936 = vadd.f32 %v774, %v1935
          %v1937 = vpop.f32.mrf.mxu0
          %v1938 = vpop.f32.mrf.mxu0
          %v1939 = vpop.f32.mrf.mxu0
          %1940 = vdwg.mxu0
          %1941 = vrot.lane.b32.xlu0 %v856, 112
          %v1942 = vpop.permute.xlu0 %1941
          %1943 = vrot.lane.b32.xlu0 %v1719, 80
          %v1944 = vpop.permute.xlu0 %1943
          %v1946 = vsel %vm1672, %v1942, 0
          %v1949 = vsel %vm1672, %v1944, 0
          %1951 = vmatprep.subr.bf16.mxu0 0
          %1952 = vmatpush1.bf16.xpose.msra.mxu0 0
          %1953 = vmatprep.subr.bf16.mxu0 0
          %1954 = vmatpush1.bf16.xpose.msra.mxu0 0
          %1955 = vmatprep.subr.bf16.mxu0 0
          %1956 = vmatpush1.bf16.xpose.msra.mxu0 0
          %1957 = vmatprep.subr.bf16.mxu0 0
          %1958 = vmatpush1.bf16.xpose.msra.mxu0 0
          %1959 = vmatprep.subr.bf16.mxu0 0
          %1960 = vmatpush1.bf16.xpose.msra.mxu0 0
          %1961 = vmatprep.subr.bf16.mxu0 0
          %1962 = vmatpush1.bf16.xpose.msra.mxu0 0
          %1963 = vmatprep.subr.bf16.mxu0 0
          %1964 = vmatpush1.bf16.xpose.msra.mxu0 0
          %1965 = vmatprep.subr.bf16.mxu0 0
          %1966 = vmatpush1.bf16.xpose.msra.mxu0 %v1949
          %1967 = vmatprep.subr.bf16.mxu0 0
          %1968 = vmatpush2.bf16.xpose.msra.mxu0 0
          %1969 = vmatprep.subr.bf16.mxu0 0
          %1970 = vmatpush2.bf16.xpose.msra.mxu0 0
          %1971 = vmatprep.subr.bf16.mxu0 0
          %1972 = vmatpush2.bf16.xpose.msra.mxu0 0
          %1973 = vmatprep.subr.bf16.mxu0 0
          %1974 = vmatpush2.bf16.xpose.msra.mxu0 0
          %1975 = vmatprep.subr.bf16.mxu0 0
          %1976 = vmatpush2.bf16.xpose.msra.mxu0 0
          %1977 = vmatprep.subr.bf16.mxu0 0
          %1978 = vmatpush2.bf16.xpose.msra.mxu0 0
          %1979 = vmatprep.subr.bf16.mxu0 0
          %1980 = vmatpush2.bf16.xpose.msra.mxu0 0
          %1981 = vmatprep.subr.bf16.mxu0 0
          %1982 = vmatpush2.bf16.xpose.msra.mxu0 0
          %1983 = vmatprep.mubr.bf16.mxu0 0
          %1984 = vmatmul.mubr.bf16.gmra.mxu0 %v1946
          %v1985 = vpop.f32.mrf.mxu0
          %v1986 = vadd.f32 %v775, %v1985
          %v1987 = vpop.f32.mrf.mxu0
          %v1988 = vpop.f32.mrf.mxu0
          %v1989 = vpop.f32.mrf.mxu0
          %1990 = vdwg.mxu0
          %v1991 = vsel %vm1768, %v1936, -inf
          %1992 = vmax.xlane.f32.xlu0 %v1991
          %v1993 = vpop.xlane.xlu0 %1992
          %v1994 = vsel %vm1768, %v1986, -inf
          %1995 = vmax.xlane.f32.xlu0 %v1994
          %v1996 = vpop.xlane.xlu0 %1995
          %v1997 = vsub.f32 %v1936, %v1993
          %v1998 = vsub.f32 %v1986, %v1996
          %v1999 = vmul.f32 %v1997, 1.442695
          %v2000 = vpow.pop %v1999
          %v2001 = vmul.f32 %v1998, 1.442695
          %v2002 = vpow.pop %v2001
          %v2003 = vsel %vm1768, %v2000, 0.0
          %2004 = vadd.xlane.f32.xlu0 %v2003
          %v2005 = vpop.xlane.xlu0 %2004
          %v2006 = vsel %vm1768, %v2002, 0.0
          %2007 = vadd.xlane.f32.xlu0 %v2006
          %v2008 = vpop.xlane.xlu0 %2007
          %v2009 = vrcp.pop %v2005
          %v2010 = vrcp.pop %v2008
          %v2011 = vmul.f32 %v2000, %v2009
          %v2012 = vmul.f32 %v2002, %v2010
          %v2013 = vpack.c.bf16 %v2011, %v2011
          %v2014 = vpack.c.bf16 %v2012, %v2012
          %2015 = vrot.lane.b32.xlu0 %v1669, 48
          %v2016 = vpop.permute.xlu0 %2015
          %v2018 = vsel %vm1795, %v2013, 0
          %v2021 = vsel %vm1799, %v2016, 0
          %2023 = vmatprep.subr.bf16.mxu0 0
          %2024 = vmatpush1.bf16.msra.mxu0 0
          %2025 = vmatprep.subr.bf16.mxu0 0
          %2026 = vmatpush1.bf16.msra.mxu0 0
          %2027 = vmatprep.subr.bf16.mxu0 0
          %2028 = vmatpush1.bf16.msra.mxu0 0
          %2029 = vmatprep.subr.bf16.mxu0 0
          %2030 = vmatpush1.bf16.msra.mxu0 0
          %2031 = vmatprep.subr.bf16.mxu0 0
          %2032 = vmatpush1.bf16.msra.mxu0 0
          %2033 = vmatprep.subr.bf16.mxu0 0
          %2034 = vmatpush1.bf16.msra.mxu0 0
          %2035 = vmatprep.subr.bf16.mxu0 0
          %2036 = vmatpush1.bf16.msra.mxu0 0
          %2037 = vmatprep.subr.bf16.mxu0 0
          %2038 = vmatpush1.bf16.msra.mxu0 %v2021
          %2039 = vmatprep.subr.bf16.mxu0 0
          %2040 = vmatpush2.bf16.msra.mxu0 0
          %2041 = vmatprep.subr.bf16.mxu0 0
          %2042 = vmatpush2.bf16.msra.mxu0 0
          %2043 = vmatprep.subr.bf16.mxu0 0
          %2044 = vmatpush2.bf16.msra.mxu0 0
          %2045 = vmatprep.subr.bf16.mxu0 0
          %2046 = vmatpush2.bf16.msra.mxu0 0
          %2047 = vmatprep.subr.bf16.mxu0 0
          %2048 = vmatpush2.bf16.msra.mxu0 0
          %2049 = vmatprep.subr.bf16.mxu0 0
          %2050 = vmatpush2.bf16.msra.mxu0 0
          %2051 = vmatprep.subr.bf16.mxu0 0
          %2052 = vmatpush2.bf16.msra.mxu0 0
          %2053 = vmatprep.subr.bf16.mxu0 0
          %2054 = vmatpush2.bf16.msra.mxu0 0
          %2055 = vmatprep.mubr.bf16.mxu0 0
          %2056 = vmatmul.mubr.bf16.gmra.mxu0 %v2018
          %v2057 = vpop.f32.mrf.mxu0
          %v2058 = vadd.f32 0.0, %v2057
          %v2059 = vpop.f32.mrf.mxu0
          %v2060 = vpop.f32.mrf.mxu0
          %v2061 = vpop.f32.mrf.mxu0
          %2062 = vdwg.mxu0
          %2063 = vrot.lane.b32.xlu0 %v1719, 48
          %v2064 = vpop.permute.xlu0 %2063
          %v2066 = vsel %vm1795, %v2014, 0
          %v2069 = vsel %vm1799, %v2064, 0
          %2071 = vmatprep.subr.bf16.mxu0 0
          %2072 = vmatpush1.bf16.msra.mxu0 0
          %2073 = vmatprep.subr.bf16.mxu0 0
          %2074 = vmatpush1.bf16.msra.mxu0 0
          %2075 = vmatprep.subr.bf16.mxu0 0
          %2076 = vmatpush1.bf16.msra.mxu0 0
          %2077 = vmatprep.subr.bf16.mxu0 0
          %2078 = vmatpush1.bf16.msra.mxu0 0
          %2079 = vmatprep.subr.bf16.mxu0 0
          %2080 = vmatpush1.bf16.msra.mxu0 0
          %2081 = vmatprep.subr.bf16.mxu0 0
          %2082 = vmatpush1.bf16.msra.mxu0 0
          %2083 = vmatprep.subr.bf16.mxu0 0
          %2084 = vmatpush1.bf16.msra.mxu0 0
          %2085 = vmatprep.subr.bf16.mxu0 0
          %2086 = vmatpush1.bf16.msra.mxu0 %v2069
          %2087 = vmatprep.subr.bf16.mxu0 0
          %2088 = vmatpush2.bf16.msra.mxu0 0
          %2089 = vmatprep.subr.bf16.mxu0 0
          %2090 = vmatpush2.bf16.msra.mxu0 0
          %2091 = vmatprep.subr.bf16.mxu0 0
          %2092 = vmatpush2.bf16.msra.mxu0 0
          %2093 = vmatprep.subr.bf16.mxu0 0
          %2094 = vmatpush2.bf16.msra.mxu0 0
          %2095 = vmatprep.subr.bf16.mxu0 0
          %2096 = vmatpush2.bf16.msra.mxu0 0
          %2097 = vmatprep.subr.bf16.mxu0 0
          %2098 = vmatpush2.bf16.msra.mxu0 0
          %2099 = vmatprep.subr.bf16.mxu0 0
          %2100 = vmatpush2.bf16.msra.mxu0 0
          %2101 = vmatprep.subr.bf16.mxu0 0
          %2102 = vmatpush2.bf16.msra.mxu0 0
          %2103 = vmatprep.mubr.bf16.mxu0 0
          %2104 = vmatmul.mubr.bf16.gmra.mxu0 %v2066
          %v2105 = vpop.f32.mrf.mxu0
          %v2106 = vadd.f32 0.0, %v2105
          %v2107 = vpop.f32.mrf.mxu0
          %v2108 = vpop.f32.mrf.mxu0
          %v2109 = vpop.f32.mrf.mxu0
          %2110 = vdwg.mxu0
          %2113 = vrot.lane.b32.xlu0 %v2058, 16
          %v2114 = vpop.permute.xlu0 %2113
          %2115 = vrot.lane.b32.xlu0 %v2106, 16
          %v2116 = vpop.permute.xlu0 %2115
          %v2119 = vsel %vm1672, %v1838, %v2114
          %v2120 = vsel %vm1672, %v1886, %v2116
          %v2121 = vpack.c.bf16 %v2119, %v2119
          %v2122 = vpack.c.bf16 %v2120, %v2120
          %v2123 = vld [vmem:[%s727] sm:$0xf]
          %v2124 = vld [vmem:[%s727 + $0x4] sm:$0xf]
          %v2125 = vld [vmem:[%s727 + $0x8] sm:$0xf]
          %v2126 = vld [vmem:[%s727 + $0xc] sm:$0xf]
          %v2127 = vld [vmem:[%s730] sm:$0x1]
          %v2129 = vlaneseq
          %v2130 = vshrl.u32 %v2129, 7
          %v2131 = vsub.s32 0, %v2130
          %v2132 = vrot.slane %v2127, %v2131
          %v2136 = vunpack.c.l.b16 %v2121
          %v2137 = vunpack.c.l.b16 %v2122
          %v2138 = vrot.slane %v2137, 7
          %vm2139 = vcmask 1041409
          %v2140 = vsel %vm2139, %v2138, %v2136
          %v2141 = vpack.c.b16 %v2140, %v2140
          %v2146 = vunpack.c.l.b16 %v2123
          %v2147 = vunpack.c.l.b16 %v2124
          %v2148 = vunpack.c.l.b16 %v2125
          %v2149 = vunpack.c.l.b16 %v2126
          %v2150 = vpack.c.b16 %v2147, %v2146
          %v2151 = vpack.c.b16 %v2149, %v2148
          %v2155 = vsel %vm804, %v2141, 0
          %2157 = vmatprep.subr.bf16.mxu0 0
          %2158 = vmatpush1.bf16.msra.mxu0 0
          %2159 = vmatprep.subr.bf16.mxu0 0
          %2160 = vmatpush1.bf16.msra.mxu0 0
          %2161 = vmatprep.subr.bf16.mxu0 0
          %2162 = vmatpush1.bf16.msra.mxu0 0
          %2163 = vmatprep.subr.bf16.mxu0 0
          %2164 = vmatpush1.bf16.msra.mxu0 0
          %2165 = vmatprep.subr.bf16.mxu0 0
          %2166 = vmatpush1.bf16.msra.mxu0 0
          %2167 = vmatprep.subr.bf16.mxu0 0
          %2168 = vmatpush1.bf16.msra.mxu0 0
          %2169 = vmatprep.subr.bf16.mxu0 0
          %2170 = vmatpush1.bf16.msra.mxu0 %v2151
          %2171 = vmatprep.subr.bf16.mxu0 0
          %2172 = vmatpush1.bf16.msra.mxu0 %v2150
          %2173 = vmatprep.subr.bf16.mxu0 0
          %2174 = vmatpush2.bf16.msra.mxu0 0
          %2175 = vmatprep.subr.bf16.mxu0 0
          %2176 = vmatpush2.bf16.msra.mxu0 0
          %2177 = vmatprep.subr.bf16.mxu0 0
          %2178 = vmatpush2.bf16.msra.mxu0 0
          %2179 = vmatprep.subr.bf16.mxu0 0
          %2180 = vmatpush2.bf16.msra.mxu0 0
          %2181 = vmatprep.subr.bf16.mxu0 0
          %2182 = vmatpush2.bf16.msra.mxu0 0
          %2183 = vmatprep.subr.bf16.mxu0 0
          %2184 = vmatpush2.bf16.msra.mxu0 0
          %2185 = vmatprep.subr.bf16.mxu0 0
          %2186 = vmatpush2.bf16.msra.mxu0 0
          %2187 = vmatprep.subr.bf16.mxu0 0
          %2188 = vmatpush2.bf16.msra.mxu0 0
          %2189 = vmatprep.mubr.bf16.mxu0 0
          %2190 = vmatmul.mubr.bf16.gmra.mxu0 %v2155
          %v2191 = vpop.f32.mrf.mxu0
          %v2192 = vadd.f32 %v2132, %v2191
          %v2193 = vpop.f32.mrf.mxu0
          %v2194 = vpop.f32.mrf.mxu0
          %v2195 = vpop.f32.mrf.mxu0
          %2196 = vdwg.mxu0
          %v2198 = vrot.slane %v2192, 1
          %v2201 = vadd.f32 %v772, %v2192
          %v2202 = vadd.f32 %v773, %v2198
          %v2203 = vld [vmem:[%s733] sm:$0x1]
          %v2204 = vld [vmem:[%s736] sm:$0x1]
          %v2207 = vrot.slane %v2202, 7
          %v2208 = vsel %vm2139, %v2207, %v2201
          %vm2210 = vcmask 254976
          %v2211 = vsel %vm2210, %v2208, 0.0
          %2212 = vadd.xlane.f32.xlu0 %v2211
          %v2213 = vpop.xlane.xlu0 %2212
          %v2214 = vrcp.pop 32.0
          %v2215 = vmul.f32 %v2213, %v2214
          %v2217 = vrot.slane %v2215, 1
          %v2220 = vsub.f32 %v2201, %v2215
          %v2221 = vsub.f32 %v2202, %v2217
          %v2222 = vmul.f32 %v2220, %v2220
          %v2223 = vmul.f32 %v2221, %v2221
          %v2226 = vrot.slane %v2223, 7
          %v2227 = vsel %vm2139, %v2226, %v2222
          %v2229 = vsel %vm2210, %v2227, 0.0
          %2230 = vadd.xlane.f32.xlu0 %v2229
          %v2231 = vpop.xlane.xlu0 %2230
          %v2232 = vmul.f32 %v2231, %v2214
          %v2233 = vadd.f32 %v2232, 1e-12
          %v2234 = vrsqrt.pop %v2233
          %v2236 = vrot.slane %v2234, 1
          %v2239 = vmul.f32 %v2220, %v2234
          %v2240 = vmul.f32 %v2221, %v2236
          %v2242 = vlaneseq
          %v2243 = vshrl.u32 %v2242, 7
          %v2244 = vsub.s32 0, %v2243
          %v2245 = vrot.slane %v2203, %v2244
          %v2247 = vmul.f32 %v2239, %v2245
          %v2248 = vmul.f32 %v2240, %v2245
          %v2250 = vlaneseq
          %v2251 = vshrl.u32 %v2250, 7
          %v2252 = vsub.s32 0, %v2251
          %v2253 = vrot.slane %v2204, %v2252
          %v2255 = vadd.f32 %v2247, %v2253
          %v2256 = vadd.f32 %v2248, %v2253
          %v2257 = vpack.c.bf16 %v2255, %v2255
          %v2258 = vpack.c.bf16 %v2256, %v2256
          %v2259 = vld [vmem:[%s741] sm:$0xf]
          %v2260 = vld [vmem:[%s741 + $0x4] sm:$0xf]
          %v2261 = vld [vmem:[%s741 + $0x8] sm:$0xf]
          %v2262 = vld [vmem:[%s741 + $0xc] sm:$0xf]
          %v2263 = vld [vmem:[%s744] sm:$0x1]
          %v2265 = vlaneseq
          %v2266 = vshrl.u32 %v2265, 7
          %v2267 = vsub.s32 0, %v2266
          %v2268 = vrot.slane %v2263, %v2267
          %v2272 = vunpack.c.l.b16 %v2257
          %v2273 = vunpack.c.l.b16 %v2258
          %v2274 = vrot.slane %v2273, 7
          %v2275 = vsel %vm2139, %v2274, %v2272
          %v2276 = vpack.c.b16 %v2275, %v2275
          %v2281 = vunpack.c.l.b16 %v2259
          %v2282 = vunpack.c.l.b16 %v2260
          %v2283 = vunpack.c.l.b16 %v2261
          %v2284 = vunpack.c.l.b16 %v2262
          %v2285 = vpack.c.b16 %v2282, %v2281
          %v2286 = vpack.c.b16 %v2284, %v2283
          %v2290 = vsel %vm804, %v2276, 0
          %2292 = vmatprep.subr.bf16.mxu0 0
          %2293 = vmatpush1.bf16.msra.mxu0 0
          %2294 = vmatprep.subr.bf16.mxu0 0
          %2295 = vmatpush1.bf16.msra.mxu0 0
          %2296 = vmatprep.subr.bf16.mxu0 0
          %2297 = vmatpush1.bf16.msra.mxu0 0
          %2298 = vmatprep.subr.bf16.mxu0 0
          %2299 = vmatpush1.bf16.msra.mxu0 0
          %2300 = vmatprep.subr.bf16.mxu0 0
          %2301 = vmatpush1.bf16.msra.mxu0 0
          %2302 = vmatprep.subr.bf16.mxu0 0
          %2303 = vmatpush1.bf16.msra.mxu0 0
          %2304 = vmatprep.subr.bf16.mxu0 0
          %2305 = vmatpush1.bf16.msra.mxu0 %v2286
          %2306 = vmatprep.subr.bf16.mxu0 0
          %2307 = vmatpush1.bf16.msra.mxu0 %v2285
          %2308 = vmatprep.subr.bf16.mxu0 0
          %2309 = vmatpush2.bf16.msra.mxu0 0
          %2310 = vmatprep.subr.bf16.mxu0 0
          %2311 = vmatpush2.bf16.msra.mxu0 0
          %2312 = vmatprep.subr.bf16.mxu0 0
          %2313 = vmatpush2.bf16.msra.mxu0 0
          %2314 = vmatprep.subr.bf16.mxu0 0
          %2315 = vmatpush2.bf16.msra.mxu0 0
          %2316 = vmatprep.subr.bf16.mxu0 0
          %2317 = vmatpush2.bf16.msra.mxu0 0
          %2318 = vmatprep.subr.bf16.mxu0 0
          %2319 = vmatpush2.bf16.msra.mxu0 0
          %2320 = vmatprep.subr.bf16.mxu0 0
          %2321 = vmatpush2.bf16.msra.mxu0 0
          %2322 = vmatprep.subr.bf16.mxu0 0
          %2323 = vmatpush2.bf16.msra.mxu0 0
          %2324 = vmatprep.mubr.bf16.mxu0 0
          %2325 = vmatmul.mubr.bf16.gmra.mxu0 %v2290
          %v2326 = vpop.f32.mrf.mxu0
          %v2327 = vadd.f32 %v2268, %v2326
          %v2328 = vpop.f32.mrf.mxu0
          %v2329 = vpop.f32.mrf.mxu0
          %v2330 = vpop.f32.mrf.mxu0
          %2331 = vdwg.mxu0
          %v2332 = vmul.f32 %v2327, 0.5
          %v2333 = vmul.f32 %v2327, 0.044715
          %v2334 = vmul.f32 %v2333, %v2327
          %v2335 = vmul.f32 %v2334, %v2327
          %v2336 = vadd.f32 %v2327, %v2335
          %v2337 = vmul.f32 %v2336, 0.7978846
          %v2338 = vtanh.pop %v2337
          %v2339 = vadd.f32 %v2338, 1.0
          %v2340 = vmul.f32 %v2332, %v2339
          %v2341 = vpack.c.bf16 %v2340, %v2340
          %v2342 = vld [vmem:[%s749] sm:$0xf]
          %v2343 = vld [vmem:[%s749 + $0x4] sm:$0xf]
          %v2344 = vld [vmem:[%s749 + $0x8] sm:$0xf]
          %v2345 = vld [vmem:[%s749 + $0xc] sm:$0xf]
          %v2346 = vld [vmem:[%s749 + $0x10] sm:$0xf]
          %v2347 = vld [vmem:[%s749 + $0x14] sm:$0xf]
          %v2348 = vld [vmem:[%s749 + $0x18] sm:$0xf]
          %v2349 = vld [vmem:[%s749 + $0x1c] sm:$0xf]
          %v2350 = vld [vmem:[%s752] sm:$0x1]
          %v2352 = vlaneseq
          %v2353 = vshrl.u32 %v2352, 7
          %v2354 = vsub.s32 0, %v2353
          %v2355 = vrot.slane %v2350, %v2354
          %v2365 = vunpack.c.l.b16 %v2342
          %v2366 = vunpack.c.l.b16 %v2343
          %v2367 = vunpack.c.l.b16 %v2344
          %v2368 = vunpack.c.l.b16 %v2345
          %v2369 = vunpack.c.l.b16 %v2346
          %v2370 = vunpack.c.l.b16 %v2347
          %v2371 = vunpack.c.l.b16 %v2348
          %v2372 = vunpack.c.l.b16 %v2349
          %v2373 = vpack.c.b16 %v2366, %v2365
          %v2374 = vpack.c.b16 %v2368, %v2367
          %v2375 = vpack.c.b16 %v2370, %v2369
          %v2376 = vpack.c.b16 %v2372, %v2371
          %vm2381 = vcmask 523264
          %v2383 = vsel %vm2381, %v2341, 0
          %2385 = vmatprep.subr.bf16.mxu0 0
          %2386 = vmatpush1.bf16.msra.mxu0 0
          %2387 = vmatprep.subr.bf16.mxu0 0
          %2388 = vmatpush1.bf16.msra.mxu0 0
          %2389 = vmatprep.subr.bf16.mxu0 0
          %2390 = vmatpush1.bf16.msra.mxu0 0
          %2391 = vmatprep.subr.bf16.mxu0 0
          %2392 = vmatpush1.bf16.msra.mxu0 0
          %2393 = vmatprep.subr.bf16.mxu0 0
          %2394 = vmatpush1.bf16.msra.mxu0 %v2376
          %2395 = vmatprep.subr.bf16.mxu0 0
          %2396 = vmatpush1.bf16.msra.mxu0 %v2375
          %2397 = vmatprep.subr.bf16.mxu0 0
          %2398 = vmatpush1.bf16.msra.mxu0 %v2374
          %2399 = vmatprep.subr.bf16.mxu0 0
          %2400 = vmatpush1.bf16.msra.mxu0 %v2373
          %2401 = vmatprep.subr.bf16.mxu0 0
          %2402 = vmatpush2.bf16.msra.mxu0 0
          %2403 = vmatprep.subr.bf16.mxu0 0
          %2404 = vmatpush2.bf16.msra.mxu0 0
          %2405 = vmatprep.subr.bf16.mxu0 0
          %2406 = vmatpush2.bf16.msra.mxu0 0
          %2407 = vmatprep.subr.bf16.mxu0 0
          %2408 = vmatpush2.bf16.msra.mxu0 0
          %2409 = vmatprep.subr.bf16.mxu0 0
          %2410 = vmatpush2.bf16.msra.mxu0 0
          %2411 = vmatprep.subr.bf16.mxu0 0
          %2412 = vmatpush2.bf16.msra.mxu0 0
          %2413 = vmatprep.subr.bf16.mxu0 0
          %2414 = vmatpush2.bf16.msra.mxu0 0
          %2415 = vmatprep.subr.bf16.mxu0 0
          %2416 = vmatpush2.bf16.msra.mxu0 0
          %2417 = vmatprep.mubr.bf16.mxu0 0
          %2418 = vmatmul.mubr.bf16.gmra.mxu0 %v2383
          %v2419 = vpop.f32.mrf.mxu0
          %v2420 = vadd.f32 %v2355, %v2419
          %v2421 = vpop.f32.mrf.mxu0
          %v2422 = vpop.f32.mrf.mxu0
          %v2423 = vpop.f32.mrf.mxu0
          %2424 = vdwg.mxu0
          %v2426 = vrot.slane %v2420, 1
          %v2429 = vadd.f32 %v2255, %v2420
          %v2430 = vadd.f32 %v2256, %v2426
          %v2431 = vld [vmem:[%s755] sm:$0x1]
          %v2432 = vld [vmem:[%s758] sm:$0x1]
          %v2435 = vrot.slane %v2430, 7
          %v2436 = vsel %vm2139, %v2435, %v2429
          %v2438 = vsel %vm2210, %v2436, 0.0
          %2439 = vadd.xlane.f32.xlu0 %v2438
          %v2440 = vpop.xlane.xlu0 %2439
          %v2441 = vmul.f32 %v2440, %v2214
          %v2443 = vrot.slane %v2441, 1
          %v2446 = vsub.f32 %v2429, %v2441
          %v2447 = vsub.f32 %v2430, %v2443
          %v2448 = vmul.f32 %v2446, %v2446
          %v2449 = vmul.f32 %v2447, %v2447
          %v2452 = vrot.slane %v2449, 7
          %v2453 = vsel %vm2139, %v2452, %v2448
          %v2455 = vsel %vm2210, %v2453, 0.0
          %2456 = vadd.xlane.f32.xlu0 %v2455
          %v2457 = vpop.xlane.xlu0 %2456
          %v2458 = vmul.f32 %v2457, %v2214
          %v2459 = vadd.f32 %v2458, 1e-12
          %v2460 = vrsqrt.pop %v2459
          %v2462 = vrot.slane %v2460, 1
          %v2465 = vmul.f32 %v2446, %v2460
          %v2466 = vmul.f32 %v2447, %v2462
          %v2468 = vlaneseq
          %v2469 = vshrl.u32 %v2468, 7
          %v2470 = vsub.s32 0, %v2469
          %v2471 = vrot.slane %v2431, %v2470
          %v2473 = vmul.f32 %v2465, %v2471
          %v2474 = vmul.f32 %v2466, %v2471
          %v2476 = vlaneseq
          %v2477 = vshrl.u32 %v2476, 7
          %v2478 = vsub.s32 0, %v2477
          %v2479 = vrot.slane %v2432, %v2478
          %v2481 = vadd.f32 %v2473, %v2479
          %v2482 = vadd.f32 %v2474, %v2479
          %v2483 = vld [vmem:[#allocation8] sm:$0xff]
          %v2484 = vld [vmem:[#allocation8 + $0x8] sm:$0xff]
          %v2485 = vld [vmem:[#allocation8 + $0x10] sm:$0xff]
          %v2486 = vld [vmem:[#allocation8 + $0x18] sm:$0xff]
          %v2487 = vld [vmem:[%s15] sm:$0x1]
          %v2489 = vlaneseq
          %v2490 = vshrl.u32 %v2489, 7
          %v2491 = vsub.s32 0, %v2490
          %v2492 = vrot.slane %v2487, %v2491
          %v2496 = vrot.slane %v2482, 7
          %v2497 = vsel %vm2139, %v2496, %v2481
          %v2498 = vsel %vm804, %v2497, 0
          %2500 = vmatprep.subr.mxu0 0.0
          %2501 = vmatpush1.msra.mxu0 0.0
          %2502 = vmatprep.subr.mxu0 0.0
          %2503 = vmatpush1.msra.mxu0 0.0
          %2504 = vmatprep.subr.mxu0 0.0
          %2505 = vmatpush1.msra.mxu0 0.0
          %2506 = vmatprep.subr.mxu0 0.0
          %2507 = vmatpush1.msra.mxu0 0.0
          %2508 = vmatprep.subr.mxu0 0.0
          %2509 = vmatpush1.msra.mxu0 0.0
          %2510 = vmatprep.subr.mxu0 0.0
          %2511 = vmatpush1.msra.mxu0 0.0
          %2512 = vmatprep.subr.mxu0 0.0
          %2513 = vmatpush1.msra.mxu0 0.0
          %2514 = vmatprep.subr.mxu0 0.0
          %2515 = vmatpush1.msra.mxu0 0.0
          %2516 = vmatprep.subr.mxu0 0.0
          %2517 = vmatpush1.msra.mxu0 0.0
          %2518 = vmatprep.subr.mxu0 0.0
          %2519 = vmatpush1.msra.mxu0 0.0
          %2520 = vmatprep.subr.mxu0 0.0
          %2521 = vmatpush1.msra.mxu0 0.0
          %2522 = vmatprep.subr.mxu0 0.0
          %2523 = vmatpush1.msra.mxu0 0.0
          %2524 = vmatprep.subr.mxu0 0.0
          %2525 = vmatpush1.msra.mxu0 %v2486
          %2526 = vmatprep.subr.mxu0 0.0
          %2527 = vmatpush1.msra.mxu0 %v2485
          %2528 = vmatprep.subr.mxu0 0.0
          %2529 = vmatpush1.msra.mxu0 %v2484
          %2530 = vmatprep.subr.mxu0 0.0
          %2531 = vmatpush1.msra.mxu0 %v2483
          %2532 = vmatprep.subr.mxu0 0.0
          %2533 = vmatpush2.msra.mxu0 0.0
          %2534 = vmatprep.subr.mxu0 0.0
          %2535 = vmatpush2.msra.mxu0 0.0
          %2536 = vmatprep.subr.mxu0 0.0
          %2537 = vmatpush2.msra.mxu0 0.0
          %2538 = vmatprep.subr.mxu0 0.0
          %2539 = vmatpush2.msra.mxu0 0.0
          %2540 = vmatprep.subr.mxu0 0.0
          %2541 = vmatpush2.msra.mxu0 0.0
          %2542 = vmatprep.subr.mxu0 0.0
          %2543 = vmatpush2.msra.mxu0 0.0
          %2544 = vmatprep.subr.mxu0 0.0
          %2545 = vmatpush2.msra.mxu0 0.0
          %2546 = vmatprep.subr.mxu0 0.0
          %2547 = vmatpush2.msra.mxu0 0.0
          %2548 = vmatprep.subr.mxu0 0.0
          %2549 = vmatpush2.msra.mxu0 0.0
          %2550 = vmatprep.subr.mxu0 0.0
          %2551 = vmatpush2.msra.mxu0 0.0
          %2552 = vmatprep.subr.mxu0 0.0
          %2553 = vmatpush2.msra.mxu0 0.0
          %2554 = vmatprep.subr.mxu0 0.0
          %2555 = vmatpush2.msra.mxu0 0.0
          %2556 = vmatprep.subr.mxu0 0.0
          %2557 = vmatpush2.msra.mxu0 0.0
          %2558 = vmatprep.subr.mxu0 0.0
          %2559 = vmatpush2.msra.mxu0 0.0
          %2560 = vmatprep.subr.mxu0 0.0
          %2561 = vmatpush2.msra.mxu0 0.0
          %2562 = vmatprep.subr.mxu0 0.0
          %2563 = vmatpush2.msra.mxu0 0.0
          %2564 = vmatprep.mubr.f32.mxu0 0.0
          %2565 = vmatmul.mubr.f32.gmra.mxu0 %v2498
          %v2566 = vpop.f32.mrf.mxu0
          %v2567 = vadd.f32 %v2492, %v2566
          %v2568 = vpop.f32.mrf.mxu0
          %2569 = vdwg.mxu0
          %v2572 = vunpack.c.l.s4 1966171168
          %v2573 = vunpack.c.0.s8 %v2572
          %v2574 = vlaneseq
          %v2575 = vshrl.u32 %v2574, 7
          %v2576 = vsub.s32 %v2573, %v2575
          %v2577 = vrot.slane %v2567, %v2576
          %v2578 = vcombine.high %v2577, %v2577
          %v2580 = vunpack.c.l.s4 1966171168
          %v2581 = vunpack.c.0.s8 %v2580
          %v2582 = vlaneseq
          %v2583 = vshrl.u32 %v2582, 7
          %v2584 = vsub.s32 %v2581, %v2583
          %v2585 = vrot.slane %v2577, %v2584
          %v2587 = vunpack.c.l.s4 1966171168
          %v2588 = vunpack.c.0.s8 %v2587
          %v2589 = vlaneseq
          %v2590 = vshrl.u32 %v2589, 7
          %v2591 = vsub.s32 %v2588, %v2590
          %v2592 = vrot.slane %v2578, %v2591
          %2595 = vst [vmem:[#allocation9] sm:$0x1] %v2585
          %2596 = vst [vmem:[#allocation9 + $0x1] sm:$0x1] %v2592
        $region108: #{tpu_custom_call.1} parent=83 // pred_fallthru
          _
        // Predicated region
        $region109: #{tpu_custom_call.1} parent=83 // pred_check
          %p2597 = pneg %p466
        $region110: #{tpu_custom_call.1} parent=83 // pred_check_branch
          %2599 = sbr.rel (%p2597) target = $region112
        $region111: #{tpu_custom_call.1} parent=83 // pred_region
          %s2600 = smul.u32 2, %s34
          %s2602 = ssub.s32 32, 32
          %2603 = vsyncadd [#allocation5], %s2602
          %s2604 = smul.addr %s2600, 16
          %s2605 = scalar_lea.hbm %s16, %s2604
          %s2606 = sshll.u32 [#allocation9], 4
          %s2607 = int_to_ptr.vmem [resolvable:$true] %s2606
          %2612 = dma.vmem_to_hbm [thread:$0]  %s2607, 32, %s2605, [#allocation5], 16, 16, 1
        $region112: #{tpu_custom_call.1} parent=83 // pred_fallthru
          _
        // Predicated region
        $region113: #{tpu_custom_call.1} parent=83 // pred_check
          %p2613 = pneg %p466
        $region114: #{tpu_custom_call.1} parent=83 // pred_check_branch
          %2615 = sbr.rel (%p2613) target = $region116
        $region115: #{tpu_custom_call.1} parent=83 // pred_region
          %2616 = dma.done [#allocation5], 32
        $region116: #{tpu_custom_call.1} parent=83 // pred_fallthru
          _
      $region84: #{tpu_custom_call.1} parent=5 // pred_fallthru
        _
      %p2617 = scmp.le.s32.totalorder 2, %s25
      // Predicated region
      $region117: #{tpu_custom_call.1} parent=5 // pred_check
        %p2618 = pneg %p2617
      $region118: #{tpu_custom_call.1} parent=5 // pred_check_branch
        %2620 = sbr.rel (%p2618) target = $region120
      $region119: #{tpu_custom_call.1} parent=5 // pred_region
        %s2621 = ssub.s32 %s25, 2
      $region120: #{tpu_custom_call.1} parent=5 // pred_fallthru
        _
    $region6: #{tpu_custom_call.1} parent=1 // loop_footer
      %s29 = sadd.s32 1, %s25
    $region7: #{tpu_custom_call.1} parent=1 // loop_footer_branch
      %24 = sbr.rel target = $region3
    $region8: #{tpu_custom_call.1} parent=1 // loop_exit
      _
    %2622 = vsyncpa [#allocation4], 1
    %s2623 = scalar_lea.sflag [#allocation4], 1
    %2624 = vsyncpa %s2623, 1
    %2625 = vsyncpa [#allocation7], 1
    %2626 = vsyncpa [#allocation5], 1
    %s2627 = scalar_lea.sflag [#allocation5], 1
    %2628 = vsyncpa %s2627, 1

</llo_original>
